<compile_context>
chip_gen: v5e
topology: v5e:2x2
jax: 0.10.0
libtpu: 0.0.40
codegen_flags: <defaults>
</compile_context>

<pallas_src>
import functools

import jax
import jax.numpy as jnp
from jax.experimental import pallas as pl
from jax.experimental.pallas import tpu as pltpu

# ---------------- configuration ----------------
EMBED    = 128    # embeddingsize
STEM_C   = 24     # EfficientNetV2-S stem output channels
TRUNK_F  = 1280   # efficientnet_v2_s classifier[1].in_features
LANE     = 128
ROW_PACK = 16     # bf16 packs 16 sublanes per vreg


def _round_up(x, m):
    return ((x + m - 1) // m) * m


def _silu(y):
    # Exact SiLU: y*sigmoid(y) == 0.5*y*(1+tanh(y/2)); one EUP push per element
    # (sigmoid lowers to exp + reciprocal = two pushes).
    return 0.5 * y * (1.0 + jnp.tanh(0.5 * y))


# ---------------- Pallas kernels ----------------
def _stem_pool_kernel(p_ref, w_ref, b_ref, o_ref, acc_ref, *, hw, tile_hw, inv_hw):
    """Stem conv (im2col matmul) + SiLU + global-average-pool accumulation.

    Grid = (B, n_spatial_tiles); the spatial axis is a reduction accumulated
    in the f32 VMEM scratch `acc_ref`.

    p_ref  : (1, tile_hw, K)   bf16 im2col patches of one image (K = 9*C, un-padded)
    w_ref  : (K, Cp)           bf16 stem conv weight, lane-padded output channels
    b_ref  : (1, Cp)           f32  stem bias (BN-fold stand-in)
    o_ref  : (1, 1, Cp)        f32  pooled stem features for one image
    acc_ref: (1, Cp)           f32  running spatial sum
    """
    t = pl.program_id(1)
    last = pl.num_programs(1) - 1

    @pl.when(t == 0)
    def _():
        acc_ref[...] = jnp.zeros_like(acc_ref)

    y = jnp.dot(p_ref[0], w_ref[...],
                preferred_element_type=jnp.float32) + b_ref[...]   # (tile_hw, Cp)
    y = _silu(y)

    if hw % tile_hw == 0:
        # No padded spatial rows anywhere: plain column reduce, no mask.
        acc_ref[...] += jnp.sum(y, axis=0, keepdims=True)
    else:
        @pl.when(t != last)
        def _():
            acc_ref[...] += jnp.sum(y, axis=0, keepdims=True)

        @pl.when(t == last)
        def _():
            # Only the ragged last tile pays for the mask build + ones-matmul.
            row = t * tile_hw + jax.lax.broadcasted_iota(jnp.int32, (1, tile_hw), 1)
            mask = (row < hw).astype(jnp.float32)                  # (1, tile_hw)
            acc_ref[...] += jnp.dot(mask, y, preferred_element_type=jnp.float32)

    @pl.when(t == last)
    def _():
        o_ref[...] = (acc_ref[...] * inv_hw)[None].astype(o_ref.dtype)


def _head_kernel(f_ref, wt_ref, bt_ref, w1_ref, b1_ref, w2_ref, b2_ref,
                 w3_ref, b3_ref, o_ref):
    """Trunk stand-in + classifier head + L2 normalize (dim=1, eps=1e-12)."""
    f = f_ref[...]                                                  # (TB, Cp) bf16

    # TODO(synk): stand-in for the pretrained EfficientNetV2-S body.
    h = jnp.dot(f, wt_ref[...], preferred_element_type=jnp.float32) + bt_ref[...]
    h = _silu(h)                                                    # (TB, 1280)

    # classifier = Linear(1280,512) -> ReLU -> Dropout -> Linear(512,256)
    #              -> ReLU -> Dropout -> Linear(256, EMBED)
    z = jnp.dot(h.astype(jnp.bfloat16), w1_ref[...],
                preferred_element_type=jnp.float32) + b1_ref[...]
    z = jnp.maximum(z, 0.0)
    # TODO(synk): Dropout(p=0.2) is identity in eval/inference mode.
    z = jnp.dot(z.astype(jnp.bfloat16), w2_ref[...],
                preferred_element_type=jnp.float32) + b2_ref[...]
    z = jnp.maximum(z, 0.0)
    e = jnp.dot(z.astype(jnp.bfloat16), w3_ref[...],
                preferred_element_type=jnp.float32) + b3_ref[...]

    # torch.nn.functional.normalize(x, p=2, dim=1): x / max(||x||_2, 1e-12)
    sumsq = jnp.sum(e * e, axis=1, keepdims=True)
    inv = jax.lax.rsqrt(jnp.maximum(sumsq, 1e-24))                  # EUP rsqrt
    o_ref[...] = (e * inv).astype(o_ref.dtype)


# ---------------- wrapper ----------------
@jax.jit
def network_forward(x_nchw, params):
    """x_nchw: (B, C, H, W) float32 image batch (PyTorch layout)."""
    B, C, H, W = x_nchw.shape
    Ho = (H - 1) // 2 + 1          # conv 3x3, stride 2, pad 1
    Wo = (W - 1) // 2 + 1
    HW = Ho * Wo
    K = 9 * C                      # im2col contraction dim (kept un-padded)
    Cp = _round_up(STEM_C, LANE)   # lane-pad stem output channels only

    # One big spatial tile per image when it fits; cap keeps the double-
    # buffered patch tile + f32 temporaries comfortably inside the scoped
    # VMEM limit on every generation (v5e 16 MiB default, v7x 64 MiB phys).
    TILE_HW = min(8192, _round_up(HW, ROW_PACK))
    n_tiles = -(-HW // TILE_HW)
    HWp = n_tiles * TILE_HW

    # glue: NCHW -> NHWC (bf16), pad=1, im2col for the 3x3 stride-2 stem conv.
    # TODO(synk): im2col is still materialized in HBM; fusing it into the
    #             kernel (row-band DMA + shifted views) would remove that
    #             traffic entirely on a mem-bound stem.
    x = jnp.transpose(x_nchw, (0, 2, 3, 1)).astype(jnp.bfloat16)
    xp = jnp.pad(x, ((0, 0), (1, 1), (1, 1), (0, 0)))
    cols = []
    for kh in range(3):
        for kw in range(3):
            cols.append(xp[:, kh:kh + 2 * Ho:2, kw:kw + 2 * Wo:2, :])
    patches = jnp.concatenate(cols, axis=-1).reshape(B, HW, K)
    if HWp != HW:
        patches = jnp.pad(patches, ((0, 0), (0, HWp - HW), (0, 0)))

    w_stem = params["w_stem"].reshape(K, STEM_C)
    w_stem = jnp.pad(w_stem, ((0, 0), (0, Cp - STEM_C))).astype(jnp.bfloat16)
    # TODO(synk): a true BatchNorm fold also needs a per-channel scale.
    b_stem = jnp.pad(params["b_stem"], (0, Cp - STEM_C)).reshape(1, Cp)
    b_stem = b_stem.astype(jnp.float32)

    stem_cost = pl.CostEstimate(
        flops=2 * B * HWp * K * Cp + 6 * B * HWp * Cp,
        transcendentals=B * HWp * Cp,
        bytes_accessed=(patches.size + w_stem.size) * 2
                       + b_stem.size * 4 + B * Cp * 4,
    )

    pooled = pl.pallas_call(
        functools.partial(_stem_pool_kernel,
                          hw=HW, tile_hw=TILE_HW, inv_hw=1.0 / HW),
        out_shape=jax.ShapeDtypeStruct((B, 1, Cp), jnp.float32),
        grid=(B, n_tiles),
        in_specs=[
            pl.BlockSpec((1, TILE_HW, K), lambda b, t: (b, t, 0)),
            pl.BlockSpec((K, Cp), lambda b, t: (0, 0)),
            pl.BlockSpec((1, Cp), lambda b, t: (0, 0)),
        ],
        out_specs=pl.BlockSpec((1, 1, Cp), lambda b, t: (b, 0, 0)),
        scratch_shapes=[pltpu.VMEM((1, Cp), jnp.float32)],
        compiler_params=pltpu.CompilerParams(
            dimension_semantics=("parallel", "arbitrary"),
            vmem_limit_bytes=32 * 1024 * 1024),
        cost_estimate=stem_cost,
    )(patches, w_stem, b_stem)
    feats = pooled.reshape(B, Cp)

    # ---- classifier head: pad batch to a bf16-packed sublane multiple.
    # TB capped at 128 so B >= 256 yields >= 2 parallel grid steps (both
    # TensorCores on v7x); weights stay resident via constant index maps.
    # TODO(synk): for very small B the head could be fused into the stem
    #             finalize to save one kernel launch.
    TB = min(128, _round_up(B, ROW_PACK))
    Bp = _round_up(B, TB)
    feats = jnp.pad(feats, ((0, Bp - B), (0, 0))).astype(jnp.bfloat16)

    wt = jnp.pad(params["w_trunk"],
                 ((0, Cp - STEM_C), (0, 0))).astype(jnp.bfloat16)
    bt = params["b_trunk"].astype(jnp.float32)
    w1 = params["w1"].astype(jnp.bfloat16); b1 = params["b1"].astype(jnp.float32)
    w2 = params["w2"].astype(jnp.bfloat16); b2 = params["b2"].astype(jnp.float32)
    w3 = params["w3"].astype(jnp.bfloat16); b3 = params["b3"].astype(jnp.float32)

    head_cost = pl.CostEstimate(
        flops=2 * Bp * (Cp * TRUNK_F + TRUNK_F * 512 + 512 * 256 + 256 * EMBED),
        transcendentals=Bp * TRUNK_F + Bp,
        bytes_accessed=(feats.size + wt.size + w1.size + w2.size + w3.size) * 2
                       + (bt.size + b1.size + b2.size + b3.size) * 4
                       + Bp * EMBED * 4,
    )

    emb = pl.pallas_call(
        _head_kernel,
        out_shape=jax.ShapeDtypeStruct((Bp, EMBED), jnp.float32),
        grid=(Bp // TB,),
        in_specs=[
            pl.BlockSpec((TB, Cp), lambda i: (i, 0)),
            pl.BlockSpec((Cp, TRUNK_F), lambda i: (0, 0)),
            pl.BlockSpec((1, TRUNK_F), lambda i: (0, 0)),
            pl.BlockSpec((TRUNK_F, 512), lambda i: (0, 0)),
            pl.BlockSpec((1, 512), lambda i: (0, 0)),
            pl.BlockSpec((512, 256), lambda i: (0, 0)),
            pl.BlockSpec((1, 256), lambda i: (0, 0)),
            pl.BlockSpec((256, EMBED), lambda i: (0, 0)),
            pl.BlockSpec((1, EMBED), lambda i: (0, 0)),
        ],
        out_specs=pl.BlockSpec((TB, EMBED), lambda i: (i, 0)),
        compiler_params=pltpu.CompilerParams(
            dimension_semantics=("parallel",)),
        cost_estimate=head_cost,
    )(feats, wt, bt, w1, b1, w2, b2, w3, b3)
    return emb[:B]


# ---------------- deterministic parameter init ----------------
def init_params(key, c_in=3):
    ks = jax.random.split(key, 10)

    def lin(k, fan_in, shape):
        return jax.random.normal(k, shape, jnp.float32) / jnp.sqrt(float(fan_in))

    return {
        # stem conv weight stored (kh, kw, C_in, STEM_C); BN folded into bias
        "w_stem": lin(ks[0], 9 * c_in, (3, 3, c_in, STEM_C)),
        "b_stem": jnp.zeros((STEM_C,), jnp.float32),
        # stand-in trunk projection to classifier in_features
        "w_trunk": lin(ks[1], STEM_C, (STEM_C, TRUNK_F)),
        "b_trunk": jnp.zeros((1, TRUNK_F), jnp.float32),
        # new classifier head
        "w1": lin(ks[2], TRUNK_F, (TRUNK_F, 512)),
        "b1": 0.01 * jax.random.normal(ks[3], (1, 512), jnp.float32),
        "w2": lin(ks[4], 512, (512, 256)),
        "b2": 0.01 * jax.random.normal(ks[5], (1, 256), jnp.float32),
        "w3": lin(ks[6], 256, (256, EMBED)),
        "b3": 0.01 * jax.random.normal(ks[7], (1, EMBED), jnp.float32),
    }


if __name__ == "__main__":
    key = jax.random.PRNGKey(0)
    k_x, k_p = jax.random.split(key)

    # small image batch consistent with the module's NCHW image input
    x = jax.random.normal(k_x, (2, 3, 32, 32), jnp.float32)
    params = init_params(k_p, c_in=3)

    emb = jax.block_until_ready(network_forward(x, params))

    assert emb.shape == (2, EMBED)
    assert bool(jnp.all(jnp.isfinite(emb)))
    # embeddings must be unit-norm along dim=1
    norms = jnp.linalg.norm(emb, axis=1)
    assert bool(jnp.all(jnp.abs(norms - 1.0) < 1e-3))
    print("KERNEL_OK")
</pallas_src>

<mosaic_0001>
module attributes {stable_mosaic.version = 11 : i64} {
  func.func @_stem_pool_kernel(%arg0: i32, %arg1: i32, %arg2: memref<1x256x27xbf16, #tpu.memory_space<vmem>>, %arg3: memref<27x128xbf16, #tpu.memory_space<vmem>>, %arg4: memref<1x128xf32, #tpu.memory_space<vmem>>, %arg5: memref<1x1x128xf32, #tpu.memory_space<vmem>>, %arg6: memref<1x128xf32, #tpu.memory_space<vmem>>) attributes {dimension_semantics = [#tpu.dimension_semantics<parallel>, #tpu.dimension_semantics<arbitrary>], iteration_bounds = array<i64: 2, 1>, scalar_prefetch = 0 : i64, scratch_operands = 1 : i64, tpu.core_type = #tpu.core_type<tc>, window_params = [{transform_indices = @transform_0, window_bounds = array<i64: 1, 256, 27>}, {pipeline_mode = #tpu.pipeline_mode<synchronous>, transform_indices = @transform_1, window_bounds = array<i64: 27, 128>}, {pipeline_mode = #tpu.pipeline_mode<synchronous>, transform_indices = @transform_2, window_bounds = array<i64: 1, 128>}, {transform_indices = @transform_3, window_bounds = array<i64: 1, 1, 128>}]} {
    %c0_i32 = arith.constant 0 : i32
    %0 = arith.cmpi eq, %arg1, %c0_i32 : i32
    %1 = arith.extui %0 : i1 to i32
    %c0_i32_0 = arith.constant 0 : i32
    %2 = arith.cmpi ne, %1, %c0_i32_0 : i32
    scf.if %2 {
      %cst_17 = arith.constant 0.000000e+00 : f32
      %26 = vector.broadcast %cst_17 : f32 to vector<1x128xf32>
      %c0_18 = arith.constant 0 : index
      %c0_19 = arith.constant 0 : index
      %27 = vector.load %arg6[%c0_18, %c0_19] : memref<1x128xf32, #tpu.memory_space<vmem>>, vector<1x128xf32>
      tpu.vector_store %arg6[%c0_18, %c0_19], %26 {strides = array<i32>} : memref<1x128xf32, #tpu.memory_space<vmem>>, vector<1x128xf32>,
    } else {
    }
    %c0 = arith.constant 0 : index
    %c0_1 = arith.constant 0 : index
    %c0_2 = arith.constant 0 : index
    %3 = vector.load %arg2[%c0, %c0_1, %c0_2] : memref<1x256x27xbf16, #tpu.memory_space<vmem>>, vector<1x256x27xbf16>
    %4 = vector.shape_cast %3 : vector<1x256x27xbf16> to vector<256x27xbf16>
    %c0_3 = arith.constant 0 : index
    %c0_4 = arith.constant 0 : index
    %5 = vector.load %arg3[%c0_3, %c0_4] : memref<27x128xbf16, #tpu.memory_space<vmem>>, vector<27x128xbf16>
    %cst = arith.constant dense<0.000000e+00> : vector<256x128xf32>
    %6 = tpu.matmul %4, %5, %cst {dimension_numbers = #tpu.dot_dimension_numbers<[1], [0], [0], [1], [0, 0, 1, 1], [], []>} : vector<256x27xbf16>, vector<27x128xbf16>, vector<256x128xf32> -> vector<256x128xf32>
    %c0_5 = arith.constant 0 : index
    %c0_6 = arith.constant 0 : index
    %7 = vector.load %arg4[%c0_5, %c0_6] : memref<1x128xf32, #tpu.memory_space<vmem>>, vector<1x128xf32>
    %8 = vector.broadcast %7 : vector<1x128xf32> to vector<256x128xf32>
    %9 = arith.addf %6, %8 : vector<256x128xf32>
    %cst_7 = arith.constant 5.000000e-01 : f32
    %10 = vector.broadcast %cst_7 : f32 to vector<256x128xf32>
    %11 = arith.mulf %10, %9 : vector<256x128xf32>
    %cst_8 = arith.constant 5.000000e-01 : f32
    %12 = vector.broadcast %cst_8 : f32 to vector<256x128xf32>
    %13 = arith.mulf %12, %9 : vector<256x128xf32>
    %14 = math.tanh %13 : vector<256x128xf32>
    %cst_9 = arith.constant 1.000000e+00 : f32
    %15 = vector.broadcast %cst_9 : f32 to vector<256x128xf32>
    %16 = arith.addf %15, %14 : vector<256x128xf32>
    %17 = arith.mulf %11, %16 : vector<256x128xf32>
    %c0_10 = arith.constant 0 : index
    %c0_11 = arith.constant 0 : index
    %18 = vector.load %arg6[%c0_10, %c0_11] : memref<1x128xf32, #tpu.memory_space<vmem>>, vector<1x128xf32>
    %cst_12 = arith.constant dense<0.000000e+00> : vector<128xf32>
    %19 = vector.multi_reduction <add>, %17, %cst_12 [0] : vector<256x128xf32> to vector<128xf32>
    %20 = vector.shape_cast %19 : vector<128xf32> to vector<1x128xf32>
    %21 = arith.addf %18, %20 : vector<1x128xf32>
    %c0_13 = arith.constant 0 : index
    %c0_14 = arith.constant 0 : index
    %22 = vector.load %arg6[%c0_13, %c0_14] : memref<1x128xf32, #tpu.memory_space<vmem>>, vector<1x128xf32>
    tpu.vector_store %arg6[%c0_13, %c0_14], %21 {strides = array<i32>} : memref<1x128xf32, #tpu.memory_space<vmem>>, vector<1x128xf32>,
    %c0_i32_15 = arith.constant 0 : i32
    %23 = arith.cmpi eq, %arg1, %c0_i32_15 : i32
    %24 = arith.extui %23 : i1 to i32
    %c0_i32_16 = arith.constant 0 : i32
    %25 = arith.cmpi ne, %24, %c0_i32_16 : i32
    scf.if %25 {
      %c0_17 = arith.constant 0 : index
      %c0_18 = arith.constant 0 : index
      %26 = vector.load %arg6[%c0_17, %c0_18] : memref<1x128xf32, #tpu.memory_space<vmem>>, vector<1x128xf32>
      %cst_19 = arith.constant 3.906250e-03 : f32
      %27 = vector.broadcast %cst_19 : f32 to vector<1x128xf32>
      %28 = arith.mulf %26, %27 : vector<1x128xf32>
      %29 = vector.shape_cast %28 : vector<1x128xf32> to vector<1x1x128xf32>
      %c0_20 = arith.constant 0 : index
      %c0_21 = arith.constant 0 : index
      %c0_22 = arith.constant 0 : index
      %30 = vector.load %arg5[%c0_20, %c0_21, %c0_22] : memref<1x1x128xf32, #tpu.memory_space<vmem>>, vector<1x1x128xf32>
      tpu.vector_store %arg5[%c0_20, %c0_21, %c0_22], %29 {strides = array<i32>} : memref<1x1x128xf32, #tpu.memory_space<vmem>>, vector<1x1x128xf32>,
    } else {
    }
    return
  }
  func.func @transform_0(%arg0: i32, %arg1: i32) -> (i32, i32, i32) {
    %c0_i32 = arith.constant 0 : i32
    %c0_i32_0 = arith.constant 0 : i32
    return %arg0, %arg1, %c0_i32 : i32, i32, i32
  }
  func.func @transform_1(%arg0: i32, %arg1: i32) -> (i32, i32) {
    %c0_i32 = arith.constant 0 : i32
    %c0_i32_0 = arith.constant 0 : i32
    %c0_i32_1 = arith.constant 0 : i32
    return %c0_i32, %c0_i32_0 : i32, i32
  }
  func.func @transform_2(%arg0: i32, %arg1: i32) -> (i32, i32) {
    %c0_i32 = arith.constant 0 : i32
    %c0_i32_0 = arith.constant 0 : i32
    %c0_i32_1 = arith.constant 0 : i32
    return %c0_i32, %c0_i32_0 : i32, i32
  }
  func.func @transform_3(%arg0: i32, %arg1: i32) -> (i32, i32, i32) {
    %c0_i32 = arith.constant 0 : i32
    %c0_i32_0 = arith.constant 0 : i32
    %c0_i32_1 = arith.constant 0 : i32
    return %arg0, %c0_i32, %c0_i32_0 : i32, i32, i32
  }
}

module attributes {stable_mosaic.version = 11 : i64} {
  func.func @_head_kernel(%arg0: i32, %arg1: memref<16x128xbf16, #tpu.memory_space<vmem>>, %arg2: memref<128x1280xbf16, #tpu.memory_space<vmem>>, %arg3: memref<1x1280xf32, #tpu.memory_space<vmem>>, %arg4: memref<1280x512xbf16, #tpu.memory_space<vmem>>, %arg5: memref<1x512xf32, #tpu.memory_space<vmem>>, %arg6: memref<512x256xbf16, #tpu.memory_space<vmem>>, %arg7: memref<1x256xf32, #tpu.memory_space<vmem>>, %arg8: memref<256x128xbf16, #tpu.memory_space<vmem>>, %arg9: memref<1x128xf32, #tpu.memory_space<vmem>>, %arg10: memref<16x128xf32, #tpu.memory_space<vmem>>) attributes {dimension_semantics = [#tpu.dimension_semantics<parallel>], iteration_bounds = array<i64: 1>, scalar_prefetch = 0 : i64, scratch_operands = 0 : i64, tpu.core_type = #tpu.core_type<tc>, window_params = [{transform_indices = @transform_0, window_bounds = array<i64: 16, 128>}, {pipeline_mode = #tpu.pipeline_mode<synchronous>, transform_indices = @transform_1, window_bounds = array<i64: 128, 1280>}, {pipeline_mode = #tpu.pipeline_mode<synchronous>, transform_indices = @transform_2, window_bounds = array<i64: 1, 1280>}, {pipeline_mode = #tpu.pipeline_mode<synchronous>, transform_indices = @transform_3, window_bounds = array<i64: 1280, 512>}, {pipeline_mode = #tpu.pipeline_mode<synchronous>, transform_indices = @transform_4, window_bounds = array<i64: 1, 512>}, {pipeline_mode = #tpu.pipeline_mode<synchronous>, transform_indices = @transform_5, window_bounds = array<i64: 512, 256>}, {pipeline_mode = #tpu.pipeline_mode<synchronous>, transform_indices = @transform_6, window_bounds = array<i64: 1, 256>}, {pipeline_mode = #tpu.pipeline_mode<synchronous>, transform_indices = @transform_7, window_bounds = array<i64: 256, 128>}, {pipeline_mode = #tpu.pipeline_mode<synchronous>, transform_indices = @transform_8, window_bounds = array<i64: 1, 128>}, {transform_indices = @transform_9, window_bounds = array<i64: 16, 128>}]} {
    %c0 = arith.constant 0 : index
    %c0_0 = arith.constant 0 : index
    %0 = vector.load %arg1[%c0, %c0_0] : memref<16x128xbf16, #tpu.memory_space<vmem>>, vector<16x128xbf16>
    %c0_1 = arith.constant 0 : index
    %c0_2 = arith.constant 0 : index
    %1 = vector.load %arg2[%c0_1, %c0_2] : memref<128x1280xbf16, #tpu.memory_space<vmem>>, vector<128x1280xbf16>
    %cst = arith.constant dense<0.000000e+00> : vector<16x1280xf32>
    %2 = tpu.matmul %0, %1, %cst {dimension_numbers = #tpu.dot_dimension_numbers<[1], [0], [0], [1], [0, 0, 1, 1], [], []>} : vector<16x128xbf16>, vector<128x1280xbf16>, vector<16x1280xf32> -> vector<16x1280xf32>
    %c0_3 = arith.constant 0 : index
    %c0_4 = arith.constant 0 : index
    %3 = vector.load %arg3[%c0_3, %c0_4] : memref<1x1280xf32, #tpu.memory_space<vmem>>, vector<1x1280xf32>
    %4 = vector.broadcast %3 : vector<1x1280xf32> to vector<16x1280xf32>
    %5 = arith.addf %2, %4 : vector<16x1280xf32>
    %cst_5 = arith.constant 5.000000e-01 : f32
    %6 = vector.broadcast %cst_5 : f32 to vector<16x1280xf32>
    %7 = arith.mulf %6, %5 : vector<16x1280xf32>
    %cst_6 = arith.constant 5.000000e-01 : f32
    %8 = vector.broadcast %cst_6 : f32 to vector<16x1280xf32>
    %9 = arith.mulf %8, %5 : vector<16x1280xf32>
    %10 = math.tanh %9 : vector<16x1280xf32>
    %cst_7 = arith.constant 1.000000e+00 : f32
    %11 = vector.broadcast %cst_7 : f32 to vector<16x1280xf32>
    %12 = arith.addf %11, %10 : vector<16x1280xf32>
    %13 = arith.mulf %7, %12 : vector<16x1280xf32>
    %14 = arith.truncf %13 : vector<16x1280xf32> to vector<16x1280xbf16>
    %c0_8 = arith.constant 0 : index
    %c0_9 = arith.constant 0 : index
    %15 = vector.load %arg4[%c0_8, %c0_9] : memref<1280x512xbf16, #tpu.memory_space<vmem>>, vector<1280x512xbf16>
    %cst_10 = arith.constant dense<0.000000e+00> : vector<16x512xf32>
    %16 = tpu.matmul %14, %15, %cst_10 {dimension_numbers = #tpu.dot_dimension_numbers<[1], [0], [0], [1], [0, 0, 1, 1], [], []>} : vector<16x1280xbf16>, vector<1280x512xbf16>, vector<16x512xf32> -> vector<16x512xf32>
    %c0_11 = arith.constant 0 : index
    %c0_12 = arith.constant 0 : index
    %17 = vector.load %arg5[%c0_11, %c0_12] : memref<1x512xf32, #tpu.memory_space<vmem>>, vector<1x512xf32>
    %18 = vector.broadcast %17 : vector<1x512xf32> to vector<16x512xf32>
    %19 = arith.addf %16, %18 : vector<16x512xf32>
    %cst_13 = arith.constant 0.000000e+00 : f32
    %20 = vector.broadcast %cst_13 : f32 to vector<16x512xf32>
    %21 = arith.maximumf %19, %20 : vector<16x512xf32>
    %22 = arith.truncf %21 : vector<16x512xf32> to vector<16x512xbf16>
    %c0_14 = arith.constant 0 : index
    %c0_15 = arith.constant 0 : index
    %23 = vector.load %arg6[%c0_14, %c0_15] : memref<512x256xbf16, #tpu.memory_space<vmem>>, vector<512x256xbf16>
    %cst_16 = arith.constant dense<0.000000e+00> : vector<16x256xf32>
    %24 = tpu.matmul %22, %23, %cst_16 {dimension_numbers = #tpu.dot_dimension_numbers<[1], [0], [0], [1], [0, 0, 1, 1], [], []>} : vector<16x512xbf16>, vector<512x256xbf16>, vector<16x256xf32> -> vector<16x256xf32>
    %c0_17 = arith.constant 0 : index
    %c0_18 = arith.constant 0 : index
    %25 = vector.load %arg7[%c0_17, %c0_18] : memref<1x256xf32, #tpu.memory_space<vmem>>, vector<1x256xf32>
    %26 = vector.broadcast %25 : vector<1x256xf32> to vector<16x256xf32>
    %27 = arith.addf %24, %26 : vector<16x256xf32>
    %cst_19 = arith.constant 0.000000e+00 : f32
    %28 = vector.broadcast %cst_19 : f32 to vector<16x256xf32>
    %29 = arith.maximumf %27, %28 : vector<16x256xf32>
    %30 = arith.truncf %29 : vector<16x256xf32> to vector<16x256xbf16>
    %c0_20 = arith.constant 0 : index
    %c0_21 = arith.constant 0 : index
    %31 = vector.load %arg8[%c0_20, %c0_21] : memref<256x128xbf16, #tpu.memory_space<vmem>>, vector<256x128xbf16>
    %cst_22 = arith.constant dense<0.000000e+00> : vector<16x128xf32>
    %32 = tpu.matmul %30, %31, %cst_22 {dimension_numbers = #tpu.dot_dimension_numbers<[1], [0], [0], [1], [0, 0, 1, 1], [], []>} : vector<16x256xbf16>, vector<256x128xbf16>, vector<16x128xf32> -> vector<16x128xf32>
    %c0_23 = arith.constant 0 : index
    %c0_24 = arith.constant 0 : index
    %33 = vector.load %arg9[%c0_23, %c0_24] : memref<1x128xf32, #tpu.memory_space<vmem>>, vector<1x128xf32>
    %34 = vector.broadcast %33 : vector<1x128xf32> to vector<16x128xf32>
    %35 = arith.addf %32, %34 : vector<16x128xf32>
    %36 = arith.mulf %35, %35 : vector<16x128xf32>
    %cst_25 = arith.constant dense<0.000000e+00> : vector<16xf32>
    %37 = vector.multi_reduction <add>, %36, %cst_25 [1] : vector<16x128xf32> to vector<16xf32>
    %38 = vector.shape_cast %37 : vector<16xf32> to vector<16x1xf32>
    %cst_26 = arith.constant 1.000000e-24 : f32
    %39 = vector.broadcast %cst_26 : f32 to vector<16x1xf32>
    %40 = arith.maximumf %38, %39 : vector<16x1xf32>
    %41 = math.rsqrt %40 : vector<16x1xf32>
    %42 = vector.broadcast %41 : vector<16x1xf32> to vector<16x128xf32>
    %43 = arith.mulf %35, %42 : vector<16x128xf32>
    %c0_27 = arith.constant 0 : index
    %c0_28 = arith.constant 0 : index
    %44 = vector.load %arg10[%c0_27, %c0_28] : memref<16x128xf32, #tpu.memory_space<vmem>>, vector<16x128xf32>
    tpu.vector_store %arg10[%c0_27, %c0_28], %43 {strides = array<i32>} : memref<16x128xf32, #tpu.memory_space<vmem>>, vector<16x128xf32>,
    return
  }
  func.func @transform_0(%arg0: i32) -> (i32, i32) {
    %c0_i32 = arith.constant 0 : i32
    %c0_i32_0 = arith.constant 0 : i32
    return %arg0, %c0_i32 : i32, i32
  }
  func.func @transform_1(%arg0: i32) -> (i32, i32) {
    %c0_i32 = arith.constant 0 : i32
    %c0_i32_0 = arith.constant 0 : i32
    %c0_i32_1 = arith.constant 0 : i32
    return %c0_i32, %c0_i32_0 : i32, i32
  }
  func.func @transform_2(%arg0: i32) -> (i32, i32) {
    %c0_i32 = arith.constant 0 : i32
    %c0_i32_0 = arith.constant 0 : i32
    %c0_i32_1 = arith.constant 0 : i32
    return %c0_i32, %c0_i32_0 : i32, i32
  }
  func.func @transform_3(%arg0: i32) -> (i32, i32) {
    %c0_i32 = arith.constant 0 : i32
    %c0_i32_0 = arith.constant 0 : i32
    %c0_i32_1 = arith.constant 0 : i32
    return %c0_i32, %c0_i32_0 : i32, i32
  }
  func.func @transform_4(%arg0: i32) -> (i32, i32) {
    %c0_i32 = arith.constant 0 : i32
    %c0_i32_0 = arith.constant 0 : i32
    %c0_i32_1 = arith.constant 0 : i32
    return %c0_i32, %c0_i32_0 : i32, i32
  }
  func.func @transform_5(%arg0: i32) -> (i32, i32) {
    %c0_i32 = arith.constant 0 : i32
    %c0_i32_0 = arith.constant 0 : i32
    %c0_i32_1 = arith.constant 0 : i32
    return %c0_i32, %c0_i32_0 : i32, i32
  }
  func.func @transform_6(%arg0: i32) -> (i32, i32) {
    %c0_i32 = arith.constant 0 : i32
    %c0_i32_0 = arith.constant 0 : i32
    %c0_i32_1 = arith.constant 0 : i32
    return %c0_i32, %c0_i32_0 : i32, i32
  }
  func.func @transform_7(%arg0: i32) -> (i32, i32) {
    %c0_i32 = arith.constant 0 : i32
    %c0_i32_0 = arith.constant 0 : i32
    %c0_i32_1 = arith.constant 0 : i32
    return %c0_i32, %c0_i32_0 : i32, i32
  }
  func.func @transform_8(%arg0: i32) -> (i32, i32) {
    %c0_i32 = arith.constant 0 : i32
    %c0_i32_0 = arith.constant 0 : i32
    %c0_i32_1 = arith.constant 0 : i32
    return %c0_i32, %c0_i32_0 : i32, i32
  }
  func.func @transform_9(%arg0: i32) -> (i32, i32) {
    %c0_i32 = arith.constant 0 : i32
    %c0_i32_0 = arith.constant 0 : i32
    return %arg0, %c0_i32 : i32, i32
  }
}

</mosaic_0001>

<llo_original>
// kernel: network_forward.2
$region0: #{network_forward.2}
  #allocation0 [shape = 'u32[]', space=smem, size = 0x4, offset = 0x4, fixed_abs, tag = 'smem constant byte address 0x4 - core index']
  #allocation1 [shape = 'u32[72,128]{1,0:T(1,128)}', space=vmem, size = 0x9000, scoped, tag = 'internal scratch']
  #allocation2 [shape = 'f32[1,128]{1,0:T(1,128)}', space=vmem, size = 0x200, scoped, tag = 'scratch operand']
  %s0 = inlined_call_operand.vmem [shape: bf16[2,256,27], index: 0, kind: input, shape index: {}]
  %s1 = inlined_call_operand.vmem [shape: bf16[27,128], index: 1, kind: input, shape index: {}]
  %s2 = inlined_call_operand.vmem [shape: f32[1,128], index: 2, kind: input, shape index: {}]
  %s3 = inlined_call_operand.vmem [shape: f32[2,1,128], index: 3, kind: output, shape index: {}]
  %s4 = sld [smem:[#allocation0]]
  $region53: #{network_forward.2} parent=0
    _
  %s6 = ssub.s32 1, %s4
  %s7 = scalar_select 0, %s6, %s4
  loop: start=0, step=1, limit=4
  $region2: #{network_forward.2} parent=0 // loop_pre_header
    _
  $region3: #{network_forward.2} parent=0 // loop_header
    %s9 = sphi 0, %s13
    %p10 = scmp.ge.s32.totalorder %s9, 4
    %s16 = sphi 0, %s28
    %s17 = sphi 0, %s24
    %s18 = sphi 0, %s16
    %s19 = sphi 0, %s17
    %s20 = sphi 0, %s18
    %s21 = sphi 0, %s19
    %s33 = sphi 0, %s35
    %s36 = sphi 0, %s33
    %s37 = sphi 0, %s36
    %s53 = sphi 0, %s37
    %s57 = sphi 0, %s57
    %s59 = sphi 0, %s57
    %s60 = sphi 0, %s59
    %s74 = sphi 0, %s60
    %s78 = sphi 0, %s78
    %s80 = sphi 0, %s78
    %s81 = sphi 0, %s80
    %s95 = sphi 0, %s81
    %s101 = sphi 0, %s103
    %s104 = sphi 0, %s101
    %s105 = sphi 0, %s104
    %s121 = sphi 0, %s105
  $region4: #{network_forward.2} parent=0 // loop_header_branch
    %12 = sbr.rel (%p10) target = $region8
  $region5: #{network_forward.2} parent=0 // loop_body
    %s14 = ssub.s32 %s9, 1
    %s15 = ssub.s32 %s9, 2
    %s22 = sadd.s32 1, %s17
    %p23 = scmp.ge.s32.totalorder %s22, 1
    %s24 = scalar_select %p23, 0, %s22
    %s25 = sadd.s32 1, %s16
    %s26 = scalar_select %p23, %s25, %s16
    %p27 = scmp.ge.s32.totalorder %s26, 2
    %s28 = scalar_select %p27, 0, %s26
    %s29 = ssub.s32 %s16, %s28
    %s30 = ssub.s32 %s17, %s24
    %s31 = sor.u32 %s29, %s30
    %p32 = scmp.eq.s32.totalorder %s31, 0
    %s34 = sadd.s32 %s33, 1
    %s35 = scalar_select %p32, %s33, %s34
    %p38 = pneg %p32
    %p39 = scmp.eq.s32.totalorder %s9, 1
    %p40 = por %p38, %p39
    %p41 = scmp.ne.s32.totalorder %s33, %s36
    %p42 = scmp.eq.s32.totalorder %s9, 0
    %p43 = por %p41, %p42
    %p44 = scmp.ne.s32.totalorder %s33, %s36
    %p45 = scmp.eq.s32.totalorder %s14, 1
    %p46 = por %p44, %p45
    %p47 = scmp.ne.s32.totalorder %s36, %s37
    %p48 = scmp.eq.s32.totalorder %s14, 0
    %p49 = por %p47, %p48
    %p50 = scmp.ne.s32.totalorder %s36, %s37
    %p51 = scmp.eq.s32.totalorder %s15, 1
    %p52 = por %p50, %p51
    %p54 = scmp.ne.s32.totalorder %s37, %s53
    %p55 = scmp.eq.s32.totalorder %s15, 0
    %p56 = por %p54, %p55
    %s58 = sadd.s32 %s57, 1
    %p61 = scmp.eq.s32.totalorder %s9, 1
    %p62 = scmp.ne.s32.totalorder %s57, %s59
    %p63 = scmp.eq.s32.totalorder %s9, 0
    %p64 = por %p62, %p63
    %p65 = scmp.ne.s32.totalorder %s57, %s59
    %p66 = scmp.eq.s32.totalorder %s14, 1
    %p67 = por %p65, %p66
    %p68 = scmp.ne.s32.totalorder %s59, %s60
    %p69 = scmp.eq.s32.totalorder %s14, 0
    %p70 = por %p68, %p69
    %p71 = scmp.ne.s32.totalorder %s59, %s60
    %p72 = scmp.eq.s32.totalorder %s15, 1
    %p73 = por %p71, %p72
    %p75 = scmp.ne.s32.totalorder %s60, %s74
    %p76 = scmp.eq.s32.totalorder %s15, 0
    %p77 = por %p75, %p76
    %s79 = sadd.s32 %s78, 1
    %p82 = scmp.eq.s32.totalorder %s9, 1
    %p83 = scmp.ne.s32.totalorder %s78, %s80
    %p84 = scmp.eq.s32.totalorder %s9, 0
    %p85 = por %p83, %p84
    %p86 = scmp.ne.s32.totalorder %s78, %s80
    %p87 = scmp.eq.s32.totalorder %s14, 1
    %p88 = por %p86, %p87
    %p89 = scmp.ne.s32.totalorder %s80, %s81
    %p90 = scmp.eq.s32.totalorder %s14, 0
    %p91 = por %p89, %p90
    %p92 = scmp.ne.s32.totalorder %s80, %s81
    %p93 = scmp.eq.s32.totalorder %s15, 1
    %p94 = por %p92, %p93
    %p96 = scmp.ne.s32.totalorder %s81, %s95
    %p97 = scmp.eq.s32.totalorder %s15, 0
    %p98 = por %p96, %p97
    %s99 = ssub.s32 %s16, %s28
    %p100 = scmp.eq.s32.totalorder %s99, 0
    %s102 = sadd.s32 %s101, 1
    %s103 = scalar_select %p100, %s101, %s102
    %p106 = pneg %p100
    %p107 = scmp.eq.s32.totalorder %s9, 1
    %p108 = por %p106, %p107
    %p109 = scmp.ne.s32.totalorder %s101, %s104
    %p110 = scmp.eq.s32.totalorder %s9, 0
    %p111 = por %p109, %p110
    %p112 = scmp.ne.s32.totalorder %s101, %s104
    %p113 = scmp.eq.s32.totalorder %s14, 1
    %p114 = por %p112, %p113
    %p115 = scmp.ne.s32.totalorder %s104, %s105
    %p116 = scmp.eq.s32.totalorder %s14, 0
    %p117 = por %p115, %p116
    %p118 = scmp.ne.s32.totalorder %s104, %s105
    %p119 = scmp.eq.s32.totalorder %s15, 1
    %p120 = por %p118, %p119
    %p122 = scmp.ne.s32.totalorder %s105, %s121
    %p123 = scmp.eq.s32.totalorder %s15, 0
    %p124 = por %p122, %p123
    %p125 = scmp.le.s32.totalorder 1, %s9
    %p126 = scmp.lt.s32.totalorder %s9, 3
    %p127 = pnand %p125, %p126
    %p128 = pneg %p127
    // Predicated region
    $region9: #{network_forward.2} parent=5 // pred_check
      _
    $region10: #{network_forward.2} parent=5 // pred_check_branch
      %130 = sbr.rel (%p127) target = $region12
    $region11: #{network_forward.2} parent=5 // pred_region
      %s131 = ssub.s32 %s9, 1
      // Predicated region
      $region13: #{network_forward.2} parent=11 // pred_check
        %p132 = pneg %p70
      $region14: #{network_forward.2} parent=11 // pred_check_branch
        %134 = sbr.rel (%p132) target = $region16
      $region15: #{network_forward.2} parent=11 // pred_region
        _
      $region16: #{network_forward.2} parent=11 // pred_fallthru
        _
      // Predicated region
      $region17: #{network_forward.2} parent=11 // pred_check
        %p135 = pneg %p91
      $region18: #{network_forward.2} parent=11 // pred_check_branch
        %137 = sbr.rel (%p135) target = $region20
      $region19: #{network_forward.2} parent=11 // pred_region
        _
      $region20: #{network_forward.2} parent=11 // pred_fallthru
        _
    $region12: #{network_forward.2} parent=5 // pred_fallthru
      _
    %p138 = scmp.lt.s32.totalorder %s9, 2
    // Predicated region
    $region21: #{network_forward.2} parent=5 // pred_check
      %p139 = pneg %p138
    $region22: #{network_forward.2} parent=5 // pred_check_branch
      %141 = sbr.rel (%p139) target = $region24
    $region23: #{network_forward.2} parent=5 // pred_region
      // Predicated region
      $region25: #{network_forward.2} parent=23 // pred_check
        %p142 = pneg %p43
      $region26: #{network_forward.2} parent=23 // pred_check_branch
        %144 = sbr.rel (%p142) target = $region28
      $region27: #{network_forward.2} parent=23 // pred_region
        %s145 = smul.u32 32, %s17
        %p146 = scmp.lt.s32.totalorder %s16, 1
        %s147 = scalar_select %p146, %s16, 1
        %p148 = scmp.lt.s32.totalorder %s145, 31
        %s149 = scalar_select %p148, %s145, 31
        %s150 = smul.addr %s147, 32
        %s151 = sadd.s32 %s149, %s150
        %s152 = smul.addr %s151, 4
        %s153 = scalar_lea.vmem %s0, %s152
        %s154 = smul.u32 32, %s17
      $region28: #{network_forward.2} parent=23 // pred_fallthru
        _
    $region24: #{network_forward.2} parent=5 // pred_fallthru
      _
    %p155 = scmp.le.s32.totalorder 1, %s9
    %p156 = scmp.lt.s32.totalorder %s9, 3
    %p157 = pnand %p155, %p156
    %p158 = pneg %p157
    // Predicated region
    $region29: #{network_forward.2} parent=5 // pred_check
      _
    $region30: #{network_forward.2} parent=5 // pred_check_branch
      %160 = sbr.rel (%p157) target = $region32
    $region31: #{network_forward.2} parent=5 // pred_region
      %s161 = ssub.s32 %s9, 1
      %s162 = smul.u32 32, %s19
      %p163 = scmp.lt.s32.totalorder %s18, 1
      %s164 = scalar_select %p163, %s18, 1
      %p165 = scmp.lt.s32.totalorder %s162, 31
      %s166 = scalar_select %p165, %s162, 31
      %s167 = smul.addr %s164, 32
      %s168 = sadd.s32 %s166, %s167
      %s169 = smul.addr %s168, 4
      %s170 = scalar_lea.vmem %s0, %s169
      %p171 = pneg %p49
      %p172 = pneg %p46
      %p173 = pneg %p70
      %p174 = pneg %p67
      %p175 = pneg %p91
      %p176 = pneg %p88
      %p177 = pneg %p117
      %p178 = pneg %p114
      %p179 = scmp.lt.s32.totalorder %s18, 1
      %s180 = scalar_select %p179, %s18, 1
      %s181 = scalar_lea.vmem %s3, %s180
      %s182 = smul.u32 32, %s19
      %p183 = scmp.lt.s32.totalorder %s18, 1
      %s184 = scalar_select %p183, %s18, 1
      %p185 = scmp.lt.s32.totalorder %s182, 31
      %s186 = scalar_select %p185, %s182, 31
      %s187 = smul.addr %s184, 32
      %s188 = sadd.s32 %s186, %s187
      %s189 = smul.addr %s188, 4
      %s190 = scalar_lea.vmem %s0, %s189
      %s191 = smul.u32 32, %s19
      %p192 = scmp.lt.s32.totalorder %s18, 1
      %s193 = scalar_select %p192, %s18, 1
      %s194 = scalar_lea.vmem %s3, %s193
      %p196 = scmp.eq.s32.totalorder %s19, 0
      // Predicated region
      $region33: #{network_forward.2} parent=31 // pred_check
        %p197 = pneg %p196
      $region34: #{network_forward.2} parent=31 // pred_check_branch
        %199 = sbr.rel (%p197) target = $region36
      $region35: #{network_forward.2} parent=31 // pred_region
        %200 = vst [vmem:[#allocation2] sm:$0x1] 0.0
      $region36: #{network_forward.2} parent=31 // pred_fallthru
        _
      %v201 = vld [vmem:[%s190] sm:$0xf]
      %v202 = vld [vmem:[%s190 + $0x4] sm:$0xf]
      %v203 = vld [vmem:[%s190 + $0x8] sm:$0xf]
      %v204 = vld [vmem:[%s190 + $0xc] sm:$0xf]
      %v205 = vld [vmem:[%s190 + $0x10] sm:$0xf]
      %v206 = vld [vmem:[%s190 + $0x14] sm:$0xf]
      %v207 = vld [vmem:[%s190 + $0x18] sm:$0xf]
      %v208 = vld [vmem:[%s190 + $0x1c] sm:$0xf]
      %v209 = vld [vmem:[%s190 + $0x20] sm:$0xf]
      %v210 = vld [vmem:[%s190 + $0x24] sm:$0xf]
      %v211 = vld [vmem:[%s190 + $0x28] sm:$0xf]
      %v212 = vld [vmem:[%s190 + $0x2c] sm:$0xf]
      %v213 = vld [vmem:[%s190 + $0x30] sm:$0xf]
      %v214 = vld [vmem:[%s190 + $0x34] sm:$0xf]
      %v215 = vld [vmem:[%s190 + $0x38] sm:$0xf]
      %v216 = vld [vmem:[%s190 + $0x3c] sm:$0xf]
      %v217 = vld [vmem:[%s190 + $0x40] sm:$0xf]
      %v218 = vld [vmem:[%s190 + $0x44] sm:$0xf]
      %v219 = vld [vmem:[%s190 + $0x48] sm:$0xf]
      %v220 = vld [vmem:[%s190 + $0x4c] sm:$0xf]
      %v221 = vld [vmem:[%s190 + $0x50] sm:$0xf]
      %v222 = vld [vmem:[%s190 + $0x54] sm:$0xf]
      %v223 = vld [vmem:[%s190 + $0x58] sm:$0xf]
      %v224 = vld [vmem:[%s190 + $0x5c] sm:$0xf]
      %v225 = vld [vmem:[%s190 + $0x60] sm:$0xf]
      %v226 = vld [vmem:[%s190 + $0x64] sm:$0xf]
      %v227 = vld [vmem:[%s190 + $0x68] sm:$0xf]
      %v228 = vld [vmem:[%s190 + $0x6c] sm:$0xf]
      %v229 = vld [vmem:[%s190 + $0x70] sm:$0xf]
      %v230 = vld [vmem:[%s190 + $0x74] sm:$0xf]
      %v231 = vld [vmem:[%s190 + $0x78] sm:$0xf]
      %v232 = vld [vmem:[%s190 + $0x7c] sm:$0xf]
      %v233 = vld [vmem:[%s1] sm:$0xf]
      %v234 = vld [vmem:[%s1 + $0x4] sm:$0xf]
      %v235 = vld [vmem:[%s1 + $0x8] sm:$0xf]
      %v236 = vld [vmem:[%s1 + $0xc] sm:$0x3]
      %v237 = vld [vmem:[%s2] sm:$0x1]
      %v239 = vperm.slane %v237, 0
      %v273 = vunpack.c.l.b16 %v201
      %v274 = vunpack.c.l.b16 %v202
      %v275 = vunpack.c.l.b16 %v203
      %v276 = vunpack.c.l.b16 %v204
      %v277 = vunpack.c.l.b16 %v205
      %v278 = vunpack.c.l.b16 %v206
      %v279 = vunpack.c.l.b16 %v207
      %v280 = vunpack.c.l.b16 %v208
      %v281 = vunpack.c.l.b16 %v209
      %v282 = vunpack.c.l.b16 %v210
      %v283 = vunpack.c.l.b16 %v211
      %v284 = vunpack.c.l.b16 %v212
      %v285 = vunpack.c.l.b16 %v213
      %v286 = vunpack.c.l.b16 %v214
      %v287 = vunpack.c.l.b16 %v215
      %v288 = vunpack.c.l.b16 %v216
      %v289 = vunpack.c.l.b16 %v217
      %v290 = vunpack.c.l.b16 %v218
      %v291 = vunpack.c.l.b16 %v219
      %v292 = vunpack.c.l.b16 %v220
      %v293 = vunpack.c.l.b16 %v221
      %v294 = vunpack.c.l.b16 %v222
      %v295 = vunpack.c.l.b16 %v223
      %v296 = vunpack.c.l.b16 %v224
      %v297 = vunpack.c.l.b16 %v225
      %v298 = vunpack.c.l.b16 %v226
      %v299 = vunpack.c.l.b16 %v227
      %v300 = vunpack.c.l.b16 %v228
      %v301 = vunpack.c.l.b16 %v229
      %v302 = vunpack.c.l.b16 %v230
      %v303 = vunpack.c.l.b16 %v231
      %v304 = vunpack.c.l.b16 %v232
      %v305 = vpack.c.b16 %v274, %v273
      %v306 = vpack.c.b16 %v276, %v275
      %v307 = vpack.c.b16 %v278, %v277
      %v308 = vpack.c.b16 %v280, %v279
      %v309 = vpack.c.b16 %v282, %v281
      %v310 = vpack.c.b16 %v284, %v283
      %v311 = vpack.c.b16 %v286, %v285
      %v312 = vpack.c.b16 %v288, %v287
      %v313 = vpack.c.b16 %v290, %v289
      %v314 = vpack.c.b16 %v292, %v291
      %v315 = vpack.c.b16 %v294, %v293
      %v316 = vpack.c.b16 %v296, %v295
      %v317 = vpack.c.b16 %v298, %v297
      %v318 = vpack.c.b16 %v300, %v299
      %v319 = vpack.c.b16 %v302, %v301
      %v320 = vpack.c.b16 %v304, %v303
      %v325 = vunpack.c.l.b16 %v233
      %v326 = vunpack.c.l.b16 %v234
      %v327 = vunpack.c.l.b16 %v235
      %v328 = vunpack.c.l.b16 %v236
      %v329 = vpack.c.b16 %v326, %v325
      %v330 = vpack.c.b16 %v328, %v327
      %vm332 = vcmask 220160
      %v334 = vsel %vm332, %v305, 0
      %v337 = vsel %vm332, %v306, 0
      %v340 = vsel %vm332, %v307, 0
      %v343 = vsel %vm332, %v308, 0
      %v346 = vsel %vm332, %v309, 0
      %v349 = vsel %vm332, %v310, 0
      %v352 = vsel %vm332, %v311, 0
      %v355 = vsel %vm332, %v312, 0
      %v358 = vsel %vm332, %v313, 0
      %v361 = vsel %vm332, %v314, 0
      %v364 = vsel %vm332, %v315, 0
      %v367 = vsel %vm332, %v316, 0
      %v370 = vsel %vm332, %v317, 0
      %v373 = vsel %vm332, %v318, 0
      %v376 = vsel %vm332, %v319, 0
      %v379 = vsel %vm332, %v320, 0
      %vm381 = vcmask 1044480
      %vm382 = vcmask 1045504
      %v383 = vsel %vm381, 4294967295, 65535
      %v384 = vsel %vm382, %v383, 0
      %v386 = vand.u32 %v330, %v384
      %388 = vmatpush.bf16.msra.mxu0 0
      %389 = vmatpush.bf16.msra.mxu0 0
      %390 = vmatpush.bf16.msra.mxu0 0
      %391 = vmatpush.bf16.msra.mxu0 0
      %392 = vmatpush.bf16.msra.mxu0 0
      %393 = vmatpush.bf16.msra.mxu0 0
      %394 = vmatpush.bf16.msra.mxu0 %v386
      %395 = vmatpush.bf16.msra.mxu0 %v329
      %396 = vmatmul.bf16.gmra.mxu0 %v334
      %v397 = vpop.f32.mrf.mxu0
      %v398 = vadd.f32 %v239, %v397
      %v399 = vpop.f32.mrf.mxu0
      %v400 = vadd.f32 %v239, %v399
      %401 = vmatmul.bf16.gmra.mxu0 %v337
      %v402 = vpop.f32.mrf.mxu0
      %v403 = vadd.f32 %v239, %v402
      %v404 = vpop.f32.mrf.mxu0
      %v405 = vadd.f32 %v239, %v404
      %406 = vmatmul.bf16.gmra.mxu0 %v340
      %v407 = vpop.f32.mrf.mxu0
      %v408 = vadd.f32 %v239, %v407
      %v409 = vpop.f32.mrf.mxu0
      %v410 = vadd.f32 %v239, %v409
      %411 = vmatmul.bf16.gmra.mxu0 %v343
      %v412 = vpop.f32.mrf.mxu0
      %v413 = vadd.f32 %v239, %v412
      %v414 = vpop.f32.mrf.mxu0
      %v415 = vadd.f32 %v239, %v414
      %416 = vmatmul.bf16.gmra.mxu0 %v346
      %v417 = vpop.f32.mrf.mxu0
      %v418 = vadd.f32 %v239, %v417
      %v419 = vpop.f32.mrf.mxu0
      %v420 = vadd.f32 %v239, %v419
      %421 = vmatmul.bf16.gmra.mxu0 %v349
      %v422 = vpop.f32.mrf.mxu0
      %v423 = vadd.f32 %v239, %v422
      %v424 = vpop.f32.mrf.mxu0
      %v425 = vadd.f32 %v239, %v424
      %426 = vmatmul.bf16.gmra.mxu0 %v352
      %v427 = vpop.f32.mrf.mxu0
      %v428 = vadd.f32 %v239, %v427
      %v429 = vpop.f32.mrf.mxu0
      %v430 = vadd.f32 %v239, %v429
      %431 = vmatmul.bf16.gmra.mxu0 %v355
      %v432 = vpop.f32.mrf.mxu0
      %v433 = vadd.f32 %v239, %v432
      %v434 = vpop.f32.mrf.mxu0
      %v435 = vadd.f32 %v239, %v434
      %436 = vmatmul.bf16.gmra.mxu0 %v358
      %v437 = vpop.f32.mrf.mxu0
      %v438 = vadd.f32 %v239, %v437
      %v439 = vpop.f32.mrf.mxu0
      %v440 = vadd.f32 %v239, %v439
      %441 = vmatmul.bf16.gmra.mxu0 %v361
      %v442 = vpop.f32.mrf.mxu0
      %v443 = vadd.f32 %v239, %v442
      %v444 = vpop.f32.mrf.mxu0
      %v445 = vadd.f32 %v239, %v444
      %446 = vmatmul.bf16.gmra.mxu0 %v364
      %v447 = vpop.f32.mrf.mxu0
      %v448 = vadd.f32 %v239, %v447
      %v449 = vpop.f32.mrf.mxu0
      %v450 = vadd.f32 %v239, %v449
      %451 = vmatmul.bf16.gmra.mxu0 %v367
      %v452 = vpop.f32.mrf.mxu0
      %v453 = vadd.f32 %v239, %v452
      %v454 = vpop.f32.mrf.mxu0
      %v455 = vadd.f32 %v239, %v454
      %456 = vmatmul.bf16.gmra.mxu0 %v370
      %v457 = vpop.f32.mrf.mxu0
      %v458 = vadd.f32 %v239, %v457
      %v459 = vpop.f32.mrf.mxu0
      %v460 = vadd.f32 %v239, %v459
      %461 = vmatmul.bf16.gmra.mxu0 %v373
      %v462 = vpop.f32.mrf.mxu0
      %v463 = vadd.f32 %v239, %v462
      %v464 = vpop.f32.mrf.mxu0
      %v465 = vadd.f32 %v239, %v464
      %466 = vmatmul.bf16.gmra.mxu0 %v376
      %v467 = vpop.f32.mrf.mxu0
      %v468 = vadd.f32 %v239, %v467
      %v469 = vpop.f32.mrf.mxu0
      %v470 = vadd.f32 %v239, %v469
      %471 = vmatmul.bf16.gmra.mxu0 %v379
      %v472 = vpop.f32.mrf.mxu0
      %v473 = vadd.f32 %v239, %v472
      %v474 = vpop.f32.mrf.mxu0
      %v475 = vadd.f32 %v239, %v474
      %476 = vdwg.mxu0
      %v477 = vmul.f32 %v398, 0.5
      %v478 = vmul.f32 %v400, 0.5
      %v479 = vmul.f32 %v403, 0.5
      %v480 = vmul.f32 %v405, 0.5
      %v481 = vmul.f32 %v408, 0.5
      %v482 = vmul.f32 %v410, 0.5
      %v483 = vmul.f32 %v413, 0.5
      %v484 = vmul.f32 %v415, 0.5
      %v485 = vmul.f32 %v418, 0.5
      %v486 = vmul.f32 %v420, 0.5
      %v487 = vmul.f32 %v423, 0.5
      %v488 = vmul.f32 %v425, 0.5
      %v489 = vmul.f32 %v428, 0.5
      %v490 = vmul.f32 %v430, 0.5
      %v491 = vmul.f32 %v433, 0.5
      %v492 = vmul.f32 %v435, 0.5
      %v493 = vmul.f32 %v438, 0.5
      %v494 = vmul.f32 %v440, 0.5
      %v495 = vmul.f32 %v443, 0.5
      %v496 = vmul.f32 %v445, 0.5
      %v497 = vmul.f32 %v448, 0.5
      %v498 = vmul.f32 %v450, 0.5
      %v499 = vmul.f32 %v453, 0.5
      %v500 = vmul.f32 %v455, 0.5
      %v501 = vmul.f32 %v458, 0.5
      %v502 = vmul.f32 %v460, 0.5
      %v503 = vmul.f32 %v463, 0.5
      %v504 = vmul.f32 %v465, 0.5
      %v505 = vmul.f32 %v468, 0.5
      %v506 = vmul.f32 %v470, 0.5
      %v507 = vmul.f32 %v473, 0.5
      %v508 = vmul.f32 %v475, 0.5
      %v509 = vtanh.pop %v477
      %v510 = vtanh.pop %v478
      %v511 = vtanh.pop %v479
      %v512 = vtanh.pop %v480
      %v513 = vtanh.pop %v481
      %v514 = vtanh.pop %v482
      %v515 = vtanh.pop %v483
      %v516 = vtanh.pop %v484
      %v517 = vtanh.pop %v485
      %v518 = vtanh.pop %v486
      %v519 = vtanh.pop %v487
      %v520 = vtanh.pop %v488
      %v521 = vtanh.pop %v489
      %v522 = vtanh.pop %v490
      %v523 = vtanh.pop %v491
      %v524 = vtanh.pop %v492
      %v525 = vtanh.pop %v493
      %v526 = vtanh.pop %v494
      %v527 = vtanh.pop %v495
      %v528 = vtanh.pop %v496
      %v529 = vtanh.pop %v497
      %v530 = vtanh.pop %v498
      %v531 = vtanh.pop %v499
      %v532 = vtanh.pop %v500
      %v533 = vtanh.pop %v501
      %v534 = vtanh.pop %v502
      %v535 = vtanh.pop %v503
      %v536 = vtanh.pop %v504
      %v537 = vtanh.pop %v505
      %v538 = vtanh.pop %v506
      %v539 = vtanh.pop %v507
      %v540 = vtanh.pop %v508
      %v541 = vadd.f32 %v509, 1.0
      %v542 = vadd.f32 %v510, 1.0
      %v543 = vadd.f32 %v511, 1.0
      %v544 = vadd.f32 %v512, 1.0
      %v545 = vadd.f32 %v513, 1.0
      %v546 = vadd.f32 %v514, 1.0
      %v547 = vadd.f32 %v515, 1.0
      %v548 = vadd.f32 %v516, 1.0
      %v549 = vadd.f32 %v517, 1.0
      %v550 = vadd.f32 %v518, 1.0
      %v551 = vadd.f32 %v519, 1.0
      %v552 = vadd.f32 %v520, 1.0
      %v553 = vadd.f32 %v521, 1.0
      %v554 = vadd.f32 %v522, 1.0
      %v555 = vadd.f32 %v523, 1.0
      %v556 = vadd.f32 %v524, 1.0
      %v557 = vadd.f32 %v525, 1.0
      %v558 = vadd.f32 %v526, 1.0
      %v559 = vadd.f32 %v527, 1.0
      %v560 = vadd.f32 %v528, 1.0
      %v561 = vadd.f32 %v529, 1.0
      %v562 = vadd.f32 %v530, 1.0
      %v563 = vadd.f32 %v531, 1.0
      %v564 = vadd.f32 %v532, 1.0
      %v565 = vadd.f32 %v533, 1.0
      %v566 = vadd.f32 %v534, 1.0
      %v567 = vadd.f32 %v535, 1.0
      %v568 = vadd.f32 %v536, 1.0
      %v569 = vadd.f32 %v537, 1.0
      %v570 = vadd.f32 %v538, 1.0
      %v571 = vadd.f32 %v539, 1.0
      %v572 = vadd.f32 %v540, 1.0
      %v573 = vmul.f32 %v477, %v541
      %v574 = vmul.f32 %v478, %v542
      %v575 = vmul.f32 %v479, %v543
      %v576 = vmul.f32 %v480, %v544
      %v577 = vmul.f32 %v481, %v545
      %v578 = vmul.f32 %v482, %v546
      %v579 = vmul.f32 %v483, %v547
      %v580 = vmul.f32 %v484, %v548
      %v581 = vmul.f32 %v485, %v549
      %v582 = vmul.f32 %v486, %v550
      %v583 = vmul.f32 %v487, %v551
      %v584 = vmul.f32 %v488, %v552
      %v585 = vmul.f32 %v489, %v553
      %v586 = vmul.f32 %v490, %v554
      %v587 = vmul.f32 %v491, %v555
      %v588 = vmul.f32 %v492, %v556
      %v589 = vmul.f32 %v493, %v557
      %v590 = vmul.f32 %v494, %v558
      %v591 = vmul.f32 %v495, %v559
      %v592 = vmul.f32 %v496, %v560
      %v593 = vmul.f32 %v497, %v561
      %v594 = vmul.f32 %v498, %v562
      %v595 = vmul.f32 %v499, %v563
      %v596 = vmul.f32 %v500, %v564
      %v597 = vmul.f32 %v501, %v565
      %v598 = vmul.f32 %v502, %v566
      %v599 = vmul.f32 %v503, %v567
      %v600 = vmul.f32 %v504, %v568
      %v601 = vmul.f32 %v505, %v569
      %v602 = vmul.f32 %v506, %v570
      %v603 = vmul.f32 %v507, %v571
      %v604 = vmul.f32 %v508, %v572
      %v605 = vld [vmem:[#allocation2] sm:$0x1]
      %v606 = vadd.f32 %v573, %v574
      %v607 = vadd.f32 %v606, %v575
      %v608 = vadd.f32 %v607, %v576
      %v609 = vadd.f32 %v608, %v577
      %v610 = vadd.f32 %v609, %v578
      %v611 = vadd.f32 %v610, %v579
      %v612 = vadd.f32 %v611, %v580
      %v613 = vadd.f32 %v612, %v581
      %v614 = vadd.f32 %v613, %v582
      %v615 = vadd.f32 %v614, %v583
      %v616 = vadd.f32 %v615, %v584
      %v617 = vadd.f32 %v616, %v585
      %v618 = vadd.f32 %v617, %v586
      %v619 = vadd.f32 %v618, %v587
      %v620 = vadd.f32 %v619, %v588
      %v621 = vadd.f32 %v620, %v589
      %v622 = vadd.f32 %v621, %v590
      %v623 = vadd.f32 %v622, %v591
      %v624 = vadd.f32 %v623, %v592
      %v625 = vadd.f32 %v624, %v593
      %v626 = vadd.f32 %v625, %v594
      %v627 = vadd.f32 %v626, %v595
      %v628 = vadd.f32 %v627, %v596
      %v629 = vadd.f32 %v628, %v597
      %v630 = vadd.f32 %v629, %v598
      %v631 = vadd.f32 %v630, %v599
      %v632 = vadd.f32 %v631, %v600
      %v633 = vadd.f32 %v632, %v601
      %v634 = vadd.f32 %v633, %v602
      %v635 = vadd.f32 %v634, %v603
      %v636 = vadd.f32 %v635, %v604
      %v637 = vrot.slane %v636, 4
      %v638 = vadd.f32 %v636, %v637
      %v639 = vrot.slane %v638, 2
      %v640 = vadd.f32 %v638, %v639
      %v641 = vrot.slane %v640, 1
      %v642 = vadd.f32 %v640, %v641
      %v643 = vadd.f32 %v605, %v642
      %644 = vst [vmem:[#allocation2] sm:$0x1] %v643
      // Predicated region
      $region37: #{network_forward.2} parent=31 // pred_check
        %p645 = pneg %p196
      $region38: #{network_forward.2} parent=31 // pred_check_branch
        %647 = sbr.rel (%p645) target = $region40
      $region39: #{network_forward.2} parent=31 // pred_region
        %v648 = vld [vmem:[#allocation2] sm:$0x1]
        %v649 = vmul.f32 %v648, 0.00390625
        %650 = vst [vmem:[%s194] sm:$0x1] %v649
      $region40: #{network_forward.2} parent=31 // pred_fallthru
        _
      %p651 = scmp.lt.s32.totalorder %s18, 1
      %s652 = scalar_select %p651, %s18, 1
      %s653 = scalar_lea.vmem %s3, %s652
      // Predicated region
      $region41: #{network_forward.2} parent=31 // pred_check
        %p654 = pneg %p114
      $region42: #{network_forward.2} parent=31 // pred_check_branch
        %656 = sbr.rel (%p654) target = $region44
      $region43: #{network_forward.2} parent=31 // pred_region
        _
      $region44: #{network_forward.2} parent=31 // pred_fallthru
        _
    $region32: #{network_forward.2} parent=5 // pred_fallthru
      _
    %p657 = scmp.le.s32.totalorder 2, %s9
    // Predicated region
    $region45: #{network_forward.2} parent=5 // pred_check
      %p658 = pneg %p657
    $region46: #{network_forward.2} parent=5 // pred_check_branch
      %660 = sbr.rel (%p658) target = $region48
    $region47: #{network_forward.2} parent=5 // pred_region
      %s661 = ssub.s32 %s9, 2
      // Predicated region
      $region49: #{network_forward.2} parent=47 // pred_check
        %p662 = pneg %p120
      $region50: #{network_forward.2} parent=47 // pred_check_branch
        %664 = sbr.rel (%p662) target = $region52
      $region51: #{network_forward.2} parent=47 // pred_region
        %p665 = scmp.lt.s32.totalorder %s20, 1
        %s666 = scalar_select %p665, %s20, 1
        %s667 = scalar_lea.vmem %s3, %s666
      $region52: #{network_forward.2} parent=47 // pred_fallthru
        _
    $region48: #{network_forward.2} parent=5 // pred_fallthru
      _
  $region6: #{network_forward.2} parent=0 // loop_footer
    %s13 = sadd.s32 1, %s9
  $region7: #{network_forward.2} parent=0 // loop_footer_branch
    %8 = sbr.rel target = $region3
  $region8: #{network_forward.2} parent=0 // loop_exit
    _

// kernel: network_forward.3
$region0: #{network_forward.3}
  #allocation0 [shape = 'u32[]', space=smem, size = 0x4, offset = 0x4, fixed_abs, tag = 'smem constant byte address 0x4 - core index']
  #allocation1 [shape = 'u32[72,128]{1,0:T(1,128)}', space=vmem, size = 0x9000, scoped, tag = 'internal scratch']
  %s0 = inlined_call_operand.vmem [shape: bf16[16,128], index: 0, kind: input, shape index: {}]
  %s1 = inlined_call_operand.vmem [shape: bf16[128,1280], index: 1, kind: input, shape index: {}]
  %s2 = inlined_call_operand.vmem [shape: f32[1,1280], index: 2, kind: input, shape index: {}]
  %s3 = inlined_call_operand.vmem [shape: bf16[1280,512], index: 3, kind: input, shape index: {}]
  %s4 = inlined_call_operand.vmem [shape: f32[1,512], index: 4, kind: input, shape index: {}]
  %s5 = inlined_call_operand.vmem [shape: bf16[512,256], index: 5, kind: input, shape index: {}]
  %s6 = inlined_call_operand.vmem [shape: f32[1,256], index: 6, kind: input, shape index: {}]
  %s7 = inlined_call_operand.vmem [shape: bf16[256,128], index: 7, kind: input, shape index: {}]
  %s8 = inlined_call_operand.vmem [shape: f32[1,128], index: 8, kind: input, shape index: {}]
  %s9 = inlined_call_operand.vmem [shape: f32[16,128], index: 9, kind: output, shape index: {}]
  %s10 = sld [smem:[#allocation0]]
  $region46: #{network_forward.3} parent=0
    _
  %s12 = ssub.s32 1, %s10
  %s13 = scalar_select 0, %s12, %s10
  // Predicated region
  $region2: #{network_forward.3} parent=0 // pred_check
    _
  $region3: #{network_forward.3} parent=0 // pred_check_branch
    %15 = sbr.rel (0) target = $region5
  $region4: #{network_forward.3} parent=0 // pred_region
    _
  $region5: #{network_forward.3} parent=0 // pred_fallthru
    _
  // Predicated region
  $region6: #{network_forward.3} parent=0 // pred_check
    _
  $region7: #{network_forward.3} parent=0 // pred_check_branch
    %17 = sbr.rel (0) target = $region9
  $region8: #{network_forward.3} parent=0 // pred_region
    _
  $region9: #{network_forward.3} parent=0 // pred_fallthru
    _
  // Predicated region
  $region10: #{network_forward.3} parent=0 // pred_check
    _
  $region11: #{network_forward.3} parent=0 // pred_check_branch
    %19 = sbr.rel (0) target = $region13
  $region12: #{network_forward.3} parent=0 // pred_region
    _
  $region13: #{network_forward.3} parent=0 // pred_fallthru
    _
  // Predicated region
  $region14: #{network_forward.3} parent=0 // pred_check
    _
  $region15: #{network_forward.3} parent=0 // pred_check_branch
    %21 = sbr.rel (0) target = $region17
  $region16: #{network_forward.3} parent=0 // pred_region
    _
  $region17: #{network_forward.3} parent=0 // pred_fallthru
    _
  // Predicated region
  $region18: #{network_forward.3} parent=0 // pred_check
    _
  $region19: #{network_forward.3} parent=0 // pred_check_branch
    %23 = sbr.rel (0) target = $region21
  $region20: #{network_forward.3} parent=0 // pred_region
    _
  $region21: #{network_forward.3} parent=0 // pred_fallthru
    _
  // Predicated region
  $region22: #{network_forward.3} parent=0 // pred_check
    _
  $region23: #{network_forward.3} parent=0 // pred_check_branch
    %25 = sbr.rel (0) target = $region25
  $region24: #{network_forward.3} parent=0 // pred_region
    _
  $region25: #{network_forward.3} parent=0 // pred_fallthru
    _
  // Predicated region
  $region26: #{network_forward.3} parent=0 // pred_check
    _
  $region27: #{network_forward.3} parent=0 // pred_check_branch
    %27 = sbr.rel (0) target = $region29
  $region28: #{network_forward.3} parent=0 // pred_region
    _
  $region29: #{network_forward.3} parent=0 // pred_fallthru
    _
  // Predicated region
  $region30: #{network_forward.3} parent=0 // pred_check
    _
  $region31: #{network_forward.3} parent=0 // pred_check_branch
    %29 = sbr.rel (0) target = $region33
  $region32: #{network_forward.3} parent=0 // pred_region
    _
  $region33: #{network_forward.3} parent=0 // pred_fallthru
    _
  // Predicated region
  $region34: #{network_forward.3} parent=0 // pred_check
    _
  $region35: #{network_forward.3} parent=0 // pred_check_branch
    %31 = sbr.rel (0) target = $region37
  $region36: #{network_forward.3} parent=0 // pred_region
    _
  $region37: #{network_forward.3} parent=0 // pred_fallthru
    _
  %v32 = vld [vmem:[%s0] sm:$0xf]
  %v33 = vld [vmem:[%s0 + $0x4] sm:$0xf]
  %v34 = vld [vmem:[%s1] sm:$0xff]
  %v35 = vld [vmem:[%s1 + $0x8] sm:$0xff]
  %v36 = vld [vmem:[%s1 + $0x10] sm:$0xff]
  %v37 = vld [vmem:[%s1 + $0x18] sm:$0xff]
  %v38 = vld [vmem:[%s1 + $0x20] sm:$0xff]
  %v39 = vld [vmem:[%s1 + $0x28] sm:$0xff]
  %v40 = vld [vmem:[%s1 + $0x30] sm:$0xff]
  %v41 = vld [vmem:[%s1 + $0x38] sm:$0xff]
  %v42 = vld [vmem:[%s1 + $0x40] sm:$0xff]
  %v43 = vld [vmem:[%s1 + $0x48] sm:$0xff]
  %v44 = vld [vmem:[%s1 + $0x50] sm:$0xff]
  %v45 = vld [vmem:[%s1 + $0x58] sm:$0xff]
  %v46 = vld [vmem:[%s1 + $0x60] sm:$0xff]
  %v47 = vld [vmem:[%s1 + $0x68] sm:$0xff]
  %v48 = vld [vmem:[%s1 + $0x70] sm:$0xff]
  %v49 = vld [vmem:[%s1 + $0x78] sm:$0xff]
  %v50 = vld [vmem:[%s1 + $0x80] sm:$0xff]
  %v51 = vld [vmem:[%s1 + $0x88] sm:$0xff]
  %v52 = vld [vmem:[%s1 + $0x90] sm:$0xff]
  %v53 = vld [vmem:[%s1 + $0x98] sm:$0xff]
  %v54 = vld [vmem:[%s1 + $0xa0] sm:$0xff]
  %v55 = vld [vmem:[%s1 + $0xa8] sm:$0xff]
  %v56 = vld [vmem:[%s1 + $0xb0] sm:$0xff]
  %v57 = vld [vmem:[%s1 + $0xb8] sm:$0xff]
  %v58 = vld [vmem:[%s1 + $0xc0] sm:$0xff]
  %v59 = vld [vmem:[%s1 + $0xc8] sm:$0xff]
  %v60 = vld [vmem:[%s1 + $0xd0] sm:$0xff]
  %v61 = vld [vmem:[%s1 + $0xd8] sm:$0xff]
  %v62 = vld [vmem:[%s1 + $0xe0] sm:$0xff]
  %v63 = vld [vmem:[%s1 + $0xe8] sm:$0xff]
  %v64 = vld [vmem:[%s1 + $0xf0] sm:$0xff]
  %v65 = vld [vmem:[%s1 + $0xf8] sm:$0xff]
  %v66 = vld [vmem:[%s1 + $0x100] sm:$0xff]
  %v67 = vld [vmem:[%s1 + $0x108] sm:$0xff]
  %v68 = vld [vmem:[%s1 + $0x110] sm:$0xff]
  %v69 = vld [vmem:[%s1 + $0x118] sm:$0xff]
  %v70 = vld [vmem:[%s1 + $0x120] sm:$0xff]
  %v71 = vld [vmem:[%s1 + $0x128] sm:$0xff]
  %v72 = vld [vmem:[%s1 + $0x130] sm:$0xff]
  %v73 = vld [vmem:[%s1 + $0x138] sm:$0xff]
  %v74 = vld [vmem:[%s1 + $0x140] sm:$0xff]
  %v75 = vld [vmem:[%s1 + $0x148] sm:$0xff]
  %v76 = vld [vmem:[%s1 + $0x150] sm:$0xff]
  %v77 = vld [vmem:[%s1 + $0x158] sm:$0xff]
  %v78 = vld [vmem:[%s1 + $0x160] sm:$0xff]
  %v79 = vld [vmem:[%s1 + $0x168] sm:$0xff]
  %v80 = vld [vmem:[%s1 + $0x170] sm:$0xff]
  %v81 = vld [vmem:[%s1 + $0x178] sm:$0xff]
  %v82 = vld [vmem:[%s1 + $0x180] sm:$0xff]
  %v83 = vld [vmem:[%s1 + $0x188] sm:$0xff]
  %v84 = vld [vmem:[%s1 + $0x190] sm:$0xff]
  %v85 = vld [vmem:[%s1 + $0x198] sm:$0xff]
  %v86 = vld [vmem:[%s1 + $0x1a0] sm:$0xff]
  %v87 = vld [vmem:[%s1 + $0x1a8] sm:$0xff]
  %v88 = vld [vmem:[%s1 + $0x1b0] sm:$0xff]
  %v89 = vld [vmem:[%s1 + $0x1b8] sm:$0xff]
  %v90 = vld [vmem:[%s1 + $0x1c0] sm:$0xff]
  %v91 = vld [vmem:[%s1 + $0x1c8] sm:$0xff]
  %v92 = vld [vmem:[%s1 + $0x1d0] sm:$0xff]
  %v93 = vld [vmem:[%s1 + $0x1d8] sm:$0xff]
  %v94 = vld [vmem:[%s1 + $0x1e0] sm:$0xff]
  %v95 = vld [vmem:[%s1 + $0x1e8] sm:$0xff]
  %v96 = vld [vmem:[%s1 + $0x1f0] sm:$0xff]
  %v97 = vld [vmem:[%s1 + $0x1f8] sm:$0xff]
  %v98 = vld [vmem:[%s1 + $0x200] sm:$0xff]
  %v99 = vld [vmem:[%s1 + $0x208] sm:$0xff]
  %v100 = vld [vmem:[%s1 + $0x210] sm:$0xff]
  %v101 = vld [vmem:[%s1 + $0x218] sm:$0xff]
  %v102 = vld [vmem:[%s1 + $0x220] sm:$0xff]
  %v103 = vld [vmem:[%s1 + $0x228] sm:$0xff]
  %v104 = vld [vmem:[%s1 + $0x230] sm:$0xff]
  %v105 = vld [vmem:[%s1 + $0x238] sm:$0xff]
  %v106 = vld [vmem:[%s1 + $0x240] sm:$0xff]
  %v107 = vld [vmem:[%s1 + $0x248] sm:$0xff]
  %v108 = vld [vmem:[%s1 + $0x250] sm:$0xff]
  %v109 = vld [vmem:[%s1 + $0x258] sm:$0xff]
  %v110 = vld [vmem:[%s1 + $0x260] sm:$0xff]
  %v111 = vld [vmem:[%s1 + $0x268] sm:$0xff]
  %v112 = vld [vmem:[%s1 + $0x270] sm:$0xff]
  %v113 = vld [vmem:[%s1 + $0x278] sm:$0xff]
  %v114 = vld [vmem:[%s2] sm:$0xff]
  %v115 = vld [vmem:[%s2 + $0x8] sm:$0x3]
  %v118 = vperm.slane %v114, 0
  %v119 = vperm.slane %v114, 1
  %v120 = vperm.slane %v114, 2
  %v121 = vperm.slane %v114, 3
  %v122 = vperm.slane %v114, 4
  %v123 = vperm.slane %v114, 5
  %v124 = vperm.slane %v114, 6
  %v125 = vperm.slane %v114, 7
  %v126 = vperm.slane %v115, 0
  %v127 = vperm.slane %v115, 1
  %v140 = vunpack.c.l.b16 %v32
  %v141 = vunpack.c.l.b16 %v33
  %v142 = vpack.c.b16 %v141, %v140
  %v224 = vunpack.c.l.b16 %v34
  %v225 = vunpack.c.h.b16 %v34
  %v226 = vunpack.c.l.b16 %v35
  %v227 = vunpack.c.h.b16 %v35
  %v228 = vunpack.c.l.b16 %v36
  %v229 = vunpack.c.h.b16 %v36
  %v230 = vunpack.c.l.b16 %v37
  %v231 = vunpack.c.h.b16 %v37
  %v232 = vunpack.c.l.b16 %v38
  %v233 = vunpack.c.h.b16 %v38
  %v234 = vunpack.c.l.b16 %v39
  %v235 = vunpack.c.h.b16 %v39
  %v236 = vunpack.c.l.b16 %v40
  %v237 = vunpack.c.h.b16 %v40
  %v238 = vunpack.c.l.b16 %v41
  %v239 = vunpack.c.h.b16 %v41
  %v240 = vunpack.c.l.b16 %v42
  %v241 = vunpack.c.h.b16 %v42
  %v242 = vunpack.c.l.b16 %v43
  %v243 = vunpack.c.h.b16 %v43
  %v244 = vunpack.c.l.b16 %v44
  %v245 = vunpack.c.h.b16 %v44
  %v246 = vunpack.c.l.b16 %v45
  %v247 = vunpack.c.h.b16 %v45
  %v248 = vunpack.c.l.b16 %v46
  %v249 = vunpack.c.h.b16 %v46
  %v250 = vunpack.c.l.b16 %v47
  %v251 = vunpack.c.h.b16 %v47
  %v252 = vunpack.c.l.b16 %v48
  %v253 = vunpack.c.h.b16 %v48
  %v254 = vunpack.c.l.b16 %v49
  %v255 = vunpack.c.h.b16 %v49
  %v256 = vunpack.c.l.b16 %v50
  %v257 = vunpack.c.h.b16 %v50
  %v258 = vunpack.c.l.b16 %v51
  %v259 = vunpack.c.h.b16 %v51
  %v260 = vunpack.c.l.b16 %v52
  %v261 = vunpack.c.h.b16 %v52
  %v262 = vunpack.c.l.b16 %v53
  %v263 = vunpack.c.h.b16 %v53
  %v264 = vunpack.c.l.b16 %v54
  %v265 = vunpack.c.h.b16 %v54
  %v266 = vunpack.c.l.b16 %v55
  %v267 = vunpack.c.h.b16 %v55
  %v268 = vunpack.c.l.b16 %v56
  %v269 = vunpack.c.h.b16 %v56
  %v270 = vunpack.c.l.b16 %v57
  %v271 = vunpack.c.h.b16 %v57
  %v272 = vunpack.c.l.b16 %v58
  %v273 = vunpack.c.h.b16 %v58
  %v274 = vunpack.c.l.b16 %v59
  %v275 = vunpack.c.h.b16 %v59
  %v276 = vunpack.c.l.b16 %v60
  %v277 = vunpack.c.h.b16 %v60
  %v278 = vunpack.c.l.b16 %v61
  %v279 = vunpack.c.h.b16 %v61
  %v280 = vunpack.c.l.b16 %v62
  %v281 = vunpack.c.h.b16 %v62
  %v282 = vunpack.c.l.b16 %v63
  %v283 = vunpack.c.h.b16 %v63
  %v284 = vunpack.c.l.b16 %v64
  %v285 = vunpack.c.h.b16 %v64
  %v286 = vunpack.c.l.b16 %v65
  %v287 = vunpack.c.h.b16 %v65
  %v288 = vunpack.c.l.b16 %v66
  %v289 = vunpack.c.h.b16 %v66
  %v290 = vunpack.c.l.b16 %v67
  %v291 = vunpack.c.h.b16 %v67
  %v292 = vunpack.c.l.b16 %v68
  %v293 = vunpack.c.h.b16 %v68
  %v294 = vunpack.c.l.b16 %v69
  %v295 = vunpack.c.h.b16 %v69
  %v296 = vunpack.c.l.b16 %v70
  %v297 = vunpack.c.h.b16 %v70
  %v298 = vunpack.c.l.b16 %v71
  %v299 = vunpack.c.h.b16 %v71
  %v300 = vunpack.c.l.b16 %v72
  %v301 = vunpack.c.h.b16 %v72
  %v302 = vunpack.c.l.b16 %v73
  %v303 = vunpack.c.h.b16 %v73
  %v304 = vunpack.c.l.b16 %v74
  %v305 = vunpack.c.h.b16 %v74
  %v306 = vunpack.c.l.b16 %v75
  %v307 = vunpack.c.h.b16 %v75
  %v308 = vunpack.c.l.b16 %v76
  %v309 = vunpack.c.h.b16 %v76
  %v310 = vunpack.c.l.b16 %v77
  %v311 = vunpack.c.h.b16 %v77
  %v312 = vunpack.c.l.b16 %v78
  %v313 = vunpack.c.h.b16 %v78
  %v314 = vunpack.c.l.b16 %v79
  %v315 = vunpack.c.h.b16 %v79
  %v316 = vunpack.c.l.b16 %v80
  %v317 = vunpack.c.h.b16 %v80
  %v318 = vunpack.c.l.b16 %v81
  %v319 = vunpack.c.h.b16 %v81
  %v320 = vunpack.c.l.b16 %v82
  %v321 = vunpack.c.h.b16 %v82
  %v322 = vunpack.c.l.b16 %v83
  %v323 = vunpack.c.h.b16 %v83
  %v324 = vunpack.c.l.b16 %v84
  %v325 = vunpack.c.h.b16 %v84
  %v326 = vunpack.c.l.b16 %v85
  %v327 = vunpack.c.h.b16 %v85
  %v328 = vunpack.c.l.b16 %v86
  %v329 = vunpack.c.h.b16 %v86
  %v330 = vunpack.c.l.b16 %v87
  %v331 = vunpack.c.h.b16 %v87
  %v332 = vunpack.c.l.b16 %v88
  %v333 = vunpack.c.h.b16 %v88
  %v334 = vunpack.c.l.b16 %v89
  %v335 = vunpack.c.h.b16 %v89
  %v336 = vunpack.c.l.b16 %v90
  %v337 = vunpack.c.h.b16 %v90
  %v338 = vunpack.c.l.b16 %v91
  %v339 = vunpack.c.h.b16 %v91
  %v340 = vunpack.c.l.b16 %v92
  %v341 = vunpack.c.h.b16 %v92
  %v342 = vunpack.c.l.b16 %v93
  %v343 = vunpack.c.h.b16 %v93
  %v344 = vunpack.c.l.b16 %v94
  %v345 = vunpack.c.h.b16 %v94
  %v346 = vunpack.c.l.b16 %v95
  %v347 = vunpack.c.h.b16 %v95
  %v348 = vunpack.c.l.b16 %v96
  %v349 = vunpack.c.h.b16 %v96
  %v350 = vunpack.c.l.b16 %v97
  %v351 = vunpack.c.h.b16 %v97
  %v352 = vunpack.c.l.b16 %v98
  %v353 = vunpack.c.h.b16 %v98
  %v354 = vunpack.c.l.b16 %v99
  %v355 = vunpack.c.h.b16 %v99
  %v356 = vunpack.c.l.b16 %v100
  %v357 = vunpack.c.h.b16 %v100
  %v358 = vunpack.c.l.b16 %v101
  %v359 = vunpack.c.h.b16 %v101
  %v360 = vunpack.c.l.b16 %v102
  %v361 = vunpack.c.h.b16 %v102
  %v362 = vunpack.c.l.b16 %v103
  %v363 = vunpack.c.h.b16 %v103
  %v364 = vunpack.c.l.b16 %v104
  %v365 = vunpack.c.h.b16 %v104
  %v366 = vunpack.c.l.b16 %v105
  %v367 = vunpack.c.h.b16 %v105
  %v368 = vunpack.c.l.b16 %v106
  %v369 = vunpack.c.h.b16 %v106
  %v370 = vunpack.c.l.b16 %v107
  %v371 = vunpack.c.h.b16 %v107
  %v372 = vunpack.c.l.b16 %v108
  %v373 = vunpack.c.h.b16 %v108
  %v374 = vunpack.c.l.b16 %v109
  %v375 = vunpack.c.h.b16 %v109
  %v376 = vunpack.c.l.b16 %v110
  %v377 = vunpack.c.h.b16 %v110
  %v378 = vunpack.c.l.b16 %v111
  %v379 = vunpack.c.h.b16 %v111
  %v380 = vunpack.c.l.b16 %v112
  %v381 = vunpack.c.h.b16 %v112
  %v382 = vunpack.c.l.b16 %v113
  %v383 = vunpack.c.h.b16 %v113
  %v384 = vpack.c.b16 %v234, %v224
  %v385 = vpack.c.b16 %v235, %v225
  %v386 = vpack.c.b16 %v236, %v226
  %v387 = vpack.c.b16 %v237, %v227
  %v388 = vpack.c.b16 %v238, %v228
  %v389 = vpack.c.b16 %v239, %v229
  %v390 = vpack.c.b16 %v240, %v230
  %v391 = vpack.c.b16 %v241, %v231
  %v392 = vpack.c.b16 %v242, %v232
  %v393 = vpack.c.b16 %v243, %v233
  %v394 = vpack.c.b16 %v254, %v244
  %v395 = vpack.c.b16 %v255, %v245
  %v396 = vpack.c.b16 %v256, %v246
  %v397 = vpack.c.b16 %v257, %v247
  %v398 = vpack.c.b16 %v258, %v248
  %v399 = vpack.c.b16 %v259, %v249
  %v400 = vpack.c.b16 %v260, %v250
  %v401 = vpack.c.b16 %v261, %v251
  %v402 = vpack.c.b16 %v262, %v252
  %v403 = vpack.c.b16 %v263, %v253
  %v404 = vpack.c.b16 %v274, %v264
  %v405 = vpack.c.b16 %v275, %v265
  %v406 = vpack.c.b16 %v276, %v266
  %v407 = vpack.c.b16 %v277, %v267
  %v408 = vpack.c.b16 %v278, %v268
  %v409 = vpack.c.b16 %v279, %v269
  %v410 = vpack.c.b16 %v280, %v270
  %v411 = vpack.c.b16 %v281, %v271
  %v412 = vpack.c.b16 %v282, %v272
  %v413 = vpack.c.b16 %v283, %v273
  %v414 = vpack.c.b16 %v294, %v284
  %v415 = vpack.c.b16 %v295, %v285
  %v416 = vpack.c.b16 %v296, %v286
  %v417 = vpack.c.b16 %v297, %v287
  %v418 = vpack.c.b16 %v298, %v288
  %v419 = vpack.c.b16 %v299, %v289
  %v420 = vpack.c.b16 %v300, %v290
  %v421 = vpack.c.b16 %v301, %v291
  %v422 = vpack.c.b16 %v302, %v292
  %v423 = vpack.c.b16 %v303, %v293
  %v424 = vpack.c.b16 %v314, %v304
  %v425 = vpack.c.b16 %v315, %v305
  %v426 = vpack.c.b16 %v316, %v306
  %v427 = vpack.c.b16 %v317, %v307
  %v428 = vpack.c.b16 %v318, %v308
  %v429 = vpack.c.b16 %v319, %v309
  %v430 = vpack.c.b16 %v320, %v310
  %v431 = vpack.c.b16 %v321, %v311
  %v432 = vpack.c.b16 %v322, %v312
  %v433 = vpack.c.b16 %v323, %v313
  %v434 = vpack.c.b16 %v334, %v324
  %v435 = vpack.c.b16 %v335, %v325
  %v436 = vpack.c.b16 %v336, %v326
  %v437 = vpack.c.b16 %v337, %v327
  %v438 = vpack.c.b16 %v338, %v328
  %v439 = vpack.c.b16 %v339, %v329
  %v440 = vpack.c.b16 %v340, %v330
  %v441 = vpack.c.b16 %v341, %v331
  %v442 = vpack.c.b16 %v342, %v332
  %v443 = vpack.c.b16 %v343, %v333
  %v444 = vpack.c.b16 %v354, %v344
  %v445 = vpack.c.b16 %v355, %v345
  %v446 = vpack.c.b16 %v356, %v346
  %v447 = vpack.c.b16 %v357, %v347
  %v448 = vpack.c.b16 %v358, %v348
  %v449 = vpack.c.b16 %v359, %v349
  %v450 = vpack.c.b16 %v360, %v350
  %v451 = vpack.c.b16 %v361, %v351
  %v452 = vpack.c.b16 %v362, %v352
  %v453 = vpack.c.b16 %v363, %v353
  %v454 = vpack.c.b16 %v374, %v364
  %v455 = vpack.c.b16 %v375, %v365
  %v456 = vpack.c.b16 %v376, %v366
  %v457 = vpack.c.b16 %v377, %v367
  %v458 = vpack.c.b16 %v378, %v368
  %v459 = vpack.c.b16 %v379, %v369
  %v460 = vpack.c.b16 %v380, %v370
  %v461 = vpack.c.b16 %v381, %v371
  %v462 = vpack.c.b16 %v382, %v372
  %v463 = vpack.c.b16 %v383, %v373
  %544 = vmatpush.bf16.msra.mxu0 %v454
  %545 = vmatpush.bf16.msra.mxu0 %v444
  %546 = vmatpush.bf16.msra.mxu0 %v434
  %547 = vmatpush.bf16.msra.mxu0 %v424
  %548 = vmatpush.bf16.msra.mxu0 %v414
  %549 = vmatpush.bf16.msra.mxu0 %v404
  %550 = vmatpush.bf16.msra.mxu0 %v394
  %551 = vmatpush.bf16.msra.mxu0 %v384
  %552 = vmatmul.bf16.gmra.mxu0 %v142
  %v553 = vpop.f32.mrf.mxu0
  %v554 = vadd.f32 %v118, %v553
  %v555 = vpop.f32.mrf.mxu0
  %v556 = vadd.f32 %v118, %v555
  %557 = vdwg.mxu0
  %558 = vmatpush.bf16.msra.mxu0 %v455
  %559 = vmatpush.bf16.msra.mxu0 %v445
  %560 = vmatpush.bf16.msra.mxu0 %v435
  %561 = vmatpush.bf16.msra.mxu0 %v425
  %562 = vmatpush.bf16.msra.mxu0 %v415
  %563 = vmatpush.bf16.msra.mxu0 %v405
  %564 = vmatpush.bf16.msra.mxu0 %v395
  %565 = vmatpush.bf16.msra.mxu0 %v385
  %566 = vmatmul.bf16.gmra.mxu0 %v142
  %v567 = vpop.f32.mrf.mxu0
  %v568 = vadd.f32 %v119, %v567
  %v569 = vpop.f32.mrf.mxu0
  %v570 = vadd.f32 %v119, %v569
  %571 = vdwg.mxu0
  %572 = vmatpush.bf16.msra.mxu0 %v456
  %573 = vmatpush.bf16.msra.mxu0 %v446
  %574 = vmatpush.bf16.msra.mxu0 %v436
  %575 = vmatpush.bf16.msra.mxu0 %v426
  %576 = vmatpush.bf16.msra.mxu0 %v416
  %577 = vmatpush.bf16.msra.mxu0 %v406
  %578 = vmatpush.bf16.msra.mxu0 %v396
  %579 = vmatpush.bf16.msra.mxu0 %v386
  %580 = vmatmul.bf16.gmra.mxu0 %v142
  %v581 = vpop.f32.mrf.mxu0
  %v582 = vadd.f32 %v120, %v581
  %v583 = vpop.f32.mrf.mxu0
  %v584 = vadd.f32 %v120, %v583
  %585 = vdwg.mxu0
  %586 = vmatpush.bf16.msra.mxu0 %v457
  %587 = vmatpush.bf16.msra.mxu0 %v447
  %588 = vmatpush.bf16.msra.mxu0 %v437
  %589 = vmatpush.bf16.msra.mxu0 %v427
  %590 = vmatpush.bf16.msra.mxu0 %v417
  %591 = vmatpush.bf16.msra.mxu0 %v407
  %592 = vmatpush.bf16.msra.mxu0 %v397
  %593 = vmatpush.bf16.msra.mxu0 %v387
  %594 = vmatmul.bf16.gmra.mxu0 %v142
  %v595 = vpop.f32.mrf.mxu0
  %v596 = vadd.f32 %v121, %v595
  %v597 = vpop.f32.mrf.mxu0
  %v598 = vadd.f32 %v121, %v597
  %599 = vdwg.mxu0
  %600 = vmatpush.bf16.msra.mxu0 %v458
  %601 = vmatpush.bf16.msra.mxu0 %v448
  %602 = vmatpush.bf16.msra.mxu0 %v438
  %603 = vmatpush.bf16.msra.mxu0 %v428
  %604 = vmatpush.bf16.msra.mxu0 %v418
  %605 = vmatpush.bf16.msra.mxu0 %v408
  %606 = vmatpush.bf16.msra.mxu0 %v398
  %607 = vmatpush.bf16.msra.mxu0 %v388
  %608 = vmatmul.bf16.gmra.mxu0 %v142
  %v609 = vpop.f32.mrf.mxu0
  %v610 = vadd.f32 %v122, %v609
  %v611 = vpop.f32.mrf.mxu0
  %v612 = vadd.f32 %v122, %v611
  %613 = vdwg.mxu0
  %614 = vmatpush.bf16.msra.mxu0 %v459
  %615 = vmatpush.bf16.msra.mxu0 %v449
  %616 = vmatpush.bf16.msra.mxu0 %v439
  %617 = vmatpush.bf16.msra.mxu0 %v429
  %618 = vmatpush.bf16.msra.mxu0 %v419
  %619 = vmatpush.bf16.msra.mxu0 %v409
  %620 = vmatpush.bf16.msra.mxu0 %v399
  %621 = vmatpush.bf16.msra.mxu0 %v389
  %622 = vmatmul.bf16.gmra.mxu0 %v142
  %v623 = vpop.f32.mrf.mxu0
  %v624 = vadd.f32 %v123, %v623
  %v625 = vpop.f32.mrf.mxu0
  %v626 = vadd.f32 %v123, %v625
  %627 = vdwg.mxu0
  %628 = vmatpush.bf16.msra.mxu0 %v460
  %629 = vmatpush.bf16.msra.mxu0 %v450
  %630 = vmatpush.bf16.msra.mxu0 %v440
  %631 = vmatpush.bf16.msra.mxu0 %v430
  %632 = vmatpush.bf16.msra.mxu0 %v420
  %633 = vmatpush.bf16.msra.mxu0 %v410
  %634 = vmatpush.bf16.msra.mxu0 %v400
  %635 = vmatpush.bf16.msra.mxu0 %v390
  %636 = vmatmul.bf16.gmra.mxu0 %v142
  %v637 = vpop.f32.mrf.mxu0
  %v638 = vadd.f32 %v124, %v637
  %v639 = vpop.f32.mrf.mxu0
  %v640 = vadd.f32 %v124, %v639
  %641 = vdwg.mxu0
  %642 = vmatpush.bf16.msra.mxu0 %v461
  %643 = vmatpush.bf16.msra.mxu0 %v451
  %644 = vmatpush.bf16.msra.mxu0 %v441
  %645 = vmatpush.bf16.msra.mxu0 %v431
  %646 = vmatpush.bf16.msra.mxu0 %v421
  %647 = vmatpush.bf16.msra.mxu0 %v411
  %648 = vmatpush.bf16.msra.mxu0 %v401
  %649 = vmatpush.bf16.msra.mxu0 %v391
  %650 = vmatmul.bf16.gmra.mxu0 %v142
  %v651 = vpop.f32.mrf.mxu0
  %v652 = vadd.f32 %v125, %v651
  %v653 = vpop.f32.mrf.mxu0
  %v654 = vadd.f32 %v125, %v653
  %655 = vdwg.mxu0
  %656 = vmatpush.bf16.msra.mxu0 %v462
  %657 = vmatpush.bf16.msra.mxu0 %v452
  %658 = vmatpush.bf16.msra.mxu0 %v442
  %659 = vmatpush.bf16.msra.mxu0 %v432
  %660 = vmatpush.bf16.msra.mxu0 %v422
  %661 = vmatpush.bf16.msra.mxu0 %v412
  %662 = vmatpush.bf16.msra.mxu0 %v402
  %663 = vmatpush.bf16.msra.mxu0 %v392
  %664 = vmatmul.bf16.gmra.mxu0 %v142
  %v665 = vpop.f32.mrf.mxu0
  %v666 = vadd.f32 %v126, %v665
  %v667 = vpop.f32.mrf.mxu0
  %v668 = vadd.f32 %v126, %v667
  %669 = vdwg.mxu0
  %670 = vmatpush.bf16.msra.mxu0 %v463
  %671 = vmatpush.bf16.msra.mxu0 %v453
  %672 = vmatpush.bf16.msra.mxu0 %v443
  %673 = vmatpush.bf16.msra.mxu0 %v433
  %674 = vmatpush.bf16.msra.mxu0 %v423
  %675 = vmatpush.bf16.msra.mxu0 %v413
  %676 = vmatpush.bf16.msra.mxu0 %v403
  %677 = vmatpush.bf16.msra.mxu0 %v393
  %678 = vmatmul.bf16.gmra.mxu0 %v142
  %v679 = vpop.f32.mrf.mxu0
  %v680 = vadd.f32 %v127, %v679
  %v681 = vpop.f32.mrf.mxu0
  %v682 = vadd.f32 %v127, %v681
  %683 = vdwg.mxu0
  %v684 = vmul.f32 %v554, 0.5
  %v685 = vmul.f32 %v568, 0.5
  %v686 = vmul.f32 %v582, 0.5
  %v687 = vmul.f32 %v596, 0.5
  %v688 = vmul.f32 %v610, 0.5
  %v689 = vmul.f32 %v624, 0.5
  %v690 = vmul.f32 %v638, 0.5
  %v691 = vmul.f32 %v652, 0.5
  %v692 = vmul.f32 %v666, 0.5
  %v693 = vmul.f32 %v680, 0.5
  %v694 = vmul.f32 %v556, 0.5
  %v695 = vmul.f32 %v570, 0.5
  %v696 = vmul.f32 %v584, 0.5
  %v697 = vmul.f32 %v598, 0.5
  %v698 = vmul.f32 %v612, 0.5
  %v699 = vmul.f32 %v626, 0.5
  %v700 = vmul.f32 %v640, 0.5
  %v701 = vmul.f32 %v654, 0.5
  %v702 = vmul.f32 %v668, 0.5
  %v703 = vmul.f32 %v682, 0.5
  %v704 = vtanh.pop %v684
  %v705 = vtanh.pop %v685
  %v706 = vtanh.pop %v686
  %v707 = vtanh.pop %v687
  %v708 = vtanh.pop %v688
  %v709 = vtanh.pop %v689
  %v710 = vtanh.pop %v690
  %v711 = vtanh.pop %v691
  %v712 = vtanh.pop %v692
  %v713 = vtanh.pop %v693
  %v714 = vtanh.pop %v694
  %v715 = vtanh.pop %v695
  %v716 = vtanh.pop %v696
  %v717 = vtanh.pop %v697
  %v718 = vtanh.pop %v698
  %v719 = vtanh.pop %v699
  %v720 = vtanh.pop %v700
  %v721 = vtanh.pop %v701
  %v722 = vtanh.pop %v702
  %v723 = vtanh.pop %v703
  %v724 = vadd.f32 %v704, 1.0
  %v725 = vadd.f32 %v705, 1.0
  %v726 = vadd.f32 %v706, 1.0
  %v727 = vadd.f32 %v707, 1.0
  %v728 = vadd.f32 %v708, 1.0
  %v729 = vadd.f32 %v709, 1.0
  %v730 = vadd.f32 %v710, 1.0
  %v731 = vadd.f32 %v711, 1.0
  %v732 = vadd.f32 %v712, 1.0
  %v733 = vadd.f32 %v713, 1.0
  %v734 = vadd.f32 %v714, 1.0
  %v735 = vadd.f32 %v715, 1.0
  %v736 = vadd.f32 %v716, 1.0
  %v737 = vadd.f32 %v717, 1.0
  %v738 = vadd.f32 %v718, 1.0
  %v739 = vadd.f32 %v719, 1.0
  %v740 = vadd.f32 %v720, 1.0
  %v741 = vadd.f32 %v721, 1.0
  %v742 = vadd.f32 %v722, 1.0
  %v743 = vadd.f32 %v723, 1.0
  %v744 = vmul.f32 %v684, %v724
  %v745 = vmul.f32 %v685, %v725
  %v746 = vmul.f32 %v686, %v726
  %v747 = vmul.f32 %v687, %v727
  %v748 = vmul.f32 %v688, %v728
  %v749 = vmul.f32 %v689, %v729
  %v750 = vmul.f32 %v690, %v730
  %v751 = vmul.f32 %v691, %v731
  %v752 = vmul.f32 %v692, %v732
  %v753 = vmul.f32 %v693, %v733
  %v754 = vmul.f32 %v694, %v734
  %v755 = vmul.f32 %v695, %v735
  %v756 = vmul.f32 %v696, %v736
  %v757 = vmul.f32 %v697, %v737
  %v758 = vmul.f32 %v698, %v738
  %v759 = vmul.f32 %v699, %v739
  %v760 = vmul.f32 %v700, %v740
  %v761 = vmul.f32 %v701, %v741
  %v762 = vmul.f32 %v702, %v742
  %v763 = vmul.f32 %v703, %v743
  %v764 = vpack.c.bf16 %v754, %v744
  %v765 = vpack.c.bf16 %v755, %v745
  %v766 = vpack.c.bf16 %v756, %v746
  %v767 = vpack.c.bf16 %v757, %v747
  %v768 = vpack.c.bf16 %v758, %v748
  %v769 = vpack.c.bf16 %v759, %v749
  %v770 = vpack.c.bf16 %v760, %v750
  %v771 = vpack.c.bf16 %v761, %v751
  %v772 = vpack.c.bf16 %v762, %v752
  %v773 = vpack.c.bf16 %v763, %v753
  %v774 = vld [vmem:[%s3] sm:$0xff]
  %v775 = vld [vmem:[%s3 + $0x8] sm:$0xff]
  %v776 = vld [vmem:[%s3 + $0x10] sm:$0xff]
  %v777 = vld [vmem:[%s3 + $0x18] sm:$0xff]
  %v778 = vld [vmem:[%s3 + $0x20] sm:$0xff]
  %v779 = vld [vmem:[%s3 + $0x28] sm:$0xff]
  %v780 = vld [vmem:[%s3 + $0x30] sm:$0xff]
  %v781 = vld [vmem:[%s3 + $0x38] sm:$0xff]
  %v782 = vld [vmem:[%s3 + $0x40] sm:$0xff]
  %v783 = vld [vmem:[%s3 + $0x48] sm:$0xff]
  %v784 = vld [vmem:[%s3 + $0x50] sm:$0xff]
  %v785 = vld [vmem:[%s3 + $0x58] sm:$0xff]
  %v786 = vld [vmem:[%s3 + $0x60] sm:$0xff]
  %v787 = vld [vmem:[%s3 + $0x68] sm:$0xff]
  %v788 = vld [vmem:[%s3 + $0x70] sm:$0xff]
  %v789 = vld [vmem:[%s3 + $0x78] sm:$0xff]
  %v790 = vld [vmem:[%s3 + $0x80] sm:$0xff]
  %v791 = vld [vmem:[%s3 + $0x88] sm:$0xff]
  %v792 = vld [vmem:[%s3 + $0x90] sm:$0xff]
  %v793 = vld [vmem:[%s3 + $0x98] sm:$0xff]
  %v794 = vld [vmem:[%s3 + $0xa0] sm:$0xff]
  %v795 = vld [vmem:[%s3 + $0xa8] sm:$0xff]
  %v796 = vld [vmem:[%s3 + $0xb0] sm:$0xff]
  %v797 = vld [vmem:[%s3 + $0xb8] sm:$0xff]
  %v798 = vld [vmem:[%s3 + $0xc0] sm:$0xff]
  %v799 = vld [vmem:[%s3 + $0xc8] sm:$0xff]
  %v800 = vld [vmem:[%s3 + $0xd0] sm:$0xff]
  %v801 = vld [vmem:[%s3 + $0xd8] sm:$0xff]
  %v802 = vld [vmem:[%s3 + $0xe0] sm:$0xff]
  %v803 = vld [vmem:[%s3 + $0xe8] sm:$0xff]
  %v804 = vld [vmem:[%s3 + $0xf0] sm:$0xff]
  %v805 = vld [vmem:[%s3 + $0xf8] sm:$0xff]
  %v806 = vld [vmem:[%s3 + $0x100] sm:$0xff]
  %v807 = vld [vmem:[%s3 + $0x108] sm:$0xff]
  %v808 = vld [vmem:[%s3 + $0x110] sm:$0xff]
  %v809 = vld [vmem:[%s3 + $0x118] sm:$0xff]
  %v810 = vld [vmem:[%s3 + $0x120] sm:$0xff]
  %v811 = vld [vmem:[%s3 + $0x128] sm:$0xff]
  %v812 = vld [vmem:[%s3 + $0x130] sm:$0xff]
  %v813 = vld [vmem:[%s3 + $0x138] sm:$0xff]
  %v814 = vld [vmem:[%s3 + $0x140] sm:$0xff]
  %v815 = vld [vmem:[%s3 + $0x148] sm:$0xff]
  %v816 = vld [vmem:[%s3 + $0x150] sm:$0xff]
  %v817 = vld [vmem:[%s3 + $0x158] sm:$0xff]
  %v818 = vld [vmem:[%s3 + $0x160] sm:$0xff]
  %v819 = vld [vmem:[%s3 + $0x168] sm:$0xff]
  %v820 = vld [vmem:[%s3 + $0x170] sm:$0xff]
  %v821 = vld [vmem:[%s3 + $0x178] sm:$0xff]
  %v822 = vld [vmem:[%s3 + $0x180] sm:$0xff]
  %v823 = vld [vmem:[%s3 + $0x188] sm:$0xff]
  %v824 = vld [vmem:[%s3 + $0x190] sm:$0xff]
  %v825 = vld [vmem:[%s3 + $0x198] sm:$0xff]
  %v826 = vld [vmem:[%s3 + $0x1a0] sm:$0xff]
  %v827 = vld [vmem:[%s3 + $0x1a8] sm:$0xff]
  %v828 = vld [vmem:[%s3 + $0x1b0] sm:$0xff]
  %v829 = vld [vmem:[%s3 + $0x1b8] sm:$0xff]
  %v830 = vld [vmem:[%s3 + $0x1c0] sm:$0xff]
  %v831 = vld [vmem:[%s3 + $0x1c8] sm:$0xff]
  %v832 = vld [vmem:[%s3 + $0x1d0] sm:$0xff]
  %v833 = vld [vmem:[%s3 + $0x1d8] sm:$0xff]
  %v834 = vld [vmem:[%s3 + $0x1e0] sm:$0xff]
  %v835 = vld [vmem:[%s3 + $0x1e8] sm:$0xff]
  %v836 = vld [vmem:[%s3 + $0x1f0] sm:$0xff]
  %v837 = vld [vmem:[%s3 + $0x1f8] sm:$0xff]
  %v838 = vld [vmem:[%s3 + $0x200] sm:$0xff]
  %v839 = vld [vmem:[%s3 + $0x208] sm:$0xff]
  %v840 = vld [vmem:[%s3 + $0x210] sm:$0xff]
  %v841 = vld [vmem:[%s3 + $0x218] sm:$0xff]
  %v842 = vld [vmem:[%s3 + $0x220] sm:$0xff]
  %v843 = vld [vmem:[%s3 + $0x228] sm:$0xff]
  %v844 = vld [vmem:[%s3 + $0x230] sm:$0xff]
  %v845 = vld [vmem:[%s3 + $0x238] sm:$0xff]
  %v846 = vld [vmem:[%s3 + $0x240] sm:$0xff]
  %v847 = vld [vmem:[%s3 + $0x248] sm:$0xff]
  %v848 = vld [vmem:[%s3 + $0x250] sm:$0xff]
  %v849 = vld [vmem:[%s3 + $0x258] sm:$0xff]
  %v850 = vld [vmem:[%s3 + $0x260] sm:$0xff]
  %v851 = vld [vmem:[%s3 + $0x268] sm:$0xff]
  %v852 = vld [vmem:[%s3 + $0x270] sm:$0xff]
  %v853 = vld [vmem:[%s3 + $0x278] sm:$0xff]
  %v854 = vld [vmem:[%s3 + $0x280] sm:$0xff]
  %v855 = vld [vmem:[%s3 + $0x288] sm:$0xff]
  %v856 = vld [vmem:[%s3 + $0x290] sm:$0xff]
  %v857 = vld [vmem:[%s3 + $0x298] sm:$0xff]
  %v858 = vld [vmem:[%s3 + $0x2a0] sm:$0xff]
  %v859 = vld [vmem:[%s3 + $0x2a8] sm:$0xff]
  %v860 = vld [vmem:[%s3 + $0x2b0] sm:$0xff]
  %v861 = vld [vmem:[%s3 + $0x2b8] sm:$0xff]
  %v862 = vld [vmem:[%s3 + $0x2c0] sm:$0xff]
  %v863 = vld [vmem:[%s3 + $0x2c8] sm:$0xff]
  %v864 = vld [vmem:[%s3 + $0x2d0] sm:$0xff]
  %v865 = vld [vmem:[%s3 + $0x2d8] sm:$0xff]
  %v866 = vld [vmem:[%s3 + $0x2e0] sm:$0xff]
  %v867 = vld [vmem:[%s3 + $0x2e8] sm:$0xff]
  %v868 = vld [vmem:[%s3 + $0x2f0] sm:$0xff]
  %v869 = vld [vmem:[%s3 + $0x2f8] sm:$0xff]
  %v870 = vld [vmem:[%s3 + $0x300] sm:$0xff]
  %v871 = vld [vmem:[%s3 + $0x308] sm:$0xff]
  %v872 = vld [vmem:[%s3 + $0x310] sm:$0xff]
  %v873 = vld [vmem:[%s3 + $0x318] sm:$0xff]
  %v874 = vld [vmem:[%s3 + $0x320] sm:$0xff]
  %v875 = vld [vmem:[%s3 + $0x328] sm:$0xff]
  %v876 = vld [vmem:[%s3 + $0x330] sm:$0xff]
  %v877 = vld [vmem:[%s3 + $0x338] sm:$0xff]
  %v878 = vld [vmem:[%s3 + $0x340] sm:$0xff]
  %v879 = vld [vmem:[%s3 + $0x348] sm:$0xff]
  %v880 = vld [vmem:[%s3 + $0x350] sm:$0xff]
  %v881 = vld [vmem:[%s3 + $0x358] sm:$0xff]
  %v882 = vld [vmem:[%s3 + $0x360] sm:$0xff]
  %v883 = vld [vmem:[%s3 + $0x368] sm:$0xff]
  %v884 = vld [vmem:[%s3 + $0x370] sm:$0xff]
  %v885 = vld [vmem:[%s3 + $0x378] sm:$0xff]
  %v886 = vld [vmem:[%s3 + $0x380] sm:$0xff]
  %v887 = vld [vmem:[%s3 + $0x388] sm:$0xff]
  %v888 = vld [vmem:[%s3 + $0x390] sm:$0xff]
  %v889 = vld [vmem:[%s3 + $0x398] sm:$0xff]
  %v890 = vld [vmem:[%s3 + $0x3a0] sm:$0xff]
  %v891 = vld [vmem:[%s3 + $0x3a8] sm:$0xff]
  %v892 = vld [vmem:[%s3 + $0x3b0] sm:$0xff]
  %v893 = vld [vmem:[%s3 + $0x3b8] sm:$0xff]
  %v894 = vld [vmem:[%s3 + $0x3c0] sm:$0xff]
  %v895 = vld [vmem:[%s3 + $0x3c8] sm:$0xff]
  %v896 = vld [vmem:[%s3 + $0x3d0] sm:$0xff]
  %v897 = vld [vmem:[%s3 + $0x3d8] sm:$0xff]
  %v898 = vld [vmem:[%s3 + $0x3e0] sm:$0xff]
  %v899 = vld [vmem:[%s3 + $0x3e8] sm:$0xff]
  %v900 = vld [vmem:[%s3 + $0x3f0] sm:$0xff]
  %v901 = vld [vmem:[%s3 + $0x3f8] sm:$0xff]
  %v902 = vld [vmem:[%s3 + $0x400] sm:$0xff]
  %v903 = vld [vmem:[%s3 + $0x408] sm:$0xff]
  %v904 = vld [vmem:[%s3 + $0x410] sm:$0xff]
  %v905 = vld [vmem:[%s3 + $0x418] sm:$0xff]
  %v906 = vld [vmem:[%s3 + $0x420] sm:$0xff]
  %v907 = vld [vmem:[%s3 + $0x428] sm:$0xff]
  %v908 = vld [vmem:[%s3 + $0x430] sm:$0xff]
  %v909 = vld [vmem:[%s3 + $0x438] sm:$0xff]
  %v910 = vld [vmem:[%s3 + $0x440] sm:$0xff]
  %v911 = vld [vmem:[%s3 + $0x448] sm:$0xff]
  %v912 = vld [vmem:[%s3 + $0x450] sm:$0xff]
  %v913 = vld [vmem:[%s3 + $0x458] sm:$0xff]
  %v914 = vld [vmem:[%s3 + $0x460] sm:$0xff]
  %v915 = vld [vmem:[%s3 + $0x468] sm:$0xff]
  %v916 = vld [vmem:[%s3 + $0x470] sm:$0xff]
  %v917 = vld [vmem:[%s3 + $0x478] sm:$0xff]
  %v918 = vld [vmem:[%s3 + $0x480] sm:$0xff]
  %v919 = vld [vmem:[%s3 + $0x488] sm:$0xff]
  %v920 = vld [vmem:[%s3 + $0x490] sm:$0xff]
  %v921 = vld [vmem:[%s3 + $0x498] sm:$0xff]
  %v922 = vld [vmem:[%s3 + $0x4a0] sm:$0xff]
  %v923 = vld [vmem:[%s3 + $0x4a8] sm:$0xff]
  %v924 = vld [vmem:[%s3 + $0x4b0] sm:$0xff]
  %v925 = vld [vmem:[%s3 + $0x4b8] sm:$0xff]
  %v926 = vld [vmem:[%s3 + $0x4c0] sm:$0xff]
  %v927 = vld [vmem:[%s3 + $0x4c8] sm:$0xff]
  %v928 = vld [vmem:[%s3 + $0x4d0] sm:$0xff]
  %v929 = vld [vmem:[%s3 + $0x4d8] sm:$0xff]
  %v930 = vld [vmem:[%s3 + $0x4e0] sm:$0xff]
  %v931 = vld [vmem:[%s3 + $0x4e8] sm:$0xff]
  %v932 = vld [vmem:[%s3 + $0x4f0] sm:$0xff]
  %v933 = vld [vmem:[%s3 + $0x4f8] sm:$0xff]
  %v934 = vld [vmem:[%s3 + $0x500] sm:$0xff]
  %v935 = vld [vmem:[%s3 + $0x508] sm:$0xff]
  %v936 = vld [vmem:[%s3 + $0x510] sm:$0xff]
  %v937 = vld [vmem:[%s3 + $0x518] sm:$0xff]
  %v938 = vld [vmem:[%s3 + $0x520] sm:$0xff]
  %v939 = vld [vmem:[%s3 + $0x528] sm:$0xff]
  %v940 = vld [vmem:[%s3 + $0x530] sm:$0xff]
  %v941 = vld [vmem:[%s3 + $0x538] sm:$0xff]
  %v942 = vld [vmem:[%s3 + $0x540] sm:$0xff]
  %v943 = vld [vmem:[%s3 + $0x548] sm:$0xff]
  %v944 = vld [vmem:[%s3 + $0x550] sm:$0xff]
  %v945 = vld [vmem:[%s3 + $0x558] sm:$0xff]
  %v946 = vld [vmem:[%s3 + $0x560] sm:$0xff]
  %v947 = vld [vmem:[%s3 + $0x568] sm:$0xff]
  %v948 = vld [vmem:[%s3 + $0x570] sm:$0xff]
  %v949 = vld [vmem:[%s3 + $0x578] sm:$0xff]
  %v950 = vld [vmem:[%s3 + $0x580] sm:$0xff]
  %v951 = vld [vmem:[%s3 + $0x588] sm:$0xff]
  %v952 = vld [vmem:[%s3 + $0x590] sm:$0xff]
  %v953 = vld [vmem:[%s3 + $0x598] sm:$0xff]
  %v954 = vld [vmem:[%s3 + $0x5a0] sm:$0xff]
  %v955 = vld [vmem:[%s3 + $0x5a8] sm:$0xff]
  %v956 = vld [vmem:[%s3 + $0x5b0] sm:$0xff]
  %v957 = vld [vmem:[%s3 + $0x5b8] sm:$0xff]
  %v958 = vld [vmem:[%s3 + $0x5c0] sm:$0xff]
  %v959 = vld [vmem:[%s3 + $0x5c8] sm:$0xff]
  %v960 = vld [vmem:[%s3 + $0x5d0] sm:$0xff]
  %v961 = vld [vmem:[%s3 + $0x5d8] sm:$0xff]
  %v962 = vld [vmem:[%s3 + $0x5e0] sm:$0xff]
  %v963 = vld [vmem:[%s3 + $0x5e8] sm:$0xff]
  %v964 = vld [vmem:[%s3 + $0x5f0] sm:$0xff]
  %v965 = vld [vmem:[%s3 + $0x5f8] sm:$0xff]
  %v966 = vld [vmem:[%s3 + $0x600] sm:$0xff]
  %v967 = vld [vmem:[%s3 + $0x608] sm:$0xff]
  %v968 = vld [vmem:[%s3 + $0x610] sm:$0xff]
  %v969 = vld [vmem:[%s3 + $0x618] sm:$0xff]
  %v970 = vld [vmem:[%s3 + $0x620] sm:$0xff]
  %v971 = vld [vmem:[%s3 + $0x628] sm:$0xff]
  %v972 = vld [vmem:[%s3 + $0x630] sm:$0xff]
  %v973 = vld [vmem:[%s3 + $0x638] sm:$0xff]
  %v974 = vld [vmem:[%s3 + $0x640] sm:$0xff]
  %v975 = vld [vmem:[%s3 + $0x648] sm:$0xff]
  %v976 = vld [vmem:[%s3 + $0x650] sm:$0xff]
  %v977 = vld [vmem:[%s3 + $0x658] sm:$0xff]
  %v978 = vld [vmem:[%s3 + $0x660] sm:$0xff]
  %v979 = vld [vmem:[%s3 + $0x668] sm:$0xff]
  %v980 = vld [vmem:[%s3 + $0x670] sm:$0xff]
  %v981 = vld [vmem:[%s3 + $0x678] sm:$0xff]
  %v982 = vld [vmem:[%s3 + $0x680] sm:$0xff]
  %v983 = vld [vmem:[%s3 + $0x688] sm:$0xff]
  %v984 = vld [vmem:[%s3 + $0x690] sm:$0xff]
  %v985 = vld [vmem:[%s3 + $0x698] sm:$0xff]
  %v986 = vld [vmem:[%s3 + $0x6a0] sm:$0xff]
  %v987 = vld [vmem:[%s3 + $0x6a8] sm:$0xff]
  %v988 = vld [vmem:[%s3 + $0x6b0] sm:$0xff]
  %v989 = vld [vmem:[%s3 + $0x6b8] sm:$0xff]
  %v990 = vld [vmem:[%s3 + $0x6c0] sm:$0xff]
  %v991 = vld [vmem:[%s3 + $0x6c8] sm:$0xff]
  %v992 = vld [vmem:[%s3 + $0x6d0] sm:$0xff]
  %v993 = vld [vmem:[%s3 + $0x6d8] sm:$0xff]
  %v994 = vld [vmem:[%s3 + $0x6e0] sm:$0xff]
  %v995 = vld [vmem:[%s3 + $0x6e8] sm:$0xff]
  %v996 = vld [vmem:[%s3 + $0x6f0] sm:$0xff]
  %v997 = vld [vmem:[%s3 + $0x6f8] sm:$0xff]
  %v998 = vld [vmem:[%s3 + $0x700] sm:$0xff]
  %v999 = vld [vmem:[%s3 + $0x708] sm:$0xff]
  %v1000 = vld [vmem:[%s3 + $0x710] sm:$0xff]
  %v1001 = vld [vmem:[%s3 + $0x718] sm:$0xff]
  %v1002 = vld [vmem:[%s3 + $0x720] sm:$0xff]
  %v1003 = vld [vmem:[%s3 + $0x728] sm:$0xff]
  %v1004 = vld [vmem:[%s3 + $0x730] sm:$0xff]
  %v1005 = vld [vmem:[%s3 + $0x738] sm:$0xff]
  %v1006 = vld [vmem:[%s3 + $0x740] sm:$0xff]
  %v1007 = vld [vmem:[%s3 + $0x748] sm:$0xff]
  %v1008 = vld [vmem:[%s3 + $0x750] sm:$0xff]
  %v1009 = vld [vmem:[%s3 + $0x758] sm:$0xff]
  %v1010 = vld [vmem:[%s3 + $0x760] sm:$0xff]
  %v1011 = vld [vmem:[%s3 + $0x768] sm:$0xff]
  %v1012 = vld [vmem:[%s3 + $0x770] sm:$0xff]
  %v1013 = vld [vmem:[%s3 + $0x778] sm:$0xff]
  %v1014 = vld [vmem:[%s3 + $0x780] sm:$0xff]
  %v1015 = vld [vmem:[%s3 + $0x788] sm:$0xff]
  %v1016 = vld [vmem:[%s3 + $0x790] sm:$0xff]
  %v1017 = vld [vmem:[%s3 + $0x798] sm:$0xff]
  %v1018 = vld [vmem:[%s3 + $0x7a0] sm:$0xff]
  %v1019 = vld [vmem:[%s3 + $0x7a8] sm:$0xff]
  %v1020 = vld [vmem:[%s3 + $0x7b0] sm:$0xff]
  %v1021 = vld [vmem:[%s3 + $0x7b8] sm:$0xff]
  %v1022 = vld [vmem:[%s3 + $0x7c0] sm:$0xff]
  %v1023 = vld [vmem:[%s3 + $0x7c8] sm:$0xff]
  %v1024 = vld [vmem:[%s3 + $0x7d0] sm:$0xff]
  %v1025 = vld [vmem:[%s3 + $0x7d8] sm:$0xff]
  %v1026 = vld [vmem:[%s3 + $0x7e0] sm:$0xff]
  %v1027 = vld [vmem:[%s3 + $0x7e8] sm:$0xff]
  %v1028 = vld [vmem:[%s3 + $0x7f0] sm:$0xff]
  %v1029 = vld [vmem:[%s3 + $0x7f8] sm:$0xff]
  %v1030 = vld [vmem:[%s3 + $0x800] sm:$0xff]
  %v1031 = vld [vmem:[%s3 + $0x808] sm:$0xff]
  %v1032 = vld [vmem:[%s3 + $0x810] sm:$0xff]
  %v1033 = vld [vmem:[%s3 + $0x818] sm:$0xff]
  %v1034 = vld [vmem:[%s3 + $0x820] sm:$0xff]
  %v1035 = vld [vmem:[%s3 + $0x828] sm:$0xff]
  %v1036 = vld [vmem:[%s3 + $0x830] sm:$0xff]
  %v1037 = vld [vmem:[%s3 + $0x838] sm:$0xff]
  %v1038 = vld [vmem:[%s3 + $0x840] sm:$0xff]
  %v1039 = vld [vmem:[%s3 + $0x848] sm:$0xff]
  %v1040 = vld [vmem:[%s3 + $0x850] sm:$0xff]
  %v1041 = vld [vmem:[%s3 + $0x858] sm:$0xff]
  %v1042 = vld [vmem:[%s3 + $0x860] sm:$0xff]
  %v1043 = vld [vmem:[%s3 + $0x868] sm:$0xff]
  %v1044 = vld [vmem:[%s3 + $0x870] sm:$0xff]
  %v1045 = vld [vmem:[%s3 + $0x878] sm:$0xff]
  %v1046 = vld [vmem:[%s3 + $0x880] sm:$0xff]
  %v1047 = vld [vmem:[%s3 + $0x888] sm:$0xff]
  %v1048 = vld [vmem:[%s3 + $0x890] sm:$0xff]
  %v1049 = vld [vmem:[%s3 + $0x898] sm:$0xff]
  %v1050 = vld [vmem:[%s3 + $0x8a0] sm:$0xff]
  %v1051 = vld [vmem:[%s3 + $0x8a8] sm:$0xff]
  %v1052 = vld [vmem:[%s3 + $0x8b0] sm:$0xff]
  %v1053 = vld [vmem:[%s3 + $0x8b8] sm:$0xff]
  %v1054 = vld [vmem:[%s3 + $0x8c0] sm:$0xff]
  %v1055 = vld [vmem:[%s3 + $0x8c8] sm:$0xff]
  %v1056 = vld [vmem:[%s3 + $0x8d0] sm:$0xff]
  %v1057 = vld [vmem:[%s3 + $0x8d8] sm:$0xff]
  %v1058 = vld [vmem:[%s3 + $0x8e0] sm:$0xff]
  %v1059 = vld [vmem:[%s3 + $0x8e8] sm:$0xff]
  %v1060 = vld [vmem:[%s3 + $0x8f0] sm:$0xff]
  %v1061 = vld [vmem:[%s3 + $0x8f8] sm:$0xff]
  %v1062 = vld [vmem:[%s3 + $0x900] sm:$0xff]
  %v1063 = vld [vmem:[%s3 + $0x908] sm:$0xff]
  %v1064 = vld [vmem:[%s3 + $0x910] sm:$0xff]
  %v1065 = vld [vmem:[%s3 + $0x918] sm:$0xff]
  %v1066 = vld [vmem:[%s3 + $0x920] sm:$0xff]
  %v1067 = vld [vmem:[%s3 + $0x928] sm:$0xff]
  %v1068 = vld [vmem:[%s3 + $0x930] sm:$0xff]
  %v1069 = vld [vmem:[%s3 + $0x938] sm:$0xff]
  %v1070 = vld [vmem:[%s3 + $0x940] sm:$0xff]
  %v1071 = vld [vmem:[%s3 + $0x948] sm:$0xff]
  %v1072 = vld [vmem:[%s3 + $0x950] sm:$0xff]
  %v1073 = vld [vmem:[%s3 + $0x958] sm:$0xff]
  %v1074 = vld [vmem:[%s3 + $0x960] sm:$0xff]
  %v1075 = vld [vmem:[%s3 + $0x968] sm:$0xff]
  %v1076 = vld [vmem:[%s3 + $0x970] sm:$0xff]
  %v1077 = vld [vmem:[%s3 + $0x978] sm:$0xff]
  %v1078 = vld [vmem:[%s3 + $0x980] sm:$0xff]
  %v1079 = vld [vmem:[%s3 + $0x988] sm:$0xff]
  %v1080 = vld [vmem:[%s3 + $0x990] sm:$0xff]
  %v1081 = vld [vmem:[%s3 + $0x998] sm:$0xff]
  %v1082 = vld [vmem:[%s3 + $0x9a0] sm:$0xff]
  %v1083 = vld [vmem:[%s3 + $0x9a8] sm:$0xff]
  %v1084 = vld [vmem:[%s3 + $0x9b0] sm:$0xff]
  %v1085 = vld [vmem:[%s3 + $0x9b8] sm:$0xff]
  %v1086 = vld [vmem:[%s3 + $0x9c0] sm:$0xff]
  %v1087 = vld [vmem:[%s3 + $0x9c8] sm:$0xff]
  %v1088 = vld [vmem:[%s3 + $0x9d0] sm:$0xff]
  %v1089 = vld [vmem:[%s3 + $0x9d8] sm:$0xff]
  %v1090 = vld [vmem:[%s3 + $0x9e0] sm:$0xff]
  %v1091 = vld [vmem:[%s3 + $0x9e8] sm:$0xff]
  %v1092 = vld [vmem:[%s3 + $0x9f0] sm:$0xff]
  %v1093 = vld [vmem:[%s3 + $0x9f8] sm:$0xff]
  %v1094 = vld [vmem:[%s4] sm:$0xf]
  %v1096 = vperm.slane %v1094, 0
  %v1097 = vperm.slane %v1094, 1
  %v1098 = vperm.slane %v1094, 2
  %v1099 = vperm.slane %v1094, 3
  %v1424 = vunpack.c.l.b16 %v774
  %v1425 = vunpack.c.h.b16 %v774
  %v1426 = vunpack.c.l.b16 %v775
  %v1427 = vunpack.c.h.b16 %v775
  %v1428 = vunpack.c.l.b16 %v776
  %v1429 = vunpack.c.h.b16 %v776
  %v1430 = vunpack.c.l.b16 %v777
  %v1431 = vunpack.c.h.b16 %v777
  %v1432 = vunpack.c.l.b16 %v778
  %v1433 = vunpack.c.h.b16 %v778
  %v1434 = vunpack.c.l.b16 %v779
  %v1435 = vunpack.c.h.b16 %v779
  %v1436 = vunpack.c.l.b16 %v780
  %v1437 = vunpack.c.h.b16 %v780
  %v1438 = vunpack.c.l.b16 %v781
  %v1439 = vunpack.c.h.b16 %v781
  %v1440 = vunpack.c.l.b16 %v782
  %v1441 = vunpack.c.h.b16 %v782
  %v1442 = vunpack.c.l.b16 %v783
  %v1443 = vunpack.c.h.b16 %v783
  %v1444 = vunpack.c.l.b16 %v784
  %v1445 = vunpack.c.h.b16 %v784
  %v1446 = vunpack.c.l.b16 %v785
  %v1447 = vunpack.c.h.b16 %v785
  %v1448 = vunpack.c.l.b16 %v786
  %v1449 = vunpack.c.h.b16 %v786
  %v1450 = vunpack.c.l.b16 %v787
  %v1451 = vunpack.c.h.b16 %v787
  %v1452 = vunpack.c.l.b16 %v788
  %v1453 = vunpack.c.h.b16 %v788
  %v1454 = vunpack.c.l.b16 %v789
  %v1455 = vunpack.c.h.b16 %v789
  %v1456 = vunpack.c.l.b16 %v790
  %v1457 = vunpack.c.h.b16 %v790
  %v1458 = vunpack.c.l.b16 %v791
  %v1459 = vunpack.c.h.b16 %v791
  %v1460 = vunpack.c.l.b16 %v792
  %v1461 = vunpack.c.h.b16 %v792
  %v1462 = vunpack.c.l.b16 %v793
  %v1463 = vunpack.c.h.b16 %v793
  %v1464 = vunpack.c.l.b16 %v794
  %v1465 = vunpack.c.h.b16 %v794
  %v1466 = vunpack.c.l.b16 %v795
  %v1467 = vunpack.c.h.b16 %v795
  %v1468 = vunpack.c.l.b16 %v796
  %v1469 = vunpack.c.h.b16 %v796
  %v1470 = vunpack.c.l.b16 %v797
  %v1471 = vunpack.c.h.b16 %v797
  %v1472 = vunpack.c.l.b16 %v798
  %v1473 = vunpack.c.h.b16 %v798
  %v1474 = vunpack.c.l.b16 %v799
  %v1475 = vunpack.c.h.b16 %v799
  %v1476 = vunpack.c.l.b16 %v800
  %v1477 = vunpack.c.h.b16 %v800
  %v1478 = vunpack.c.l.b16 %v801
  %v1479 = vunpack.c.h.b16 %v801
  %v1480 = vunpack.c.l.b16 %v802
  %v1481 = vunpack.c.h.b16 %v802
  %v1482 = vunpack.c.l.b16 %v803
  %v1483 = vunpack.c.h.b16 %v803
  %v1484 = vunpack.c.l.b16 %v804
  %v1485 = vunpack.c.h.b16 %v804
  %v1486 = vunpack.c.l.b16 %v805
  %v1487 = vunpack.c.h.b16 %v805
  %v1488 = vunpack.c.l.b16 %v806
  %v1489 = vunpack.c.h.b16 %v806
  %v1490 = vunpack.c.l.b16 %v807
  %v1491 = vunpack.c.h.b16 %v807
  %v1492 = vunpack.c.l.b16 %v808
  %v1493 = vunpack.c.h.b16 %v808
  %v1494 = vunpack.c.l.b16 %v809
  %v1495 = vunpack.c.h.b16 %v809
  %v1496 = vunpack.c.l.b16 %v810
  %v1497 = vunpack.c.h.b16 %v810
  %v1498 = vunpack.c.l.b16 %v811
  %v1499 = vunpack.c.h.b16 %v811
  %v1500 = vunpack.c.l.b16 %v812
  %v1501 = vunpack.c.h.b16 %v812
  %v1502 = vunpack.c.l.b16 %v813
  %v1503 = vunpack.c.h.b16 %v813
  %v1504 = vunpack.c.l.b16 %v814
  %v1505 = vunpack.c.h.b16 %v814
  %v1506 = vunpack.c.l.b16 %v815
  %v1507 = vunpack.c.h.b16 %v815
  %v1508 = vunpack.c.l.b16 %v816
  %v1509 = vunpack.c.h.b16 %v816
  %v1510 = vunpack.c.l.b16 %v817
  %v1511 = vunpack.c.h.b16 %v817
  %v1512 = vunpack.c.l.b16 %v818
  %v1513 = vunpack.c.h.b16 %v818
  %v1514 = vunpack.c.l.b16 %v819
  %v1515 = vunpack.c.h.b16 %v819
  %v1516 = vunpack.c.l.b16 %v820
  %v1517 = vunpack.c.h.b16 %v820
  %v1518 = vunpack.c.l.b16 %v821
  %v1519 = vunpack.c.h.b16 %v821
  %v1520 = vunpack.c.l.b16 %v822
  %v1521 = vunpack.c.h.b16 %v822
  %v1522 = vunpack.c.l.b16 %v823
  %v1523 = vunpack.c.h.b16 %v823
  %v1524 = vunpack.c.l.b16 %v824
  %v1525 = vunpack.c.h.b16 %v824
  %v1526 = vunpack.c.l.b16 %v825
  %v1527 = vunpack.c.h.b16 %v825
  %v1528 = vunpack.c.l.b16 %v826
  %v1529 = vunpack.c.h.b16 %v826
  %v1530 = vunpack.c.l.b16 %v827
  %v1531 = vunpack.c.h.b16 %v827
  %v1532 = vunpack.c.l.b16 %v828
  %v1533 = vunpack.c.h.b16 %v828
  %v1534 = vunpack.c.l.b16 %v829
  %v1535 = vunpack.c.h.b16 %v829
  %v1536 = vunpack.c.l.b16 %v830
  %v1537 = vunpack.c.h.b16 %v830
  %v1538 = vunpack.c.l.b16 %v831
  %v1539 = vunpack.c.h.b16 %v831
  %v1540 = vunpack.c.l.b16 %v832
  %v1541 = vunpack.c.h.b16 %v832
  %v1542 = vunpack.c.l.b16 %v833
  %v1543 = vunpack.c.h.b16 %v833
  %v1544 = vunpack.c.l.b16 %v834
  %v1545 = vunpack.c.h.b16 %v834
  %v1546 = vunpack.c.l.b16 %v835
  %v1547 = vunpack.c.h.b16 %v835
  %v1548 = vunpack.c.l.b16 %v836
  %v1549 = vunpack.c.h.b16 %v836
  %v1550 = vunpack.c.l.b16 %v837
  %v1551 = vunpack.c.h.b16 %v837
  %v1552 = vunpack.c.l.b16 %v838
  %v1553 = vunpack.c.h.b16 %v838
  %v1554 = vunpack.c.l.b16 %v839
  %v1555 = vunpack.c.h.b16 %v839
  %v1556 = vunpack.c.l.b16 %v840
  %v1557 = vunpack.c.h.b16 %v840
  %v1558 = vunpack.c.l.b16 %v841
  %v1559 = vunpack.c.h.b16 %v841
  %v1560 = vunpack.c.l.b16 %v842
  %v1561 = vunpack.c.h.b16 %v842
  %v1562 = vunpack.c.l.b16 %v843
  %v1563 = vunpack.c.h.b16 %v843
  %v1564 = vunpack.c.l.b16 %v844
  %v1565 = vunpack.c.h.b16 %v844
  %v1566 = vunpack.c.l.b16 %v845
  %v1567 = vunpack.c.h.b16 %v845
  %v1568 = vunpack.c.l.b16 %v846
  %v1569 = vunpack.c.h.b16 %v846
  %v1570 = vunpack.c.l.b16 %v847
  %v1571 = vunpack.c.h.b16 %v847
  %v1572 = vunpack.c.l.b16 %v848
  %v1573 = vunpack.c.h.b16 %v848
  %v1574 = vunpack.c.l.b16 %v849
  %v1575 = vunpack.c.h.b16 %v849
  %v1576 = vunpack.c.l.b16 %v850
  %v1577 = vunpack.c.h.b16 %v850
  %v1578 = vunpack.c.l.b16 %v851
  %v1579 = vunpack.c.h.b16 %v851
  %v1580 = vunpack.c.l.b16 %v852
  %v1581 = vunpack.c.h.b16 %v852
  %v1582 = vunpack.c.l.b16 %v853
  %v1583 = vunpack.c.h.b16 %v853
  %v1584 = vunpack.c.l.b16 %v854
  %v1585 = vunpack.c.h.b16 %v854
  %v1586 = vunpack.c.l.b16 %v855
  %v1587 = vunpack.c.h.b16 %v855
  %v1588 = vunpack.c.l.b16 %v856
  %v1589 = vunpack.c.h.b16 %v856
  %v1590 = vunpack.c.l.b16 %v857
  %v1591 = vunpack.c.h.b16 %v857
  %v1592 = vunpack.c.l.b16 %v858
  %v1593 = vunpack.c.h.b16 %v858
  %v1594 = vunpack.c.l.b16 %v859
  %v1595 = vunpack.c.h.b16 %v859
  %v1596 = vunpack.c.l.b16 %v860
  %v1597 = vunpack.c.h.b16 %v860
  %v1598 = vunpack.c.l.b16 %v861
  %v1599 = vunpack.c.h.b16 %v861
  %v1600 = vunpack.c.l.b16 %v862
  %v1601 = vunpack.c.h.b16 %v862
  %v1602 = vunpack.c.l.b16 %v863
  %v1603 = vunpack.c.h.b16 %v863
  %v1604 = vunpack.c.l.b16 %v864
  %v1605 = vunpack.c.h.b16 %v864
  %v1606 = vunpack.c.l.b16 %v865
  %v1607 = vunpack.c.h.b16 %v865
  %v1608 = vunpack.c.l.b16 %v866
  %v1609 = vunpack.c.h.b16 %v866
  %v1610 = vunpack.c.l.b16 %v867
  %v1611 = vunpack.c.h.b16 %v867
  %v1612 = vunpack.c.l.b16 %v868
  %v1613 = vunpack.c.h.b16 %v868
  %v1614 = vunpack.c.l.b16 %v869
  %v1615 = vunpack.c.h.b16 %v869
  %v1616 = vunpack.c.l.b16 %v870
  %v1617 = vunpack.c.h.b16 %v870
  %v1618 = vunpack.c.l.b16 %v871
  %v1619 = vunpack.c.h.b16 %v871
  %v1620 = vunpack.c.l.b16 %v872
  %v1621 = vunpack.c.h.b16 %v872
  %v1622 = vunpack.c.l.b16 %v873
  %v1623 = vunpack.c.h.b16 %v873
  %v1624 = vunpack.c.l.b16 %v874
  %v1625 = vunpack.c.h.b16 %v874
  %v1626 = vunpack.c.l.b16 %v875
  %v1627 = vunpack.c.h.b16 %v875
  %v1628 = vunpack.c.l.b16 %v876
  %v1629 = vunpack.c.h.b16 %v876
  %v1630 = vunpack.c.l.b16 %v877
  %v1631 = vunpack.c.h.b16 %v877
  %v1632 = vunpack.c.l.b16 %v878
  %v1633 = vunpack.c.h.b16 %v878
  %v1634 = vunpack.c.l.b16 %v879
  %v1635 = vunpack.c.h.b16 %v879
  %v1636 = vunpack.c.l.b16 %v880
  %v1637 = vunpack.c.h.b16 %v880
  %v1638 = vunpack.c.l.b16 %v881
  %v1639 = vunpack.c.h.b16 %v881
  %v1640 = vunpack.c.l.b16 %v882
  %v1641 = vunpack.c.h.b16 %v882
  %v1642 = vunpack.c.l.b16 %v883
  %v1643 = vunpack.c.h.b16 %v883
  %v1644 = vunpack.c.l.b16 %v884
  %v1645 = vunpack.c.h.b16 %v884
  %v1646 = vunpack.c.l.b16 %v885
  %v1647 = vunpack.c.h.b16 %v885
  %v1648 = vunpack.c.l.b16 %v886
  %v1649 = vunpack.c.h.b16 %v886
  %v1650 = vunpack.c.l.b16 %v887
  %v1651 = vunpack.c.h.b16 %v887
  %v1652 = vunpack.c.l.b16 %v888
  %v1653 = vunpack.c.h.b16 %v888
  %v1654 = vunpack.c.l.b16 %v889
  %v1655 = vunpack.c.h.b16 %v889
  %v1656 = vunpack.c.l.b16 %v890
  %v1657 = vunpack.c.h.b16 %v890
  %v1658 = vunpack.c.l.b16 %v891
  %v1659 = vunpack.c.h.b16 %v891
  %v1660 = vunpack.c.l.b16 %v892
  %v1661 = vunpack.c.h.b16 %v892
  %v1662 = vunpack.c.l.b16 %v893
  %v1663 = vunpack.c.h.b16 %v893
  %v1664 = vunpack.c.l.b16 %v894
  %v1665 = vunpack.c.h.b16 %v894
  %v1666 = vunpack.c.l.b16 %v895
  %v1667 = vunpack.c.h.b16 %v895
  %v1668 = vunpack.c.l.b16 %v896
  %v1669 = vunpack.c.h.b16 %v896
  %v1670 = vunpack.c.l.b16 %v897
  %v1671 = vunpack.c.h.b16 %v897
  %v1672 = vunpack.c.l.b16 %v898
  %v1673 = vunpack.c.h.b16 %v898
  %v1674 = vunpack.c.l.b16 %v899
  %v1675 = vunpack.c.h.b16 %v899
  %v1676 = vunpack.c.l.b16 %v900
  %v1677 = vunpack.c.h.b16 %v900
  %v1678 = vunpack.c.l.b16 %v901
  %v1679 = vunpack.c.h.b16 %v901
  %v1680 = vunpack.c.l.b16 %v902
  %v1681 = vunpack.c.h.b16 %v902
  %v1682 = vunpack.c.l.b16 %v903
  %v1683 = vunpack.c.h.b16 %v903
  %v1684 = vunpack.c.l.b16 %v904
  %v1685 = vunpack.c.h.b16 %v904
  %v1686 = vunpack.c.l.b16 %v905
  %v1687 = vunpack.c.h.b16 %v905
  %v1688 = vunpack.c.l.b16 %v906
  %v1689 = vunpack.c.h.b16 %v906
  %v1690 = vunpack.c.l.b16 %v907
  %v1691 = vunpack.c.h.b16 %v907
  %v1692 = vunpack.c.l.b16 %v908
  %v1693 = vunpack.c.h.b16 %v908
  %v1694 = vunpack.c.l.b16 %v909
  %v1695 = vunpack.c.h.b16 %v909
  %v1696 = vunpack.c.l.b16 %v910
  %v1697 = vunpack.c.h.b16 %v910
  %v1698 = vunpack.c.l.b16 %v911
  %v1699 = vunpack.c.h.b16 %v911
  %v1700 = vunpack.c.l.b16 %v912
  %v1701 = vunpack.c.h.b16 %v912
  %v1702 = vunpack.c.l.b16 %v913
  %v1703 = vunpack.c.h.b16 %v913
  %v1704 = vunpack.c.l.b16 %v914
  %v1705 = vunpack.c.h.b16 %v914
  %v1706 = vunpack.c.l.b16 %v915
  %v1707 = vunpack.c.h.b16 %v915
  %v1708 = vunpack.c.l.b16 %v916
  %v1709 = vunpack.c.h.b16 %v916
  %v1710 = vunpack.c.l.b16 %v917
  %v1711 = vunpack.c.h.b16 %v917
  %v1712 = vunpack.c.l.b16 %v918
  %v1713 = vunpack.c.h.b16 %v918
  %v1714 = vunpack.c.l.b16 %v919
  %v1715 = vunpack.c.h.b16 %v919
  %v1716 = vunpack.c.l.b16 %v920
  %v1717 = vunpack.c.h.b16 %v920
  %v1718 = vunpack.c.l.b16 %v921
  %v1719 = vunpack.c.h.b16 %v921
  %v1720 = vunpack.c.l.b16 %v922
  %v1721 = vunpack.c.h.b16 %v922
  %v1722 = vunpack.c.l.b16 %v923
  %v1723 = vunpack.c.h.b16 %v923
  %v1724 = vunpack.c.l.b16 %v924
  %v1725 = vunpack.c.h.b16 %v924
  %v1726 = vunpack.c.l.b16 %v925
  %v1727 = vunpack.c.h.b16 %v925
  %v1728 = vunpack.c.l.b16 %v926
  %v1729 = vunpack.c.h.b16 %v926
  %v1730 = vunpack.c.l.b16 %v927
  %v1731 = vunpack.c.h.b16 %v927
  %v1732 = vunpack.c.l.b16 %v928
  %v1733 = vunpack.c.h.b16 %v928
  %v1734 = vunpack.c.l.b16 %v929
  %v1735 = vunpack.c.h.b16 %v929
  %v1736 = vunpack.c.l.b16 %v930
  %v1737 = vunpack.c.h.b16 %v930
  %v1738 = vunpack.c.l.b16 %v931
  %v1739 = vunpack.c.h.b16 %v931
  %v1740 = vunpack.c.l.b16 %v932
  %v1741 = vunpack.c.h.b16 %v932
  %v1742 = vunpack.c.l.b16 %v933
  %v1743 = vunpack.c.h.b16 %v933
  %v1744 = vunpack.c.l.b16 %v934
  %v1745 = vunpack.c.h.b16 %v934
  %v1746 = vunpack.c.l.b16 %v935
  %v1747 = vunpack.c.h.b16 %v935
  %v1748 = vunpack.c.l.b16 %v936
  %v1749 = vunpack.c.h.b16 %v936
  %v1750 = vunpack.c.l.b16 %v937
  %v1751 = vunpack.c.h.b16 %v937
  %v1752 = vunpack.c.l.b16 %v938
  %v1753 = vunpack.c.h.b16 %v938
  %v1754 = vunpack.c.l.b16 %v939
  %v1755 = vunpack.c.h.b16 %v939
  %v1756 = vunpack.c.l.b16 %v940
  %v1757 = vunpack.c.h.b16 %v940
  %v1758 = vunpack.c.l.b16 %v941
  %v1759 = vunpack.c.h.b16 %v941
  %v1760 = vunpack.c.l.b16 %v942
  %v1761 = vunpack.c.h.b16 %v942
  %v1762 = vunpack.c.l.b16 %v943
  %v1763 = vunpack.c.h.b16 %v943
  %v1764 = vunpack.c.l.b16 %v944
  %v1765 = vunpack.c.h.b16 %v944
  %v1766 = vunpack.c.l.b16 %v945
  %v1767 = vunpack.c.h.b16 %v945
  %v1768 = vunpack.c.l.b16 %v946
  %v1769 = vunpack.c.h.b16 %v946
  %v1770 = vunpack.c.l.b16 %v947
  %v1771 = vunpack.c.h.b16 %v947
  %v1772 = vunpack.c.l.b16 %v948
  %v1773 = vunpack.c.h.b16 %v948
  %v1774 = vunpack.c.l.b16 %v949
  %v1775 = vunpack.c.h.b16 %v949
  %v1776 = vunpack.c.l.b16 %v950
  %v1777 = vunpack.c.h.b16 %v950
  %v1778 = vunpack.c.l.b16 %v951
  %v1779 = vunpack.c.h.b16 %v951
  %v1780 = vunpack.c.l.b16 %v952
  %v1781 = vunpack.c.h.b16 %v952
  %v1782 = vunpack.c.l.b16 %v953
  %v1783 = vunpack.c.h.b16 %v953
  %v1784 = vunpack.c.l.b16 %v954
  %v1785 = vunpack.c.h.b16 %v954
  %v1786 = vunpack.c.l.b16 %v955
  %v1787 = vunpack.c.h.b16 %v955
  %v1788 = vunpack.c.l.b16 %v956
  %v1789 = vunpack.c.h.b16 %v956
  %v1790 = vunpack.c.l.b16 %v957
  %v1791 = vunpack.c.h.b16 %v957
  %v1792 = vunpack.c.l.b16 %v958
  %v1793 = vunpack.c.h.b16 %v958
  %v1794 = vunpack.c.l.b16 %v959
  %v1795 = vunpack.c.h.b16 %v959
  %v1796 = vunpack.c.l.b16 %v960
  %v1797 = vunpack.c.h.b16 %v960
  %v1798 = vunpack.c.l.b16 %v961
  %v1799 = vunpack.c.h.b16 %v961
  %v1800 = vunpack.c.l.b16 %v962
  %v1801 = vunpack.c.h.b16 %v962
  %v1802 = vunpack.c.l.b16 %v963
  %v1803 = vunpack.c.h.b16 %v963
  %v1804 = vunpack.c.l.b16 %v964
  %v1805 = vunpack.c.h.b16 %v964
  %v1806 = vunpack.c.l.b16 %v965
  %v1807 = vunpack.c.h.b16 %v965
  %v1808 = vunpack.c.l.b16 %v966
  %v1809 = vunpack.c.h.b16 %v966
  %v1810 = vunpack.c.l.b16 %v967
  %v1811 = vunpack.c.h.b16 %v967
  %v1812 = vunpack.c.l.b16 %v968
  %v1813 = vunpack.c.h.b16 %v968
  %v1814 = vunpack.c.l.b16 %v969
  %v1815 = vunpack.c.h.b16 %v969
  %v1816 = vunpack.c.l.b16 %v970
  %v1817 = vunpack.c.h.b16 %v970
  %v1818 = vunpack.c.l.b16 %v971
  %v1819 = vunpack.c.h.b16 %v971
  %v1820 = vunpack.c.l.b16 %v972
  %v1821 = vunpack.c.h.b16 %v972
  %v1822 = vunpack.c.l.b16 %v973
  %v1823 = vunpack.c.h.b16 %v973
  %v1824 = vunpack.c.l.b16 %v974
  %v1825 = vunpack.c.h.b16 %v974
  %v1826 = vunpack.c.l.b16 %v975
  %v1827 = vunpack.c.h.b16 %v975
  %v1828 = vunpack.c.l.b16 %v976
  %v1829 = vunpack.c.h.b16 %v976
  %v1830 = vunpack.c.l.b16 %v977
  %v1831 = vunpack.c.h.b16 %v977
  %v1832 = vunpack.c.l.b16 %v978
  %v1833 = vunpack.c.h.b16 %v978
  %v1834 = vunpack.c.l.b16 %v979
  %v1835 = vunpack.c.h.b16 %v979
  %v1836 = vunpack.c.l.b16 %v980
  %v1837 = vunpack.c.h.b16 %v980
  %v1838 = vunpack.c.l.b16 %v981
  %v1839 = vunpack.c.h.b16 %v981
  %v1840 = vunpack.c.l.b16 %v982
  %v1841 = vunpack.c.h.b16 %v982
  %v1842 = vunpack.c.l.b16 %v983
  %v1843 = vunpack.c.h.b16 %v983
  %v1844 = vunpack.c.l.b16 %v984
  %v1845 = vunpack.c.h.b16 %v984
  %v1846 = vunpack.c.l.b16 %v985
  %v1847 = vunpack.c.h.b16 %v985
  %v1848 = vunpack.c.l.b16 %v986
  %v1849 = vunpack.c.h.b16 %v986
  %v1850 = vunpack.c.l.b16 %v987
  %v1851 = vunpack.c.h.b16 %v987
  %v1852 = vunpack.c.l.b16 %v988
  %v1853 = vunpack.c.h.b16 %v988
  %v1854 = vunpack.c.l.b16 %v989
  %v1855 = vunpack.c.h.b16 %v989
  %v1856 = vunpack.c.l.b16 %v990
  %v1857 = vunpack.c.h.b16 %v990
  %v1858 = vunpack.c.l.b16 %v991
  %v1859 = vunpack.c.h.b16 %v991
  %v1860 = vunpack.c.l.b16 %v992
  %v1861 = vunpack.c.h.b16 %v992
  %v1862 = vunpack.c.l.b16 %v993
  %v1863 = vunpack.c.h.b16 %v993
  %v1864 = vunpack.c.l.b16 %v994
  %v1865 = vunpack.c.h.b16 %v994
  %v1866 = vunpack.c.l.b16 %v995
  %v1867 = vunpack.c.h.b16 %v995
  %v1868 = vunpack.c.l.b16 %v996
  %v1869 = vunpack.c.h.b16 %v996
  %v1870 = vunpack.c.l.b16 %v997
  %v1871 = vunpack.c.h.b16 %v997
  %v1872 = vunpack.c.l.b16 %v998
  %v1873 = vunpack.c.h.b16 %v998
  %v1874 = vunpack.c.l.b16 %v999
  %v1875 = vunpack.c.h.b16 %v999
  %v1876 = vunpack.c.l.b16 %v1000
  %v1877 = vunpack.c.h.b16 %v1000
  %v1878 = vunpack.c.l.b16 %v1001
  %v1879 = vunpack.c.h.b16 %v1001
  %v1880 = vunpack.c.l.b16 %v1002
  %v1881 = vunpack.c.h.b16 %v1002
  %v1882 = vunpack.c.l.b16 %v1003
  %v1883 = vunpack.c.h.b16 %v1003
  %v1884 = vunpack.c.l.b16 %v1004
  %v1885 = vunpack.c.h.b16 %v1004
  %v1886 = vunpack.c.l.b16 %v1005
  %v1887 = vunpack.c.h.b16 %v1005
  %v1888 = vunpack.c.l.b16 %v1006
  %v1889 = vunpack.c.h.b16 %v1006
  %v1890 = vunpack.c.l.b16 %v1007
  %v1891 = vunpack.c.h.b16 %v1007
  %v1892 = vunpack.c.l.b16 %v1008
  %v1893 = vunpack.c.h.b16 %v1008
  %v1894 = vunpack.c.l.b16 %v1009
  %v1895 = vunpack.c.h.b16 %v1009
  %v1896 = vunpack.c.l.b16 %v1010
  %v1897 = vunpack.c.h.b16 %v1010
  %v1898 = vunpack.c.l.b16 %v1011
  %v1899 = vunpack.c.h.b16 %v1011
  %v1900 = vunpack.c.l.b16 %v1012
  %v1901 = vunpack.c.h.b16 %v1012
  %v1902 = vunpack.c.l.b16 %v1013
  %v1903 = vunpack.c.h.b16 %v1013
  %v1904 = vunpack.c.l.b16 %v1014
  %v1905 = vunpack.c.h.b16 %v1014
  %v1906 = vunpack.c.l.b16 %v1015
  %v1907 = vunpack.c.h.b16 %v1015
  %v1908 = vunpack.c.l.b16 %v1016
  %v1909 = vunpack.c.h.b16 %v1016
  %v1910 = vunpack.c.l.b16 %v1017
  %v1911 = vunpack.c.h.b16 %v1017
  %v1912 = vunpack.c.l.b16 %v1018
  %v1913 = vunpack.c.h.b16 %v1018
  %v1914 = vunpack.c.l.b16 %v1019
  %v1915 = vunpack.c.h.b16 %v1019
  %v1916 = vunpack.c.l.b16 %v1020
  %v1917 = vunpack.c.h.b16 %v1020
  %v1918 = vunpack.c.l.b16 %v1021
  %v1919 = vunpack.c.h.b16 %v1021
  %v1920 = vunpack.c.l.b16 %v1022
  %v1921 = vunpack.c.h.b16 %v1022
  %v1922 = vunpack.c.l.b16 %v1023
  %v1923 = vunpack.c.h.b16 %v1023
  %v1924 = vunpack.c.l.b16 %v1024
  %v1925 = vunpack.c.h.b16 %v1024
  %v1926 = vunpack.c.l.b16 %v1025
  %v1927 = vunpack.c.h.b16 %v1025
  %v1928 = vunpack.c.l.b16 %v1026
  %v1929 = vunpack.c.h.b16 %v1026
  %v1930 = vunpack.c.l.b16 %v1027
  %v1931 = vunpack.c.h.b16 %v1027
  %v1932 = vunpack.c.l.b16 %v1028
  %v1933 = vunpack.c.h.b16 %v1028
  %v1934 = vunpack.c.l.b16 %v1029
  %v1935 = vunpack.c.h.b16 %v1029
  %v1936 = vunpack.c.l.b16 %v1030
  %v1937 = vunpack.c.h.b16 %v1030
  %v1938 = vunpack.c.l.b16 %v1031
  %v1939 = vunpack.c.h.b16 %v1031
  %v1940 = vunpack.c.l.b16 %v1032
  %v1941 = vunpack.c.h.b16 %v1032
  %v1942 = vunpack.c.l.b16 %v1033
  %v1943 = vunpack.c.h.b16 %v1033
  %v1944 = vunpack.c.l.b16 %v1034
  %v1945 = vunpack.c.h.b16 %v1034
  %v1946 = vunpack.c.l.b16 %v1035
  %v1947 = vunpack.c.h.b16 %v1035
  %v1948 = vunpack.c.l.b16 %v1036
  %v1949 = vunpack.c.h.b16 %v1036
  %v1950 = vunpack.c.l.b16 %v1037
  %v1951 = vunpack.c.h.b16 %v1037
  %v1952 = vunpack.c.l.b16 %v1038
  %v1953 = vunpack.c.h.b16 %v1038
  %v1954 = vunpack.c.l.b16 %v1039
  %v1955 = vunpack.c.h.b16 %v1039
  %v1956 = vunpack.c.l.b16 %v1040
  %v1957 = vunpack.c.h.b16 %v1040
  %v1958 = vunpack.c.l.b16 %v1041
  %v1959 = vunpack.c.h.b16 %v1041
  %v1960 = vunpack.c.l.b16 %v1042
  %v1961 = vunpack.c.h.b16 %v1042
  %v1962 = vunpack.c.l.b16 %v1043
  %v1963 = vunpack.c.h.b16 %v1043
  %v1964 = vunpack.c.l.b16 %v1044
  %v1965 = vunpack.c.h.b16 %v1044
  %v1966 = vunpack.c.l.b16 %v1045
  %v1967 = vunpack.c.h.b16 %v1045
  %v1968 = vunpack.c.l.b16 %v1046
  %v1969 = vunpack.c.h.b16 %v1046
  %v1970 = vunpack.c.l.b16 %v1047
  %v1971 = vunpack.c.h.b16 %v1047
  %v1972 = vunpack.c.l.b16 %v1048
  %v1973 = vunpack.c.h.b16 %v1048
  %v1974 = vunpack.c.l.b16 %v1049
  %v1975 = vunpack.c.h.b16 %v1049
  %v1976 = vunpack.c.l.b16 %v1050
  %v1977 = vunpack.c.h.b16 %v1050
  %v1978 = vunpack.c.l.b16 %v1051
  %v1979 = vunpack.c.h.b16 %v1051
  %v1980 = vunpack.c.l.b16 %v1052
  %v1981 = vunpack.c.h.b16 %v1052
  %v1982 = vunpack.c.l.b16 %v1053
  %v1983 = vunpack.c.h.b16 %v1053
  %v1984 = vunpack.c.l.b16 %v1054
  %v1985 = vunpack.c.h.b16 %v1054
  %v1986 = vunpack.c.l.b16 %v1055
  %v1987 = vunpack.c.h.b16 %v1055
  %v1988 = vunpack.c.l.b16 %v1056
  %v1989 = vunpack.c.h.b16 %v1056
  %v1990 = vunpack.c.l.b16 %v1057
  %v1991 = vunpack.c.h.b16 %v1057
  %v1992 = vunpack.c.l.b16 %v1058
  %v1993 = vunpack.c.h.b16 %v1058
  %v1994 = vunpack.c.l.b16 %v1059
  %v1995 = vunpack.c.h.b16 %v1059
  %v1996 = vunpack.c.l.b16 %v1060
  %v1997 = vunpack.c.h.b16 %v1060
  %v1998 = vunpack.c.l.b16 %v1061
  %v1999 = vunpack.c.h.b16 %v1061
  %v2000 = vunpack.c.l.b16 %v1062
  %v2001 = vunpack.c.h.b16 %v1062
  %v2002 = vunpack.c.l.b16 %v1063
  %v2003 = vunpack.c.h.b16 %v1063
  %v2004 = vunpack.c.l.b16 %v1064
  %v2005 = vunpack.c.h.b16 %v1064
  %v2006 = vunpack.c.l.b16 %v1065
  %v2007 = vunpack.c.h.b16 %v1065
  %v2008 = vunpack.c.l.b16 %v1066
  %v2009 = vunpack.c.h.b16 %v1066
  %v2010 = vunpack.c.l.b16 %v1067
  %v2011 = vunpack.c.h.b16 %v1067
  %v2012 = vunpack.c.l.b16 %v1068
  %v2013 = vunpack.c.h.b16 %v1068
  %v2014 = vunpack.c.l.b16 %v1069
  %v2015 = vunpack.c.h.b16 %v1069
  %v2016 = vunpack.c.l.b16 %v1070
  %v2017 = vunpack.c.h.b16 %v1070
  %v2018 = vunpack.c.l.b16 %v1071
  %v2019 = vunpack.c.h.b16 %v1071
  %v2020 = vunpack.c.l.b16 %v1072
  %v2021 = vunpack.c.h.b16 %v1072
  %v2022 = vunpack.c.l.b16 %v1073
  %v2023 = vunpack.c.h.b16 %v1073
  %v2024 = vunpack.c.l.b16 %v1074
  %v2025 = vunpack.c.h.b16 %v1074
  %v2026 = vunpack.c.l.b16 %v1075
  %v2027 = vunpack.c.h.b16 %v1075
  %v2028 = vunpack.c.l.b16 %v1076
  %v2029 = vunpack.c.h.b16 %v1076
  %v2030 = vunpack.c.l.b16 %v1077
  %v2031 = vunpack.c.h.b16 %v1077
  %v2032 = vunpack.c.l.b16 %v1078
  %v2033 = vunpack.c.h.b16 %v1078
  %v2034 = vunpack.c.l.b16 %v1079
  %v2035 = vunpack.c.h.b16 %v1079
  %v2036 = vunpack.c.l.b16 %v1080
  %v2037 = vunpack.c.h.b16 %v1080
  %v2038 = vunpack.c.l.b16 %v1081
  %v2039 = vunpack.c.h.b16 %v1081
  %v2040 = vunpack.c.l.b16 %v1082
  %v2041 = vunpack.c.h.b16 %v1082
  %v2042 = vunpack.c.l.b16 %v1083
  %v2043 = vunpack.c.h.b16 %v1083
  %v2044 = vunpack.c.l.b16 %v1084
  %v2045 = vunpack.c.h.b16 %v1084
  %v2046 = vunpack.c.l.b16 %v1085
  %v2047 = vunpack.c.h.b16 %v1085
  %v2048 = vunpack.c.l.b16 %v1086
  %v2049 = vunpack.c.h.b16 %v1086
  %v2050 = vunpack.c.l.b16 %v1087
  %v2051 = vunpack.c.h.b16 %v1087
  %v2052 = vunpack.c.l.b16 %v1088
  %v2053 = vunpack.c.h.b16 %v1088
  %v2054 = vunpack.c.l.b16 %v1089
  %v2055 = vunpack.c.h.b16 %v1089
  %v2056 = vunpack.c.l.b16 %v1090
  %v2057 = vunpack.c.h.b16 %v1090
  %v2058 = vunpack.c.l.b16 %v1091
  %v2059 = vunpack.c.h.b16 %v1091
  %v2060 = vunpack.c.l.b16 %v1092
  %v2061 = vunpack.c.h.b16 %v1092
  %v2062 = vunpack.c.l.b16 %v1093
  %v2063 = vunpack.c.h.b16 %v1093
  %v2064 = vpack.c.b16 %v1428, %v1424
  %v2065 = vpack.c.b16 %v1429, %v1425
  %v2066 = vpack.c.b16 %v1430, %v1426
  %v2067 = vpack.c.b16 %v1431, %v1427
  %v2068 = vpack.c.b16 %v1436, %v1432
  %v2069 = vpack.c.b16 %v1437, %v1433
  %v2070 = vpack.c.b16 %v1438, %v1434
  %v2071 = vpack.c.b16 %v1439, %v1435
  %v2072 = vpack.c.b16 %v1444, %v1440
  %v2073 = vpack.c.b16 %v1445, %v1441
  %v2074 = vpack.c.b16 %v1446, %v1442
  %v2075 = vpack.c.b16 %v1447, %v1443
  %v2076 = vpack.c.b16 %v1452, %v1448
  %v2077 = vpack.c.b16 %v1453, %v1449
  %v2078 = vpack.c.b16 %v1454, %v1450
  %v2079 = vpack.c.b16 %v1455, %v1451
  %v2080 = vpack.c.b16 %v1460, %v1456
  %v2081 = vpack.c.b16 %v1461, %v1457
  %v2082 = vpack.c.b16 %v1462, %v1458
  %v2083 = vpack.c.b16 %v1463, %v1459
  %v2084 = vpack.c.b16 %v1468, %v1464
  %v2085 = vpack.c.b16 %v1469, %v1465
  %v2086 = vpack.c.b16 %v1470, %v1466
  %v2087 = vpack.c.b16 %v1471, %v1467
  %v2088 = vpack.c.b16 %v1476, %v1472
  %v2089 = vpack.c.b16 %v1477, %v1473
  %v2090 = vpack.c.b16 %v1478, %v1474
  %v2091 = vpack.c.b16 %v1479, %v1475
  %v2092 = vpack.c.b16 %v1484, %v1480
  %v2093 = vpack.c.b16 %v1485, %v1481
  %v2094 = vpack.c.b16 %v1486, %v1482
  %v2095 = vpack.c.b16 %v1487, %v1483
  %v2096 = vpack.c.b16 %v1492, %v1488
  %v2097 = vpack.c.b16 %v1493, %v1489
  %v2098 = vpack.c.b16 %v1494, %v1490
  %v2099 = vpack.c.b16 %v1495, %v1491
  %v2100 = vpack.c.b16 %v1500, %v1496
  %v2101 = vpack.c.b16 %v1501, %v1497
  %v2102 = vpack.c.b16 %v1502, %v1498
  %v2103 = vpack.c.b16 %v1503, %v1499
  %v2104 = vpack.c.b16 %v1508, %v1504
  %v2105 = vpack.c.b16 %v1509, %v1505
  %v2106 = vpack.c.b16 %v1510, %v1506
  %v2107 = vpack.c.b16 %v1511, %v1507
  %v2108 = vpack.c.b16 %v1516, %v1512
  %v2109 = vpack.c.b16 %v1517, %v1513
  %v2110 = vpack.c.b16 %v1518, %v1514
  %v2111 = vpack.c.b16 %v1519, %v1515
  %v2112 = vpack.c.b16 %v1524, %v1520
  %v2113 = vpack.c.b16 %v1525, %v1521
  %v2114 = vpack.c.b16 %v1526, %v1522
  %v2115 = vpack.c.b16 %v1527, %v1523
  %v2116 = vpack.c.b16 %v1532, %v1528
  %v2117 = vpack.c.b16 %v1533, %v1529
  %v2118 = vpack.c.b16 %v1534, %v1530
  %v2119 = vpack.c.b16 %v1535, %v1531
  %v2120 = vpack.c.b16 %v1540, %v1536
  %v2121 = vpack.c.b16 %v1541, %v1537
  %v2122 = vpack.c.b16 %v1542, %v1538
  %v2123 = vpack.c.b16 %v1543, %v1539
  %v2124 = vpack.c.b16 %v1548, %v1544
  %v2125 = vpack.c.b16 %v1549, %v1545
  %v2126 = vpack.c.b16 %v1550, %v1546
  %v2127 = vpack.c.b16 %v1551, %v1547
  %v2128 = vpack.c.b16 %v1556, %v1552
  %v2129 = vpack.c.b16 %v1557, %v1553
  %v2130 = vpack.c.b16 %v1558, %v1554
  %v2131 = vpack.c.b16 %v1559, %v1555
  %v2132 = vpack.c.b16 %v1564, %v1560
  %v2133 = vpack.c.b16 %v1565, %v1561
  %v2134 = vpack.c.b16 %v1566, %v1562
  %v2135 = vpack.c.b16 %v1567, %v1563
  %v2136 = vpack.c.b16 %v1572, %v1568
  %v2137 = vpack.c.b16 %v1573, %v1569
  %v2138 = vpack.c.b16 %v1574, %v1570
  %v2139 = vpack.c.b16 %v1575, %v1571
  %v2140 = vpack.c.b16 %v1580, %v1576
  %v2141 = vpack.c.b16 %v1581, %v1577
  %v2142 = vpack.c.b16 %v1582, %v1578
  %v2143 = vpack.c.b16 %v1583, %v1579
  %v2144 = vpack.c.b16 %v1588, %v1584
  %v2145 = vpack.c.b16 %v1589, %v1585
  %v2146 = vpack.c.b16 %v1590, %v1586
  %v2147 = vpack.c.b16 %v1591, %v1587
  %v2148 = vpack.c.b16 %v1596, %v1592
  %v2149 = vpack.c.b16 %v1597, %v1593
  %v2150 = vpack.c.b16 %v1598, %v1594
  %v2151 = vpack.c.b16 %v1599, %v1595
  %v2152 = vpack.c.b16 %v1604, %v1600
  %v2153 = vpack.c.b16 %v1605, %v1601
  %v2154 = vpack.c.b16 %v1606, %v1602
  %v2155 = vpack.c.b16 %v1607, %v1603
  %v2156 = vpack.c.b16 %v1612, %v1608
  %v2157 = vpack.c.b16 %v1613, %v1609
  %v2158 = vpack.c.b16 %v1614, %v1610
  %v2159 = vpack.c.b16 %v1615, %v1611
  %v2160 = vpack.c.b16 %v1620, %v1616
  %v2161 = vpack.c.b16 %v1621, %v1617
  %v2162 = vpack.c.b16 %v1622, %v1618
  %v2163 = vpack.c.b16 %v1623, %v1619
  %v2164 = vpack.c.b16 %v1628, %v1624
  %v2165 = vpack.c.b16 %v1629, %v1625
  %v2166 = vpack.c.b16 %v1630, %v1626
  %v2167 = vpack.c.b16 %v1631, %v1627
  %v2168 = vpack.c.b16 %v1636, %v1632
  %v2169 = vpack.c.b16 %v1637, %v1633
  %v2170 = vpack.c.b16 %v1638, %v1634
  %v2171 = vpack.c.b16 %v1639, %v1635
  %v2172 = vpack.c.b16 %v1644, %v1640
  %v2173 = vpack.c.b16 %v1645, %v1641
  %v2174 = vpack.c.b16 %v1646, %v1642
  %v2175 = vpack.c.b16 %v1647, %v1643
  %v2176 = vpack.c.b16 %v1652, %v1648
  %v2177 = vpack.c.b16 %v1653, %v1649
  %v2178 = vpack.c.b16 %v1654, %v1650
  %v2179 = vpack.c.b16 %v1655, %v1651
  %v2180 = vpack.c.b16 %v1660, %v1656
  %v2181 = vpack.c.b16 %v1661, %v1657
  %v2182 = vpack.c.b16 %v1662, %v1658
  %v2183 = vpack.c.b16 %v1663, %v1659
  %v2184 = vpack.c.b16 %v1668, %v1664
  %v2185 = vpack.c.b16 %v1669, %v1665
  %v2186 = vpack.c.b16 %v1670, %v1666
  %v2187 = vpack.c.b16 %v1671, %v1667
  %v2188 = vpack.c.b16 %v1676, %v1672
  %v2189 = vpack.c.b16 %v1677, %v1673
  %v2190 = vpack.c.b16 %v1678, %v1674
  %v2191 = vpack.c.b16 %v1679, %v1675
  %v2192 = vpack.c.b16 %v1684, %v1680
  %v2193 = vpack.c.b16 %v1685, %v1681
  %v2194 = vpack.c.b16 %v1686, %v1682
  %v2195 = vpack.c.b16 %v1687, %v1683
  %v2196 = vpack.c.b16 %v1692, %v1688
  %v2197 = vpack.c.b16 %v1693, %v1689
  %v2198 = vpack.c.b16 %v1694, %v1690
  %v2199 = vpack.c.b16 %v1695, %v1691
  %v2200 = vpack.c.b16 %v1700, %v1696
  %v2201 = vpack.c.b16 %v1701, %v1697
  %v2202 = vpack.c.b16 %v1702, %v1698
  %v2203 = vpack.c.b16 %v1703, %v1699
  %v2204 = vpack.c.b16 %v1708, %v1704
  %v2205 = vpack.c.b16 %v1709, %v1705
  %v2206 = vpack.c.b16 %v1710, %v1706
  %v2207 = vpack.c.b16 %v1711, %v1707
  %v2208 = vpack.c.b16 %v1716, %v1712
  %v2209 = vpack.c.b16 %v1717, %v1713
  %v2210 = vpack.c.b16 %v1718, %v1714
  %v2211 = vpack.c.b16 %v1719, %v1715
  %v2212 = vpack.c.b16 %v1724, %v1720
  %v2213 = vpack.c.b16 %v1725, %v1721
  %v2214 = vpack.c.b16 %v1726, %v1722
  %v2215 = vpack.c.b16 %v1727, %v1723
  %v2216 = vpack.c.b16 %v1732, %v1728
  %v2217 = vpack.c.b16 %v1733, %v1729
  %v2218 = vpack.c.b16 %v1734, %v1730
  %v2219 = vpack.c.b16 %v1735, %v1731
  %v2220 = vpack.c.b16 %v1740, %v1736
  %v2221 = vpack.c.b16 %v1741, %v1737
  %v2222 = vpack.c.b16 %v1742, %v1738
  %v2223 = vpack.c.b16 %v1743, %v1739
  %v2224 = vpack.c.b16 %v1748, %v1744
  %v2225 = vpack.c.b16 %v1749, %v1745
  %v2226 = vpack.c.b16 %v1750, %v1746
  %v2227 = vpack.c.b16 %v1751, %v1747
  %v2228 = vpack.c.b16 %v1756, %v1752
  %v2229 = vpack.c.b16 %v1757, %v1753
  %v2230 = vpack.c.b16 %v1758, %v1754
  %v2231 = vpack.c.b16 %v1759, %v1755
  %v2232 = vpack.c.b16 %v1764, %v1760
  %v2233 = vpack.c.b16 %v1765, %v1761
  %v2234 = vpack.c.b16 %v1766, %v1762
  %v2235 = vpack.c.b16 %v1767, %v1763
  %v2236 = vpack.c.b16 %v1772, %v1768
  %v2237 = vpack.c.b16 %v1773, %v1769
  %v2238 = vpack.c.b16 %v1774, %v1770
  %v2239 = vpack.c.b16 %v1775, %v1771
  %v2240 = vpack.c.b16 %v1780, %v1776
  %v2241 = vpack.c.b16 %v1781, %v1777
  %v2242 = vpack.c.b16 %v1782, %v1778
  %v2243 = vpack.c.b16 %v1783, %v1779
  %v2244 = vpack.c.b16 %v1788, %v1784
  %v2245 = vpack.c.b16 %v1789, %v1785
  %v2246 = vpack.c.b16 %v1790, %v1786
  %v2247 = vpack.c.b16 %v1791, %v1787
  %v2248 = vpack.c.b16 %v1796, %v1792
  %v2249 = vpack.c.b16 %v1797, %v1793
  %v2250 = vpack.c.b16 %v1798, %v1794
  %v2251 = vpack.c.b16 %v1799, %v1795
  %v2252 = vpack.c.b16 %v1804, %v1800
  %v2253 = vpack.c.b16 %v1805, %v1801
  %v2254 = vpack.c.b16 %v1806, %v1802
  %v2255 = vpack.c.b16 %v1807, %v1803
  %v2256 = vpack.c.b16 %v1812, %v1808
  %v2257 = vpack.c.b16 %v1813, %v1809
  %v2258 = vpack.c.b16 %v1814, %v1810
  %v2259 = vpack.c.b16 %v1815, %v1811
  %v2260 = vpack.c.b16 %v1820, %v1816
  %v2261 = vpack.c.b16 %v1821, %v1817
  %v2262 = vpack.c.b16 %v1822, %v1818
  %v2263 = vpack.c.b16 %v1823, %v1819
  %v2264 = vpack.c.b16 %v1828, %v1824
  %v2265 = vpack.c.b16 %v1829, %v1825
  %v2266 = vpack.c.b16 %v1830, %v1826
  %v2267 = vpack.c.b16 %v1831, %v1827
  %v2268 = vpack.c.b16 %v1836, %v1832
  %v2269 = vpack.c.b16 %v1837, %v1833
  %v2270 = vpack.c.b16 %v1838, %v1834
  %v2271 = vpack.c.b16 %v1839, %v1835
  %v2272 = vpack.c.b16 %v1844, %v1840
  %v2273 = vpack.c.b16 %v1845, %v1841
  %v2274 = vpack.c.b16 %v1846, %v1842
  %v2275 = vpack.c.b16 %v1847, %v1843
  %v2276 = vpack.c.b16 %v1852, %v1848
  %v2277 = vpack.c.b16 %v1853, %v1849
  %v2278 = vpack.c.b16 %v1854, %v1850
  %v2279 = vpack.c.b16 %v1855, %v1851
  %v2280 = vpack.c.b16 %v1860, %v1856
  %v2281 = vpack.c.b16 %v1861, %v1857
  %v2282 = vpack.c.b16 %v1862, %v1858
  %v2283 = vpack.c.b16 %v1863, %v1859
  %v2284 = vpack.c.b16 %v1868, %v1864
  %v2285 = vpack.c.b16 %v1869, %v1865
  %v2286 = vpack.c.b16 %v1870, %v1866
  %v2287 = vpack.c.b16 %v1871, %v1867
  %v2288 = vpack.c.b16 %v1876, %v1872
  %v2289 = vpack.c.b16 %v1877, %v1873
  %v2290 = vpack.c.b16 %v1878, %v1874
  %v2291 = vpack.c.b16 %v1879, %v1875
  %v2292 = vpack.c.b16 %v1884, %v1880
  %v2293 = vpack.c.b16 %v1885, %v1881
  %v2294 = vpack.c.b16 %v1886, %v1882
  %v2295 = vpack.c.b16 %v1887, %v1883
  %v2296 = vpack.c.b16 %v1892, %v1888
  %v2297 = vpack.c.b16 %v1893, %v1889
  %v2298 = vpack.c.b16 %v1894, %v1890
  %v2299 = vpack.c.b16 %v1895, %v1891
  %v2300 = vpack.c.b16 %v1900, %v1896
  %v2301 = vpack.c.b16 %v1901, %v1897
  %v2302 = vpack.c.b16 %v1902, %v1898
  %v2303 = vpack.c.b16 %v1903, %v1899
  %v2304 = vpack.c.b16 %v1908, %v1904
  %v2305 = vpack.c.b16 %v1909, %v1905
  %v2306 = vpack.c.b16 %v1910, %v1906
  %v2307 = vpack.c.b16 %v1911, %v1907
  %v2308 = vpack.c.b16 %v1916, %v1912
  %v2309 = vpack.c.b16 %v1917, %v1913
  %v2310 = vpack.c.b16 %v1918, %v1914
  %v2311 = vpack.c.b16 %v1919, %v1915
  %v2312 = vpack.c.b16 %v1924, %v1920
  %v2313 = vpack.c.b16 %v1925, %v1921
  %v2314 = vpack.c.b16 %v1926, %v1922
  %v2315 = vpack.c.b16 %v1927, %v1923
  %v2316 = vpack.c.b16 %v1932, %v1928
  %v2317 = vpack.c.b16 %v1933, %v1929
  %v2318 = vpack.c.b16 %v1934, %v1930
  %v2319 = vpack.c.b16 %v1935, %v1931
  %v2320 = vpack.c.b16 %v1940, %v1936
  %v2321 = vpack.c.b16 %v1941, %v1937
  %v2322 = vpack.c.b16 %v1942, %v1938
  %v2323 = vpack.c.b16 %v1943, %v1939
  %v2324 = vpack.c.b16 %v1948, %v1944
  %v2325 = vpack.c.b16 %v1949, %v1945
  %v2326 = vpack.c.b16 %v1950, %v1946
  %v2327 = vpack.c.b16 %v1951, %v1947
  %v2328 = vpack.c.b16 %v1956, %v1952
  %v2329 = vpack.c.b16 %v1957, %v1953
  %v2330 = vpack.c.b16 %v1958, %v1954
  %v2331 = vpack.c.b16 %v1959, %v1955
  %v2332 = vpack.c.b16 %v1964, %v1960
  %v2333 = vpack.c.b16 %v1965, %v1961
  %v2334 = vpack.c.b16 %v1966, %v1962
  %v2335 = vpack.c.b16 %v1967, %v1963
  %v2336 = vpack.c.b16 %v1972, %v1968
  %v2337 = vpack.c.b16 %v1973, %v1969
  %v2338 = vpack.c.b16 %v1974, %v1970
  %v2339 = vpack.c.b16 %v1975, %v1971
  %v2340 = vpack.c.b16 %v1980, %v1976
  %v2341 = vpack.c.b16 %v1981, %v1977
  %v2342 = vpack.c.b16 %v1982, %v1978
  %v2343 = vpack.c.b16 %v1983, %v1979
  %v2344 = vpack.c.b16 %v1988, %v1984
  %v2345 = vpack.c.b16 %v1989, %v1985
  %v2346 = vpack.c.b16 %v1990, %v1986
  %v2347 = vpack.c.b16 %v1991, %v1987
  %v2348 = vpack.c.b16 %v1996, %v1992
  %v2349 = vpack.c.b16 %v1997, %v1993
  %v2350 = vpack.c.b16 %v1998, %v1994
  %v2351 = vpack.c.b16 %v1999, %v1995
  %v2352 = vpack.c.b16 %v2004, %v2000
  %v2353 = vpack.c.b16 %v2005, %v2001
  %v2354 = vpack.c.b16 %v2006, %v2002
  %v2355 = vpack.c.b16 %v2007, %v2003
  %v2356 = vpack.c.b16 %v2012, %v2008
  %v2357 = vpack.c.b16 %v2013, %v2009
  %v2358 = vpack.c.b16 %v2014, %v2010
  %v2359 = vpack.c.b16 %v2015, %v2011
  %v2360 = vpack.c.b16 %v2020, %v2016
  %v2361 = vpack.c.b16 %v2021, %v2017
  %v2362 = vpack.c.b16 %v2022, %v2018
  %v2363 = vpack.c.b16 %v2023, %v2019
  %v2364 = vpack.c.b16 %v2028, %v2024
  %v2365 = vpack.c.b16 %v2029, %v2025
  %v2366 = vpack.c.b16 %v2030, %v2026
  %v2367 = vpack.c.b16 %v2031, %v2027
  %v2368 = vpack.c.b16 %v2036, %v2032
  %v2369 = vpack.c.b16 %v2037, %v2033
  %v2370 = vpack.c.b16 %v2038, %v2034
  %v2371 = vpack.c.b16 %v2039, %v2035
  %v2372 = vpack.c.b16 %v2044, %v2040
  %v2373 = vpack.c.b16 %v2045, %v2041
  %v2374 = vpack.c.b16 %v2046, %v2042
  %v2375 = vpack.c.b16 %v2047, %v2043
  %v2376 = vpack.c.b16 %v2052, %v2048
  %v2377 = vpack.c.b16 %v2053, %v2049
  %v2378 = vpack.c.b16 %v2054, %v2050
  %v2379 = vpack.c.b16 %v2055, %v2051
  %v2380 = vpack.c.b16 %v2060, %v2056
  %v2381 = vpack.c.b16 %v2061, %v2057
  %v2382 = vpack.c.b16 %v2062, %v2058
  %v2383 = vpack.c.b16 %v2063, %v2059
  %2704 = vmatpush.bf16.msra.mxu0 %v2092
  %2705 = vmatpush.bf16.msra.mxu0 %v2088
  %2706 = vmatpush.bf16.msra.mxu0 %v2084
  %2707 = vmatpush.bf16.msra.mxu0 %v2080
  %2708 = vmatpush.bf16.msra.mxu0 %v2076
  %2709 = vmatpush.bf16.msra.mxu0 %v2072
  %2710 = vmatpush.bf16.msra.mxu0 %v2068
  %2711 = vmatpush.bf16.msra.mxu0 %v2064
  %2712 = vmatmul.bf16.gmra.mxu0 %v764
  %v2713 = vpop.f32.mrf.mxu0
  %v2714 = vadd.f32 %v1096, %v2713
  %v2715 = vpop.f32.mrf.mxu0
  %v2716 = vadd.f32 %v1096, %v2715
  %2717 = vdwg.mxu0
  %2718 = vmatpush.bf16.msra.mxu0 %v2124
  %2719 = vmatpush.bf16.msra.mxu0 %v2120
  %2720 = vmatpush.bf16.msra.mxu0 %v2116
  %2721 = vmatpush.bf16.msra.mxu0 %v2112
  %2722 = vmatpush.bf16.msra.mxu0 %v2108
  %2723 = vmatpush.bf16.msra.mxu0 %v2104
  %2724 = vmatpush.bf16.msra.mxu0 %v2100
  %2725 = vmatpush.bf16.msra.mxu0 %v2096
  %2726 = vmatmul.bf16.gmra.mxu0 %v765
  %v2727 = vpop.f32.mrf.mxu0
  %v2728 = vadd.f32 %v2714, %v2727
  %v2729 = vpop.f32.mrf.mxu0
  %v2730 = vadd.f32 %v2716, %v2729
  %2731 = vdwg.mxu0
  %2732 = vmatpush.bf16.msra.mxu0 %v2156
  %2733 = vmatpush.bf16.msra.mxu0 %v2152
  %2734 = vmatpush.bf16.msra.mxu0 %v2148
  %2735 = vmatpush.bf16.msra.mxu0 %v2144
  %2736 = vmatpush.bf16.msra.mxu0 %v2140
  %2737 = vmatpush.bf16.msra.mxu0 %v2136
  %2738 = vmatpush.bf16.msra.mxu0 %v2132
  %2739 = vmatpush.bf16.msra.mxu0 %v2128
  %2740 = vmatmul.bf16.gmra.mxu0 %v766
  %v2741 = vpop.f32.mrf.mxu0
  %v2742 = vadd.f32 %v2728, %v2741
  %v2743 = vpop.f32.mrf.mxu0
  %v2744 = vadd.f32 %v2730, %v2743
  %2745 = vdwg.mxu0
  %2746 = vmatpush.bf16.msra.mxu0 %v2188
  %2747 = vmatpush.bf16.msra.mxu0 %v2184
  %2748 = vmatpush.bf16.msra.mxu0 %v2180
  %2749 = vmatpush.bf16.msra.mxu0 %v2176
  %2750 = vmatpush.bf16.msra.mxu0 %v2172
  %2751 = vmatpush.bf16.msra.mxu0 %v2168
  %2752 = vmatpush.bf16.msra.mxu0 %v2164
  %2753 = vmatpush.bf16.msra.mxu0 %v2160
  %2754 = vmatmul.bf16.gmra.mxu0 %v767
  %v2755 = vpop.f32.mrf.mxu0
  %v2756 = vadd.f32 %v2742, %v2755
  %v2757 = vpop.f32.mrf.mxu0
  %v2758 = vadd.f32 %v2744, %v2757
  %2759 = vdwg.mxu0
  %2760 = vmatpush.bf16.msra.mxu0 %v2220
  %2761 = vmatpush.bf16.msra.mxu0 %v2216
  %2762 = vmatpush.bf16.msra.mxu0 %v2212
  %2763 = vmatpush.bf16.msra.mxu0 %v2208
  %2764 = vmatpush.bf16.msra.mxu0 %v2204
  %2765 = vmatpush.bf16.msra.mxu0 %v2200
  %2766 = vmatpush.bf16.msra.mxu0 %v2196
  %2767 = vmatpush.bf16.msra.mxu0 %v2192
  %2768 = vmatmul.bf16.gmra.mxu0 %v768
  %v2769 = vpop.f32.mrf.mxu0
  %v2770 = vadd.f32 %v2756, %v2769
  %v2771 = vpop.f32.mrf.mxu0
  %v2772 = vadd.f32 %v2758, %v2771
  %2773 = vdwg.mxu0
  %2774 = vmatpush.bf16.msra.mxu0 %v2252
  %2775 = vmatpush.bf16.msra.mxu0 %v2248
  %2776 = vmatpush.bf16.msra.mxu0 %v2244
  %2777 = vmatpush.bf16.msra.mxu0 %v2240
  %2778 = vmatpush.bf16.msra.mxu0 %v2236
  %2779 = vmatpush.bf16.msra.mxu0 %v2232
  %2780 = vmatpush.bf16.msra.mxu0 %v2228
  %2781 = vmatpush.bf16.msra.mxu0 %v2224
  %2782 = vmatmul.bf16.gmra.mxu0 %v769
  %v2783 = vpop.f32.mrf.mxu0
  %v2784 = vadd.f32 %v2770, %v2783
  %v2785 = vpop.f32.mrf.mxu0
  %v2786 = vadd.f32 %v2772, %v2785
  %2787 = vdwg.mxu0
  %2788 = vmatpush.bf16.msra.mxu0 %v2284
  %2789 = vmatpush.bf16.msra.mxu0 %v2280
  %2790 = vmatpush.bf16.msra.mxu0 %v2276
  %2791 = vmatpush.bf16.msra.mxu0 %v2272
  %2792 = vmatpush.bf16.msra.mxu0 %v2268
  %2793 = vmatpush.bf16.msra.mxu0 %v2264
  %2794 = vmatpush.bf16.msra.mxu0 %v2260
  %2795 = vmatpush.bf16.msra.mxu0 %v2256
  %2796 = vmatmul.bf16.gmra.mxu0 %v770
  %v2797 = vpop.f32.mrf.mxu0
  %v2798 = vadd.f32 %v2784, %v2797
  %v2799 = vpop.f32.mrf.mxu0
  %v2800 = vadd.f32 %v2786, %v2799
  %2801 = vdwg.mxu0
  %2802 = vmatpush.bf16.msra.mxu0 %v2316
  %2803 = vmatpush.bf16.msra.mxu0 %v2312
  %2804 = vmatpush.bf16.msra.mxu0 %v2308
  %2805 = vmatpush.bf16.msra.mxu0 %v2304
  %2806 = vmatpush.bf16.msra.mxu0 %v2300
  %2807 = vmatpush.bf16.msra.mxu0 %v2296
  %2808 = vmatpush.bf16.msra.mxu0 %v2292
  %2809 = vmatpush.bf16.msra.mxu0 %v2288
  %2810 = vmatmul.bf16.gmra.mxu0 %v771
  %v2811 = vpop.f32.mrf.mxu0
  %v2812 = vadd.f32 %v2798, %v2811
  %v2813 = vpop.f32.mrf.mxu0
  %v2814 = vadd.f32 %v2800, %v2813
  %2815 = vdwg.mxu0
  %2816 = vmatpush.bf16.msra.mxu0 %v2348
  %2817 = vmatpush.bf16.msra.mxu0 %v2344
  %2818 = vmatpush.bf16.msra.mxu0 %v2340
  %2819 = vmatpush.bf16.msra.mxu0 %v2336
  %2820 = vmatpush.bf16.msra.mxu0 %v2332
  %2821 = vmatpush.bf16.msra.mxu0 %v2328
  %2822 = vmatpush.bf16.msra.mxu0 %v2324
  %2823 = vmatpush.bf16.msra.mxu0 %v2320
  %2824 = vmatmul.bf16.gmra.mxu0 %v772
  %v2825 = vpop.f32.mrf.mxu0
  %v2826 = vadd.f32 %v2812, %v2825
  %v2827 = vpop.f32.mrf.mxu0
  %v2828 = vadd.f32 %v2814, %v2827
  %2829 = vdwg.mxu0
  %2830 = vmatpush.bf16.msra.mxu0 %v2380
  %2831 = vmatpush.bf16.msra.mxu0 %v2376
  %2832 = vmatpush.bf16.msra.mxu0 %v2372
  %2833 = vmatpush.bf16.msra.mxu0 %v2368
  %2834 = vmatpush.bf16.msra.mxu0 %v2364
  %2835 = vmatpush.bf16.msra.mxu0 %v2360
  %2836 = vmatpush.bf16.msra.mxu0 %v2356
  %2837 = vmatpush.bf16.msra.mxu0 %v2352
  %2838 = vmatmul.bf16.gmra.mxu0 %v773
  %v2839 = vpop.f32.mrf.mxu0
  %v2840 = vadd.f32 %v2826, %v2839
  %v2841 = vpop.f32.mrf.mxu0
  %v2842 = vadd.f32 %v2828, %v2841
  %2843 = vdwg.mxu0
  %2844 = vmatpush.bf16.msra.mxu0 %v2093
  %2845 = vmatpush.bf16.msra.mxu0 %v2089
  %2846 = vmatpush.bf16.msra.mxu0 %v2085
  %2847 = vmatpush.bf16.msra.mxu0 %v2081
  %2848 = vmatpush.bf16.msra.mxu0 %v2077
  %2849 = vmatpush.bf16.msra.mxu0 %v2073
  %2850 = vmatpush.bf16.msra.mxu0 %v2069
  %2851 = vmatpush.bf16.msra.mxu0 %v2065
  %2852 = vmatmul.bf16.gmra.mxu0 %v764
  %v2853 = vpop.f32.mrf.mxu0
  %v2854 = vadd.f32 %v1097, %v2853
  %v2855 = vpop.f32.mrf.mxu0
  %v2856 = vadd.f32 %v1097, %v2855
  %2857 = vdwg.mxu0
  %2858 = vmatpush.bf16.msra.mxu0 %v2125
  %2859 = vmatpush.bf16.msra.mxu0 %v2121
  %2860 = vmatpush.bf16.msra.mxu0 %v2117
  %2861 = vmatpush.bf16.msra.mxu0 %v2113
  %2862 = vmatpush.bf16.msra.mxu0 %v2109
  %2863 = vmatpush.bf16.msra.mxu0 %v2105
  %2864 = vmatpush.bf16.msra.mxu0 %v2101
  %2865 = vmatpush.bf16.msra.mxu0 %v2097
  %2866 = vmatmul.bf16.gmra.mxu0 %v765
  %v2867 = vpop.f32.mrf.mxu0
  %v2868 = vadd.f32 %v2854, %v2867
  %v2869 = vpop.f32.mrf.mxu0
  %v2870 = vadd.f32 %v2856, %v2869
  %2871 = vdwg.mxu0
  %2872 = vmatpush.bf16.msra.mxu0 %v2157
  %2873 = vmatpush.bf16.msra.mxu0 %v2153
  %2874 = vmatpush.bf16.msra.mxu0 %v2149
  %2875 = vmatpush.bf16.msra.mxu0 %v2145
  %2876 = vmatpush.bf16.msra.mxu0 %v2141
  %2877 = vmatpush.bf16.msra.mxu0 %v2137
  %2878 = vmatpush.bf16.msra.mxu0 %v2133
  %2879 = vmatpush.bf16.msra.mxu0 %v2129
  %2880 = vmatmul.bf16.gmra.mxu0 %v766
  %v2881 = vpop.f32.mrf.mxu0
  %v2882 = vadd.f32 %v2868, %v2881
  %v2883 = vpop.f32.mrf.mxu0
  %v2884 = vadd.f32 %v2870, %v2883
  %2885 = vdwg.mxu0
  %2886 = vmatpush.bf16.msra.mxu0 %v2189
  %2887 = vmatpush.bf16.msra.mxu0 %v2185
  %2888 = vmatpush.bf16.msra.mxu0 %v2181
  %2889 = vmatpush.bf16.msra.mxu0 %v2177
  %2890 = vmatpush.bf16.msra.mxu0 %v2173
  %2891 = vmatpush.bf16.msra.mxu0 %v2169
  %2892 = vmatpush.bf16.msra.mxu0 %v2165
  %2893 = vmatpush.bf16.msra.mxu0 %v2161
  %2894 = vmatmul.bf16.gmra.mxu0 %v767
  %v2895 = vpop.f32.mrf.mxu0
  %v2896 = vadd.f32 %v2882, %v2895
  %v2897 = vpop.f32.mrf.mxu0
  %v2898 = vadd.f32 %v2884, %v2897
  %2899 = vdwg.mxu0
  %2900 = vmatpush.bf16.msra.mxu0 %v2221
  %2901 = vmatpush.bf16.msra.mxu0 %v2217
  %2902 = vmatpush.bf16.msra.mxu0 %v2213
  %2903 = vmatpush.bf16.msra.mxu0 %v2209
  %2904 = vmatpush.bf16.msra.mxu0 %v2205
  %2905 = vmatpush.bf16.msra.mxu0 %v2201
  %2906 = vmatpush.bf16.msra.mxu0 %v2197
  %2907 = vmatpush.bf16.msra.mxu0 %v2193
  %2908 = vmatmul.bf16.gmra.mxu0 %v768
  %v2909 = vpop.f32.mrf.mxu0
  %v2910 = vadd.f32 %v2896, %v2909
  %v2911 = vpop.f32.mrf.mxu0
  %v2912 = vadd.f32 %v2898, %v2911
  %2913 = vdwg.mxu0
  %2914 = vmatpush.bf16.msra.mxu0 %v2253
  %2915 = vmatpush.bf16.msra.mxu0 %v2249
  %2916 = vmatpush.bf16.msra.mxu0 %v2245
  %2917 = vmatpush.bf16.msra.mxu0 %v2241
  %2918 = vmatpush.bf16.msra.mxu0 %v2237
  %2919 = vmatpush.bf16.msra.mxu0 %v2233
  %2920 = vmatpush.bf16.msra.mxu0 %v2229
  %2921 = vmatpush.bf16.msra.mxu0 %v2225
  %2922 = vmatmul.bf16.gmra.mxu0 %v769
  %v2923 = vpop.f32.mrf.mxu0
  %v2924 = vadd.f32 %v2910, %v2923
  %v2925 = vpop.f32.mrf.mxu0
  %v2926 = vadd.f32 %v2912, %v2925
  %2927 = vdwg.mxu0
  %2928 = vmatpush.bf16.msra.mxu0 %v2285
  %2929 = vmatpush.bf16.msra.mxu0 %v2281
  %2930 = vmatpush.bf16.msra.mxu0 %v2277
  %2931 = vmatpush.bf16.msra.mxu0 %v2273
  %2932 = vmatpush.bf16.msra.mxu0 %v2269
  %2933 = vmatpush.bf16.msra.mxu0 %v2265
  %2934 = vmatpush.bf16.msra.mxu0 %v2261
  %2935 = vmatpush.bf16.msra.mxu0 %v2257
  %2936 = vmatmul.bf16.gmra.mxu0 %v770
  %v2937 = vpop.f32.mrf.mxu0
  %v2938 = vadd.f32 %v2924, %v2937
  %v2939 = vpop.f32.mrf.mxu0
  %v2940 = vadd.f32 %v2926, %v2939
  %2941 = vdwg.mxu0
  %2942 = vmatpush.bf16.msra.mxu0 %v2317
  %2943 = vmatpush.bf16.msra.mxu0 %v2313
  %2944 = vmatpush.bf16.msra.mxu0 %v2309
  %2945 = vmatpush.bf16.msra.mxu0 %v2305
  %2946 = vmatpush.bf16.msra.mxu0 %v2301
  %2947 = vmatpush.bf16.msra.mxu0 %v2297
  %2948 = vmatpush.bf16.msra.mxu0 %v2293
  %2949 = vmatpush.bf16.msra.mxu0 %v2289
  %2950 = vmatmul.bf16.gmra.mxu0 %v771
  %v2951 = vpop.f32.mrf.mxu0
  %v2952 = vadd.f32 %v2938, %v2951
  %v2953 = vpop.f32.mrf.mxu0
  %v2954 = vadd.f32 %v2940, %v2953
  %2955 = vdwg.mxu0
  %2956 = vmatpush.bf16.msra.mxu0 %v2349
  %2957 = vmatpush.bf16.msra.mxu0 %v2345
  %2958 = vmatpush.bf16.msra.mxu0 %v2341
  %2959 = vmatpush.bf16.msra.mxu0 %v2337
  %2960 = vmatpush.bf16.msra.mxu0 %v2333
  %2961 = vmatpush.bf16.msra.mxu0 %v2329
  %2962 = vmatpush.bf16.msra.mxu0 %v2325
  %2963 = vmatpush.bf16.msra.mxu0 %v2321
  %2964 = vmatmul.bf16.gmra.mxu0 %v772
  %v2965 = vpop.f32.mrf.mxu0
  %v2966 = vadd.f32 %v2952, %v2965
  %v2967 = vpop.f32.mrf.mxu0
  %v2968 = vadd.f32 %v2954, %v2967
  %2969 = vdwg.mxu0
  %2970 = vmatpush.bf16.msra.mxu0 %v2381
  %2971 = vmatpush.bf16.msra.mxu0 %v2377
  %2972 = vmatpush.bf16.msra.mxu0 %v2373
  %2973 = vmatpush.bf16.msra.mxu0 %v2369
  %2974 = vmatpush.bf16.msra.mxu0 %v2365
  %2975 = vmatpush.bf16.msra.mxu0 %v2361
  %2976 = vmatpush.bf16.msra.mxu0 %v2357
  %2977 = vmatpush.bf16.msra.mxu0 %v2353
  %2978 = vmatmul.bf16.gmra.mxu0 %v773
  %v2979 = vpop.f32.mrf.mxu0
  %v2980 = vadd.f32 %v2966, %v2979
  %v2981 = vpop.f32.mrf.mxu0
  %v2982 = vadd.f32 %v2968, %v2981
  %2983 = vdwg.mxu0
  %2984 = vmatpush.bf16.msra.mxu0 %v2094
  %2985 = vmatpush.bf16.msra.mxu0 %v2090
  %2986 = vmatpush.bf16.msra.mxu0 %v2086
  %2987 = vmatpush.bf16.msra.mxu0 %v2082
  %2988 = vmatpush.bf16.msra.mxu0 %v2078
  %2989 = vmatpush.bf16.msra.mxu0 %v2074
  %2990 = vmatpush.bf16.msra.mxu0 %v2070
  %2991 = vmatpush.bf16.msra.mxu0 %v2066
  %2992 = vmatmul.bf16.gmra.mxu0 %v764
  %v2993 = vpop.f32.mrf.mxu0
  %v2994 = vadd.f32 %v1098, %v2993
  %v2995 = vpop.f32.mrf.mxu0
  %v2996 = vadd.f32 %v1098, %v2995
  %2997 = vdwg.mxu0
  %2998 = vmatpush.bf16.msra.mxu0 %v2126
  %2999 = vmatpush.bf16.msra.mxu0 %v2122
  %3000 = vmatpush.bf16.msra.mxu0 %v2118
  %3001 = vmatpush.bf16.msra.mxu0 %v2114
  %3002 = vmatpush.bf16.msra.mxu0 %v2110
  %3003 = vmatpush.bf16.msra.mxu0 %v2106
  %3004 = vmatpush.bf16.msra.mxu0 %v2102
  %3005 = vmatpush.bf16.msra.mxu0 %v2098
  %3006 = vmatmul.bf16.gmra.mxu0 %v765
  %v3007 = vpop.f32.mrf.mxu0
  %v3008 = vadd.f32 %v2994, %v3007
  %v3009 = vpop.f32.mrf.mxu0
  %v3010 = vadd.f32 %v2996, %v3009
  %3011 = vdwg.mxu0
  %3012 = vmatpush.bf16.msra.mxu0 %v2158
  %3013 = vmatpush.bf16.msra.mxu0 %v2154
  %3014 = vmatpush.bf16.msra.mxu0 %v2150
  %3015 = vmatpush.bf16.msra.mxu0 %v2146
  %3016 = vmatpush.bf16.msra.mxu0 %v2142
  %3017 = vmatpush.bf16.msra.mxu0 %v2138
  %3018 = vmatpush.bf16.msra.mxu0 %v2134
  %3019 = vmatpush.bf16.msra.mxu0 %v2130
  %3020 = vmatmul.bf16.gmra.mxu0 %v766
  %v3021 = vpop.f32.mrf.mxu0
  %v3022 = vadd.f32 %v3008, %v3021
  %v3023 = vpop.f32.mrf.mxu0
  %v3024 = vadd.f32 %v3010, %v3023
  %3025 = vdwg.mxu0
  %3026 = vmatpush.bf16.msra.mxu0 %v2190
  %3027 = vmatpush.bf16.msra.mxu0 %v2186
  %3028 = vmatpush.bf16.msra.mxu0 %v2182
  %3029 = vmatpush.bf16.msra.mxu0 %v2178
  %3030 = vmatpush.bf16.msra.mxu0 %v2174
  %3031 = vmatpush.bf16.msra.mxu0 %v2170
  %3032 = vmatpush.bf16.msra.mxu0 %v2166
  %3033 = vmatpush.bf16.msra.mxu0 %v2162
  %3034 = vmatmul.bf16.gmra.mxu0 %v767
  %v3035 = vpop.f32.mrf.mxu0
  %v3036 = vadd.f32 %v3022, %v3035
  %v3037 = vpop.f32.mrf.mxu0
  %v3038 = vadd.f32 %v3024, %v3037
  %3039 = vdwg.mxu0
  %3040 = vmatpush.bf16.msra.mxu0 %v2222
  %3041 = vmatpush.bf16.msra.mxu0 %v2218
  %3042 = vmatpush.bf16.msra.mxu0 %v2214
  %3043 = vmatpush.bf16.msra.mxu0 %v2210
  %3044 = vmatpush.bf16.msra.mxu0 %v2206
  %3045 = vmatpush.bf16.msra.mxu0 %v2202
  %3046 = vmatpush.bf16.msra.mxu0 %v2198
  %3047 = vmatpush.bf16.msra.mxu0 %v2194
  %3048 = vmatmul.bf16.gmra.mxu0 %v768
  %v3049 = vpop.f32.mrf.mxu0
  %v3050 = vadd.f32 %v3036, %v3049
  %v3051 = vpop.f32.mrf.mxu0
  %v3052 = vadd.f32 %v3038, %v3051
  %3053 = vdwg.mxu0
  %3054 = vmatpush.bf16.msra.mxu0 %v2254
  %3055 = vmatpush.bf16.msra.mxu0 %v2250
  %3056 = vmatpush.bf16.msra.mxu0 %v2246
  %3057 = vmatpush.bf16.msra.mxu0 %v2242
  %3058 = vmatpush.bf16.msra.mxu0 %v2238
  %3059 = vmatpush.bf16.msra.mxu0 %v2234
  %3060 = vmatpush.bf16.msra.mxu0 %v2230
  %3061 = vmatpush.bf16.msra.mxu0 %v2226
  %3062 = vmatmul.bf16.gmra.mxu0 %v769
  %v3063 = vpop.f32.mrf.mxu0
  %v3064 = vadd.f32 %v3050, %v3063
  %v3065 = vpop.f32.mrf.mxu0
  %v3066 = vadd.f32 %v3052, %v3065
  %3067 = vdwg.mxu0
  %3068 = vmatpush.bf16.msra.mxu0 %v2286
  %3069 = vmatpush.bf16.msra.mxu0 %v2282
  %3070 = vmatpush.bf16.msra.mxu0 %v2278
  %3071 = vmatpush.bf16.msra.mxu0 %v2274
  %3072 = vmatpush.bf16.msra.mxu0 %v2270
  %3073 = vmatpush.bf16.msra.mxu0 %v2266
  %3074 = vmatpush.bf16.msra.mxu0 %v2262
  %3075 = vmatpush.bf16.msra.mxu0 %v2258
  %3076 = vmatmul.bf16.gmra.mxu0 %v770
  %v3077 = vpop.f32.mrf.mxu0
  %v3078 = vadd.f32 %v3064, %v3077
  %v3079 = vpop.f32.mrf.mxu0
  %v3080 = vadd.f32 %v3066, %v3079
  %3081 = vdwg.mxu0
  %3082 = vmatpush.bf16.msra.mxu0 %v2318
  %3083 = vmatpush.bf16.msra.mxu0 %v2314
  %3084 = vmatpush.bf16.msra.mxu0 %v2310
  %3085 = vmatpush.bf16.msra.mxu0 %v2306
  %3086 = vmatpush.bf16.msra.mxu0 %v2302
  %3087 = vmatpush.bf16.msra.mxu0 %v2298
  %3088 = vmatpush.bf16.msra.mxu0 %v2294
  %3089 = vmatpush.bf16.msra.mxu0 %v2290
  %3090 = vmatmul.bf16.gmra.mxu0 %v771
  %v3091 = vpop.f32.mrf.mxu0
  %v3092 = vadd.f32 %v3078, %v3091
  %v3093 = vpop.f32.mrf.mxu0
  %v3094 = vadd.f32 %v3080, %v3093
  %3095 = vdwg.mxu0
  %3096 = vmatpush.bf16.msra.mxu0 %v2350
  %3097 = vmatpush.bf16.msra.mxu0 %v2346
  %3098 = vmatpush.bf16.msra.mxu0 %v2342
  %3099 = vmatpush.bf16.msra.mxu0 %v2338
  %3100 = vmatpush.bf16.msra.mxu0 %v2334
  %3101 = vmatpush.bf16.msra.mxu0 %v2330
  %3102 = vmatpush.bf16.msra.mxu0 %v2326
  %3103 = vmatpush.bf16.msra.mxu0 %v2322
  %3104 = vmatmul.bf16.gmra.mxu0 %v772
  %v3105 = vpop.f32.mrf.mxu0
  %v3106 = vadd.f32 %v3092, %v3105
  %v3107 = vpop.f32.mrf.mxu0
  %v3108 = vadd.f32 %v3094, %v3107
  %3109 = vdwg.mxu0
  %3110 = vmatpush.bf16.msra.mxu0 %v2382
  %3111 = vmatpush.bf16.msra.mxu0 %v2378
  %3112 = vmatpush.bf16.msra.mxu0 %v2374
  %3113 = vmatpush.bf16.msra.mxu0 %v2370
  %3114 = vmatpush.bf16.msra.mxu0 %v2366
  %3115 = vmatpush.bf16.msra.mxu0 %v2362
  %3116 = vmatpush.bf16.msra.mxu0 %v2358
  %3117 = vmatpush.bf16.msra.mxu0 %v2354
  %3118 = vmatmul.bf16.gmra.mxu0 %v773
  %v3119 = vpop.f32.mrf.mxu0
  %v3120 = vadd.f32 %v3106, %v3119
  %v3121 = vpop.f32.mrf.mxu0
  %v3122 = vadd.f32 %v3108, %v3121
  %3123 = vdwg.mxu0
  %3124 = vmatpush.bf16.msra.mxu0 %v2095
  %3125 = vmatpush.bf16.msra.mxu0 %v2091
  %3126 = vmatpush.bf16.msra.mxu0 %v2087
  %3127 = vmatpush.bf16.msra.mxu0 %v2083
  %3128 = vmatpush.bf16.msra.mxu0 %v2079
  %3129 = vmatpush.bf16.msra.mxu0 %v2075
  %3130 = vmatpush.bf16.msra.mxu0 %v2071
  %3131 = vmatpush.bf16.msra.mxu0 %v2067
  %3132 = vmatmul.bf16.gmra.mxu0 %v764
  %v3133 = vpop.f32.mrf.mxu0
  %v3134 = vadd.f32 %v1099, %v3133
  %v3135 = vpop.f32.mrf.mxu0
  %v3136 = vadd.f32 %v1099, %v3135
  %3137 = vdwg.mxu0
  %3138 = vmatpush.bf16.msra.mxu0 %v2127
  %3139 = vmatpush.bf16.msra.mxu0 %v2123
  %3140 = vmatpush.bf16.msra.mxu0 %v2119
  %3141 = vmatpush.bf16.msra.mxu0 %v2115
  %3142 = vmatpush.bf16.msra.mxu0 %v2111
  %3143 = vmatpush.bf16.msra.mxu0 %v2107
  %3144 = vmatpush.bf16.msra.mxu0 %v2103
  %3145 = vmatpush.bf16.msra.mxu0 %v2099
  %3146 = vmatmul.bf16.gmra.mxu0 %v765
  %v3147 = vpop.f32.mrf.mxu0
  %v3148 = vadd.f32 %v3134, %v3147
  %v3149 = vpop.f32.mrf.mxu0
  %v3150 = vadd.f32 %v3136, %v3149
  %3151 = vdwg.mxu0
  %3152 = vmatpush.bf16.msra.mxu0 %v2159
  %3153 = vmatpush.bf16.msra.mxu0 %v2155
  %3154 = vmatpush.bf16.msra.mxu0 %v2151
  %3155 = vmatpush.bf16.msra.mxu0 %v2147
  %3156 = vmatpush.bf16.msra.mxu0 %v2143
  %3157 = vmatpush.bf16.msra.mxu0 %v2139
  %3158 = vmatpush.bf16.msra.mxu0 %v2135
  %3159 = vmatpush.bf16.msra.mxu0 %v2131
  %3160 = vmatmul.bf16.gmra.mxu0 %v766
  %v3161 = vpop.f32.mrf.mxu0
  %v3162 = vadd.f32 %v3148, %v3161
  %v3163 = vpop.f32.mrf.mxu0
  %v3164 = vadd.f32 %v3150, %v3163
  %3165 = vdwg.mxu0
  %3166 = vmatpush.bf16.msra.mxu0 %v2191
  %3167 = vmatpush.bf16.msra.mxu0 %v2187
  %3168 = vmatpush.bf16.msra.mxu0 %v2183
  %3169 = vmatpush.bf16.msra.mxu0 %v2179
  %3170 = vmatpush.bf16.msra.mxu0 %v2175
  %3171 = vmatpush.bf16.msra.mxu0 %v2171
  %3172 = vmatpush.bf16.msra.mxu0 %v2167
  %3173 = vmatpush.bf16.msra.mxu0 %v2163
  %3174 = vmatmul.bf16.gmra.mxu0 %v767
  %v3175 = vpop.f32.mrf.mxu0
  %v3176 = vadd.f32 %v3162, %v3175
  %v3177 = vpop.f32.mrf.mxu0
  %v3178 = vadd.f32 %v3164, %v3177
  %3179 = vdwg.mxu0
  %3180 = vmatpush.bf16.msra.mxu0 %v2223
  %3181 = vmatpush.bf16.msra.mxu0 %v2219
  %3182 = vmatpush.bf16.msra.mxu0 %v2215
  %3183 = vmatpush.bf16.msra.mxu0 %v2211
  %3184 = vmatpush.bf16.msra.mxu0 %v2207
  %3185 = vmatpush.bf16.msra.mxu0 %v2203
  %3186 = vmatpush.bf16.msra.mxu0 %v2199
  %3187 = vmatpush.bf16.msra.mxu0 %v2195
  %3188 = vmatmul.bf16.gmra.mxu0 %v768
  %v3189 = vpop.f32.mrf.mxu0
  %v3190 = vadd.f32 %v3176, %v3189
  %v3191 = vpop.f32.mrf.mxu0
  %v3192 = vadd.f32 %v3178, %v3191
  %3193 = vdwg.mxu0
  %3194 = vmatpush.bf16.msra.mxu0 %v2255
  %3195 = vmatpush.bf16.msra.mxu0 %v2251
  %3196 = vmatpush.bf16.msra.mxu0 %v2247
  %3197 = vmatpush.bf16.msra.mxu0 %v2243
  %3198 = vmatpush.bf16.msra.mxu0 %v2239
  %3199 = vmatpush.bf16.msra.mxu0 %v2235
  %3200 = vmatpush.bf16.msra.mxu0 %v2231
  %3201 = vmatpush.bf16.msra.mxu0 %v2227
  %3202 = vmatmul.bf16.gmra.mxu0 %v769
  %v3203 = vpop.f32.mrf.mxu0
  %v3204 = vadd.f32 %v3190, %v3203
  %v3205 = vpop.f32.mrf.mxu0
  %v3206 = vadd.f32 %v3192, %v3205
  %3207 = vdwg.mxu0
  %3208 = vmatpush.bf16.msra.mxu0 %v2287
  %3209 = vmatpush.bf16.msra.mxu0 %v2283
  %3210 = vmatpush.bf16.msra.mxu0 %v2279
  %3211 = vmatpush.bf16.msra.mxu0 %v2275
  %3212 = vmatpush.bf16.msra.mxu0 %v2271
  %3213 = vmatpush.bf16.msra.mxu0 %v2267
  %3214 = vmatpush.bf16.msra.mxu0 %v2263
  %3215 = vmatpush.bf16.msra.mxu0 %v2259
  %3216 = vmatmul.bf16.gmra.mxu0 %v770
  %v3217 = vpop.f32.mrf.mxu0
  %v3218 = vadd.f32 %v3204, %v3217
  %v3219 = vpop.f32.mrf.mxu0
  %v3220 = vadd.f32 %v3206, %v3219
  %3221 = vdwg.mxu0
  %3222 = vmatpush.bf16.msra.mxu0 %v2319
  %3223 = vmatpush.bf16.msra.mxu0 %v2315
  %3224 = vmatpush.bf16.msra.mxu0 %v2311
  %3225 = vmatpush.bf16.msra.mxu0 %v2307
  %3226 = vmatpush.bf16.msra.mxu0 %v2303
  %3227 = vmatpush.bf16.msra.mxu0 %v2299
  %3228 = vmatpush.bf16.msra.mxu0 %v2295
  %3229 = vmatpush.bf16.msra.mxu0 %v2291
  %3230 = vmatmul.bf16.gmra.mxu0 %v771
  %v3231 = vpop.f32.mrf.mxu0
  %v3232 = vadd.f32 %v3218, %v3231
  %v3233 = vpop.f32.mrf.mxu0
  %v3234 = vadd.f32 %v3220, %v3233
  %3235 = vdwg.mxu0
  %3236 = vmatpush.bf16.msra.mxu0 %v2351
  %3237 = vmatpush.bf16.msra.mxu0 %v2347
  %3238 = vmatpush.bf16.msra.mxu0 %v2343
  %3239 = vmatpush.bf16.msra.mxu0 %v2339
  %3240 = vmatpush.bf16.msra.mxu0 %v2335
  %3241 = vmatpush.bf16.msra.mxu0 %v2331
  %3242 = vmatpush.bf16.msra.mxu0 %v2327
  %3243 = vmatpush.bf16.msra.mxu0 %v2323
  %3244 = vmatmul.bf16.gmra.mxu0 %v772
  %v3245 = vpop.f32.mrf.mxu0
  %v3246 = vadd.f32 %v3232, %v3245
  %v3247 = vpop.f32.mrf.mxu0
  %v3248 = vadd.f32 %v3234, %v3247
  %3249 = vdwg.mxu0
  %3250 = vmatpush.bf16.msra.mxu0 %v2383
  %3251 = vmatpush.bf16.msra.mxu0 %v2379
  %3252 = vmatpush.bf16.msra.mxu0 %v2375
  %3253 = vmatpush.bf16.msra.mxu0 %v2371
  %3254 = vmatpush.bf16.msra.mxu0 %v2367
  %3255 = vmatpush.bf16.msra.mxu0 %v2363
  %3256 = vmatpush.bf16.msra.mxu0 %v2359
  %3257 = vmatpush.bf16.msra.mxu0 %v2355
  %3258 = vmatmul.bf16.gmra.mxu0 %v773
  %v3259 = vpop.f32.mrf.mxu0
  %v3260 = vadd.f32 %v3246, %v3259
  %v3261 = vpop.f32.mrf.mxu0
  %v3262 = vadd.f32 %v3248, %v3261
  %3263 = vdwg.mxu0
  %v3264 = vmax.f32 %v2840, 0.0
  %v3265 = vmax.f32 %v2980, 0.0
  %v3266 = vmax.f32 %v3120, 0.0
  %v3267 = vmax.f32 %v3260, 0.0
  %v3268 = vmax.f32 %v2842, 0.0
  %v3269 = vmax.f32 %v2982, 0.0
  %v3270 = vmax.f32 %v3122, 0.0
  %v3271 = vmax.f32 %v3262, 0.0
  %v3272 = vpack.c.bf16 %v3268, %v3264
  %v3273 = vpack.c.bf16 %v3269, %v3265
  %v3274 = vpack.c.bf16 %v3270, %v3266
  %v3275 = vpack.c.bf16 %v3271, %v3267
  %v3276 = vld [vmem:[%s5] sm:$0xff]
  %v3277 = vld [vmem:[%s5 + $0x8] sm:$0xff]
  %v3278 = vld [vmem:[%s5 + $0x10] sm:$0xff]
  %v3279 = vld [vmem:[%s5 + $0x18] sm:$0xff]
  %v3280 = vld [vmem:[%s5 + $0x20] sm:$0xff]
  %v3281 = vld [vmem:[%s5 + $0x28] sm:$0xff]
  %v3282 = vld [vmem:[%s5 + $0x30] sm:$0xff]
  %v3283 = vld [vmem:[%s5 + $0x38] sm:$0xff]
  %v3284 = vld [vmem:[%s5 + $0x40] sm:$0xff]
  %v3285 = vld [vmem:[%s5 + $0x48] sm:$0xff]
  %v3286 = vld [vmem:[%s5 + $0x50] sm:$0xff]
  %v3287 = vld [vmem:[%s5 + $0x58] sm:$0xff]
  %v3288 = vld [vmem:[%s5 + $0x60] sm:$0xff]
  %v3289 = vld [vmem:[%s5 + $0x68] sm:$0xff]
  %v3290 = vld [vmem:[%s5 + $0x70] sm:$0xff]
  %v3291 = vld [vmem:[%s5 + $0x78] sm:$0xff]
  %v3292 = vld [vmem:[%s5 + $0x80] sm:$0xff]
  %v3293 = vld [vmem:[%s5 + $0x88] sm:$0xff]
  %v3294 = vld [vmem:[%s5 + $0x90] sm:$0xff]
  %v3295 = vld [vmem:[%s5 + $0x98] sm:$0xff]
  %v3296 = vld [vmem:[%s5 + $0xa0] sm:$0xff]
  %v3297 = vld [vmem:[%s5 + $0xa8] sm:$0xff]
  %v3298 = vld [vmem:[%s5 + $0xb0] sm:$0xff]
  %v3299 = vld [vmem:[%s5 + $0xb8] sm:$0xff]
  %v3300 = vld [vmem:[%s5 + $0xc0] sm:$0xff]
  %v3301 = vld [vmem:[%s5 + $0xc8] sm:$0xff]
  %v3302 = vld [vmem:[%s5 + $0xd0] sm:$0xff]
  %v3303 = vld [vmem:[%s5 + $0xd8] sm:$0xff]
  %v3304 = vld [vmem:[%s5 + $0xe0] sm:$0xff]
  %v3305 = vld [vmem:[%s5 + $0xe8] sm:$0xff]
  %v3306 = vld [vmem:[%s5 + $0xf0] sm:$0xff]
  %v3307 = vld [vmem:[%s5 + $0xf8] sm:$0xff]
  %v3308 = vld [vmem:[%s5 + $0x100] sm:$0xff]
  %v3309 = vld [vmem:[%s5 + $0x108] sm:$0xff]
  %v3310 = vld [vmem:[%s5 + $0x110] sm:$0xff]
  %v3311 = vld [vmem:[%s5 + $0x118] sm:$0xff]
  %v3312 = vld [vmem:[%s5 + $0x120] sm:$0xff]
  %v3313 = vld [vmem:[%s5 + $0x128] sm:$0xff]
  %v3314 = vld [vmem:[%s5 + $0x130] sm:$0xff]
  %v3315 = vld [vmem:[%s5 + $0x138] sm:$0xff]
  %v3316 = vld [vmem:[%s5 + $0x140] sm:$0xff]
  %v3317 = vld [vmem:[%s5 + $0x148] sm:$0xff]
  %v3318 = vld [vmem:[%s5 + $0x150] sm:$0xff]
  %v3319 = vld [vmem:[%s5 + $0x158] sm:$0xff]
  %v3320 = vld [vmem:[%s5 + $0x160] sm:$0xff]
  %v3321 = vld [vmem:[%s5 + $0x168] sm:$0xff]
  %v3322 = vld [vmem:[%s5 + $0x170] sm:$0xff]
  %v3323 = vld [vmem:[%s5 + $0x178] sm:$0xff]
  %v3324 = vld [vmem:[%s5 + $0x180] sm:$0xff]
  %v3325 = vld [vmem:[%s5 + $0x188] sm:$0xff]
  %v3326 = vld [vmem:[%s5 + $0x190] sm:$0xff]
  %v3327 = vld [vmem:[%s5 + $0x198] sm:$0xff]
  %v3328 = vld [vmem:[%s5 + $0x1a0] sm:$0xff]
  %v3329 = vld [vmem:[%s5 + $0x1a8] sm:$0xff]
  %v3330 = vld [vmem:[%s5 + $0x1b0] sm:$0xff]
  %v3331 = vld [vmem:[%s5 + $0x1b8] sm:$0xff]
  %v3332 = vld [vmem:[%s5 + $0x1c0] sm:$0xff]
  %v3333 = vld [vmem:[%s5 + $0x1c8] sm:$0xff]
  %v3334 = vld [vmem:[%s5 + $0x1d0] sm:$0xff]
  %v3335 = vld [vmem:[%s5 + $0x1d8] sm:$0xff]
  %v3336 = vld [vmem:[%s5 + $0x1e0] sm:$0xff]
  %v3337 = vld [vmem:[%s5 + $0x1e8] sm:$0xff]
  %v3338 = vld [vmem:[%s5 + $0x1f0] sm:$0xff]
  %v3339 = vld [vmem:[%s5 + $0x1f8] sm:$0xff]
  %v3340 = vld [vmem:[%s6] sm:$0x3]
  %v3342 = vperm.slane %v3340, 0
  %v3343 = vperm.slane %v3340, 1
  %v3410 = vunpack.c.l.b16 %v3276
  %v3411 = vunpack.c.h.b16 %v3276
  %v3412 = vunpack.c.l.b16 %v3277
  %v3413 = vunpack.c.h.b16 %v3277
  %v3414 = vunpack.c.l.b16 %v3278
  %v3415 = vunpack.c.h.b16 %v3278
  %v3416 = vunpack.c.l.b16 %v3279
  %v3417 = vunpack.c.h.b16 %v3279
  %v3418 = vunpack.c.l.b16 %v3280
  %v3419 = vunpack.c.h.b16 %v3280
  %v3420 = vunpack.c.l.b16 %v3281
  %v3421 = vunpack.c.h.b16 %v3281
  %v3422 = vunpack.c.l.b16 %v3282
  %v3423 = vunpack.c.h.b16 %v3282
  %v3424 = vunpack.c.l.b16 %v3283
  %v3425 = vunpack.c.h.b16 %v3283
  %v3426 = vunpack.c.l.b16 %v3284
  %v3427 = vunpack.c.h.b16 %v3284
  %v3428 = vunpack.c.l.b16 %v3285
  %v3429 = vunpack.c.h.b16 %v3285
  %v3430 = vunpack.c.l.b16 %v3286
  %v3431 = vunpack.c.h.b16 %v3286
  %v3432 = vunpack.c.l.b16 %v3287
  %v3433 = vunpack.c.h.b16 %v3287
  %v3434 = vunpack.c.l.b16 %v3288
  %v3435 = vunpack.c.h.b16 %v3288
  %v3436 = vunpack.c.l.b16 %v3289
  %v3437 = vunpack.c.h.b16 %v3289
  %v3438 = vunpack.c.l.b16 %v3290
  %v3439 = vunpack.c.h.b16 %v3290
  %v3440 = vunpack.c.l.b16 %v3291
  %v3441 = vunpack.c.h.b16 %v3291
  %v3442 = vunpack.c.l.b16 %v3292
  %v3443 = vunpack.c.h.b16 %v3292
  %v3444 = vunpack.c.l.b16 %v3293
  %v3445 = vunpack.c.h.b16 %v3293
  %v3446 = vunpack.c.l.b16 %v3294
  %v3447 = vunpack.c.h.b16 %v3294
  %v3448 = vunpack.c.l.b16 %v3295
  %v3449 = vunpack.c.h.b16 %v3295
  %v3450 = vunpack.c.l.b16 %v3296
  %v3451 = vunpack.c.h.b16 %v3296
  %v3452 = vunpack.c.l.b16 %v3297
  %v3453 = vunpack.c.h.b16 %v3297
  %v3454 = vunpack.c.l.b16 %v3298
  %v3455 = vunpack.c.h.b16 %v3298
  %v3456 = vunpack.c.l.b16 %v3299
  %v3457 = vunpack.c.h.b16 %v3299
  %v3458 = vunpack.c.l.b16 %v3300
  %v3459 = vunpack.c.h.b16 %v3300
  %v3460 = vunpack.c.l.b16 %v3301
  %v3461 = vunpack.c.h.b16 %v3301
  %v3462 = vunpack.c.l.b16 %v3302
  %v3463 = vunpack.c.h.b16 %v3302
  %v3464 = vunpack.c.l.b16 %v3303
  %v3465 = vunpack.c.h.b16 %v3303
  %v3466 = vunpack.c.l.b16 %v3304
  %v3467 = vunpack.c.h.b16 %v3304
  %v3468 = vunpack.c.l.b16 %v3305
  %v3469 = vunpack.c.h.b16 %v3305
  %v3470 = vunpack.c.l.b16 %v3306
  %v3471 = vunpack.c.h.b16 %v3306
  %v3472 = vunpack.c.l.b16 %v3307
  %v3473 = vunpack.c.h.b16 %v3307
  %v3474 = vunpack.c.l.b16 %v3308
  %v3475 = vunpack.c.h.b16 %v3308
  %v3476 = vunpack.c.l.b16 %v3309
  %v3477 = vunpack.c.h.b16 %v3309
  %v3478 = vunpack.c.l.b16 %v3310
  %v3479 = vunpack.c.h.b16 %v3310
  %v3480 = vunpack.c.l.b16 %v3311
  %v3481 = vunpack.c.h.b16 %v3311
  %v3482 = vunpack.c.l.b16 %v3312
  %v3483 = vunpack.c.h.b16 %v3312
  %v3484 = vunpack.c.l.b16 %v3313
  %v3485 = vunpack.c.h.b16 %v3313
  %v3486 = vunpack.c.l.b16 %v3314
  %v3487 = vunpack.c.h.b16 %v3314
  %v3488 = vunpack.c.l.b16 %v3315
  %v3489 = vunpack.c.h.b16 %v3315
  %v3490 = vunpack.c.l.b16 %v3316
  %v3491 = vunpack.c.h.b16 %v3316
  %v3492 = vunpack.c.l.b16 %v3317
  %v3493 = vunpack.c.h.b16 %v3317
  %v3494 = vunpack.c.l.b16 %v3318
  %v3495 = vunpack.c.h.b16 %v3318
  %v3496 = vunpack.c.l.b16 %v3319
  %v3497 = vunpack.c.h.b16 %v3319
  %v3498 = vunpack.c.l.b16 %v3320
  %v3499 = vunpack.c.h.b16 %v3320
  %v3500 = vunpack.c.l.b16 %v3321
  %v3501 = vunpack.c.h.b16 %v3321
  %v3502 = vunpack.c.l.b16 %v3322
  %v3503 = vunpack.c.h.b16 %v3322
  %v3504 = vunpack.c.l.b16 %v3323
  %v3505 = vunpack.c.h.b16 %v3323
  %v3506 = vunpack.c.l.b16 %v3324
  %v3507 = vunpack.c.h.b16 %v3324
  %v3508 = vunpack.c.l.b16 %v3325
  %v3509 = vunpack.c.h.b16 %v3325
  %v3510 = vunpack.c.l.b16 %v3326
  %v3511 = vunpack.c.h.b16 %v3326
  %v3512 = vunpack.c.l.b16 %v3327
  %v3513 = vunpack.c.h.b16 %v3327
  %v3514 = vunpack.c.l.b16 %v3328
  %v3515 = vunpack.c.h.b16 %v3328
  %v3516 = vunpack.c.l.b16 %v3329
  %v3517 = vunpack.c.h.b16 %v3329
  %v3518 = vunpack.c.l.b16 %v3330
  %v3519 = vunpack.c.h.b16 %v3330
  %v3520 = vunpack.c.l.b16 %v3331
  %v3521 = vunpack.c.h.b16 %v3331
  %v3522 = vunpack.c.l.b16 %v3332
  %v3523 = vunpack.c.h.b16 %v3332
  %v3524 = vunpack.c.l.b16 %v3333
  %v3525 = vunpack.c.h.b16 %v3333
  %v3526 = vunpack.c.l.b16 %v3334
  %v3527 = vunpack.c.h.b16 %v3334
  %v3528 = vunpack.c.l.b16 %v3335
  %v3529 = vunpack.c.h.b16 %v3335
  %v3530 = vunpack.c.l.b16 %v3336
  %v3531 = vunpack.c.h.b16 %v3336
  %v3532 = vunpack.c.l.b16 %v3337
  %v3533 = vunpack.c.h.b16 %v3337
  %v3534 = vunpack.c.l.b16 %v3338
  %v3535 = vunpack.c.h.b16 %v3338
  %v3536 = vunpack.c.l.b16 %v3339
  %v3537 = vunpack.c.h.b16 %v3339
  %v3538 = vpack.c.b16 %v3412, %v3410
  %v3539 = vpack.c.b16 %v3413, %v3411
  %v3540 = vpack.c.b16 %v3416, %v3414
  %v3541 = vpack.c.b16 %v3417, %v3415
  %v3542 = vpack.c.b16 %v3420, %v3418
  %v3543 = vpack.c.b16 %v3421, %v3419
  %v3544 = vpack.c.b16 %v3424, %v3422
  %v3545 = vpack.c.b16 %v3425, %v3423
  %v3546 = vpack.c.b16 %v3428, %v3426
  %v3547 = vpack.c.b16 %v3429, %v3427
  %v3548 = vpack.c.b16 %v3432, %v3430
  %v3549 = vpack.c.b16 %v3433, %v3431
  %v3550 = vpack.c.b16 %v3436, %v3434
  %v3551 = vpack.c.b16 %v3437, %v3435
  %v3552 = vpack.c.b16 %v3440, %v3438
  %v3553 = vpack.c.b16 %v3441, %v3439
  %v3554 = vpack.c.b16 %v3444, %v3442
  %v3555 = vpack.c.b16 %v3445, %v3443
  %v3556 = vpack.c.b16 %v3448, %v3446
  %v3557 = vpack.c.b16 %v3449, %v3447
  %v3558 = vpack.c.b16 %v3452, %v3450
  %v3559 = vpack.c.b16 %v3453, %v3451
  %v3560 = vpack.c.b16 %v3456, %v3454
  %v3561 = vpack.c.b16 %v3457, %v3455
  %v3562 = vpack.c.b16 %v3460, %v3458
  %v3563 = vpack.c.b16 %v3461, %v3459
  %v3564 = vpack.c.b16 %v3464, %v3462
  %v3565 = vpack.c.b16 %v3465, %v3463
  %v3566 = vpack.c.b16 %v3468, %v3466
  %v3567 = vpack.c.b16 %v3469, %v3467
  %v3568 = vpack.c.b16 %v3472, %v3470
  %v3569 = vpack.c.b16 %v3473, %v3471
  %v3570 = vpack.c.b16 %v3476, %v3474
  %v3571 = vpack.c.b16 %v3477, %v3475
  %v3572 = vpack.c.b16 %v3480, %v3478
  %v3573 = vpack.c.b16 %v3481, %v3479
  %v3574 = vpack.c.b16 %v3484, %v3482
  %v3575 = vpack.c.b16 %v3485, %v3483
  %v3576 = vpack.c.b16 %v3488, %v3486
  %v3577 = vpack.c.b16 %v3489, %v3487
  %v3578 = vpack.c.b16 %v3492, %v3490
  %v3579 = vpack.c.b16 %v3493, %v3491
  %v3580 = vpack.c.b16 %v3496, %v3494
  %v3581 = vpack.c.b16 %v3497, %v3495
  %v3582 = vpack.c.b16 %v3500, %v3498
  %v3583 = vpack.c.b16 %v3501, %v3499
  %v3584 = vpack.c.b16 %v3504, %v3502
  %v3585 = vpack.c.b16 %v3505, %v3503
  %v3586 = vpack.c.b16 %v3508, %v3506
  %v3587 = vpack.c.b16 %v3509, %v3507
  %v3588 = vpack.c.b16 %v3512, %v3510
  %v3589 = vpack.c.b16 %v3513, %v3511
  %v3590 = vpack.c.b16 %v3516, %v3514
  %v3591 = vpack.c.b16 %v3517, %v3515
  %v3592 = vpack.c.b16 %v3520, %v3518
  %v3593 = vpack.c.b16 %v3521, %v3519
  %v3594 = vpack.c.b16 %v3524, %v3522
  %v3595 = vpack.c.b16 %v3525, %v3523
  %v3596 = vpack.c.b16 %v3528, %v3526
  %v3597 = vpack.c.b16 %v3529, %v3527
  %v3598 = vpack.c.b16 %v3532, %v3530
  %v3599 = vpack.c.b16 %v3533, %v3531
  %v3600 = vpack.c.b16 %v3536, %v3534
  %v3601 = vpack.c.b16 %v3537, %v3535
  %3666 = vmatpush.bf16.msra.mxu0 %v3552
  %3667 = vmatpush.bf16.msra.mxu0 %v3550
  %3668 = vmatpush.bf16.msra.mxu0 %v3548
  %3669 = vmatpush.bf16.msra.mxu0 %v3546
  %3670 = vmatpush.bf16.msra.mxu0 %v3544
  %3671 = vmatpush.bf16.msra.mxu0 %v3542
  %3672 = vmatpush.bf16.msra.mxu0 %v3540
  %3673 = vmatpush.bf16.msra.mxu0 %v3538
  %3674 = vmatmul.bf16.gmra.mxu0 %v3272
  %v3675 = vpop.f32.mrf.mxu0
  %v3676 = vadd.f32 %v3342, %v3675
  %v3677 = vpop.f32.mrf.mxu0
  %v3678 = vadd.f32 %v3342, %v3677
  %3679 = vdwg.mxu0
  %3680 = vmatpush.bf16.msra.mxu0 %v3568
  %3681 = vmatpush.bf16.msra.mxu0 %v3566
  %3682 = vmatpush.bf16.msra.mxu0 %v3564
  %3683 = vmatpush.bf16.msra.mxu0 %v3562
  %3684 = vmatpush.bf16.msra.mxu0 %v3560
  %3685 = vmatpush.bf16.msra.mxu0 %v3558
  %3686 = vmatpush.bf16.msra.mxu0 %v3556
  %3687 = vmatpush.bf16.msra.mxu0 %v3554
  %3688 = vmatmul.bf16.gmra.mxu0 %v3273
  %v3689 = vpop.f32.mrf.mxu0
  %v3690 = vadd.f32 %v3676, %v3689
  %v3691 = vpop.f32.mrf.mxu0
  %v3692 = vadd.f32 %v3678, %v3691
  %3693 = vdwg.mxu0
  %3694 = vmatpush.bf16.msra.mxu0 %v3584
  %3695 = vmatpush.bf16.msra.mxu0 %v3582
  %3696 = vmatpush.bf16.msra.mxu0 %v3580
  %3697 = vmatpush.bf16.msra.mxu0 %v3578
  %3698 = vmatpush.bf16.msra.mxu0 %v3576
  %3699 = vmatpush.bf16.msra.mxu0 %v3574
  %3700 = vmatpush.bf16.msra.mxu0 %v3572
  %3701 = vmatpush.bf16.msra.mxu0 %v3570
  %3702 = vmatmul.bf16.gmra.mxu0 %v3274
  %v3703 = vpop.f32.mrf.mxu0
  %v3704 = vadd.f32 %v3690, %v3703
  %v3705 = vpop.f32.mrf.mxu0
  %v3706 = vadd.f32 %v3692, %v3705
  %3707 = vdwg.mxu0
  %3708 = vmatpush.bf16.msra.mxu0 %v3600
  %3709 = vmatpush.bf16.msra.mxu0 %v3598
  %3710 = vmatpush.bf16.msra.mxu0 %v3596
  %3711 = vmatpush.bf16.msra.mxu0 %v3594
  %3712 = vmatpush.bf16.msra.mxu0 %v3592
  %3713 = vmatpush.bf16.msra.mxu0 %v3590
  %3714 = vmatpush.bf16.msra.mxu0 %v3588
  %3715 = vmatpush.bf16.msra.mxu0 %v3586
  %3716 = vmatmul.bf16.gmra.mxu0 %v3275
  %v3717 = vpop.f32.mrf.mxu0
  %v3718 = vadd.f32 %v3704, %v3717
  %v3719 = vpop.f32.mrf.mxu0
  %v3720 = vadd.f32 %v3706, %v3719
  %3721 = vdwg.mxu0
  %3722 = vmatpush.bf16.msra.mxu0 %v3553
  %3723 = vmatpush.bf16.msra.mxu0 %v3551
  %3724 = vmatpush.bf16.msra.mxu0 %v3549
  %3725 = vmatpush.bf16.msra.mxu0 %v3547
  %3726 = vmatpush.bf16.msra.mxu0 %v3545
  %3727 = vmatpush.bf16.msra.mxu0 %v3543
  %3728 = vmatpush.bf16.msra.mxu0 %v3541
  %3729 = vmatpush.bf16.msra.mxu0 %v3539
  %3730 = vmatmul.bf16.gmra.mxu0 %v3272
  %v3731 = vpop.f32.mrf.mxu0
  %v3732 = vadd.f32 %v3343, %v3731
  %v3733 = vpop.f32.mrf.mxu0
  %v3734 = vadd.f32 %v3343, %v3733
  %3735 = vdwg.mxu0
  %3736 = vmatpush.bf16.msra.mxu0 %v3569
  %3737 = vmatpush.bf16.msra.mxu0 %v3567
  %3738 = vmatpush.bf16.msra.mxu0 %v3565
  %3739 = vmatpush.bf16.msra.mxu0 %v3563
  %3740 = vmatpush.bf16.msra.mxu0 %v3561
  %3741 = vmatpush.bf16.msra.mxu0 %v3559
  %3742 = vmatpush.bf16.msra.mxu0 %v3557
  %3743 = vmatpush.bf16.msra.mxu0 %v3555
  %3744 = vmatmul.bf16.gmra.mxu0 %v3273
  %v3745 = vpop.f32.mrf.mxu0
  %v3746 = vadd.f32 %v3732, %v3745
  %v3747 = vpop.f32.mrf.mxu0
  %v3748 = vadd.f32 %v3734, %v3747
  %3749 = vdwg.mxu0
  %3750 = vmatpush.bf16.msra.mxu0 %v3585
  %3751 = vmatpush.bf16.msra.mxu0 %v3583
  %3752 = vmatpush.bf16.msra.mxu0 %v3581
  %3753 = vmatpush.bf16.msra.mxu0 %v3579
  %3754 = vmatpush.bf16.msra.mxu0 %v3577
  %3755 = vmatpush.bf16.msra.mxu0 %v3575
  %3756 = vmatpush.bf16.msra.mxu0 %v3573
  %3757 = vmatpush.bf16.msra.mxu0 %v3571
  %3758 = vmatmul.bf16.gmra.mxu0 %v3274
  %v3759 = vpop.f32.mrf.mxu0
  %v3760 = vadd.f32 %v3746, %v3759
  %v3761 = vpop.f32.mrf.mxu0
  %v3762 = vadd.f32 %v3748, %v3761
  %3763 = vdwg.mxu0
  %3764 = vmatpush.bf16.msra.mxu0 %v3601
  %3765 = vmatpush.bf16.msra.mxu0 %v3599
  %3766 = vmatpush.bf16.msra.mxu0 %v3597
  %3767 = vmatpush.bf16.msra.mxu0 %v3595
  %3768 = vmatpush.bf16.msra.mxu0 %v3593
  %3769 = vmatpush.bf16.msra.mxu0 %v3591
  %3770 = vmatpush.bf16.msra.mxu0 %v3589
  %3771 = vmatpush.bf16.msra.mxu0 %v3587
  %3772 = vmatmul.bf16.gmra.mxu0 %v3275
  %v3773 = vpop.f32.mrf.mxu0
  %v3774 = vadd.f32 %v3760, %v3773
  %v3775 = vpop.f32.mrf.mxu0
  %v3776 = vadd.f32 %v3762, %v3775
  %3777 = vdwg.mxu0
  %v3778 = vmax.f32 %v3718, 0.0
  %v3779 = vmax.f32 %v3774, 0.0
  %v3780 = vmax.f32 %v3720, 0.0
  %v3781 = vmax.f32 %v3776, 0.0
  %v3782 = vpack.c.bf16 %v3780, %v3778
  %v3783 = vpack.c.bf16 %v3781, %v3779
  %v3784 = vld [vmem:[%s7] sm:$0xf]
  %v3785 = vld [vmem:[%s7 + $0x4] sm:$0xf]
  %v3786 = vld [vmem:[%s7 + $0x8] sm:$0xf]
  %v3787 = vld [vmem:[%s7 + $0xc] sm:$0xf]
  %v3788 = vld [vmem:[%s7 + $0x10] sm:$0xf]
  %v3789 = vld [vmem:[%s7 + $0x14] sm:$0xf]
  %v3790 = vld [vmem:[%s7 + $0x18] sm:$0xf]
  %v3791 = vld [vmem:[%s7 + $0x1c] sm:$0xf]
  %v3792 = vld [vmem:[%s7 + $0x20] sm:$0xf]
  %v3793 = vld [vmem:[%s7 + $0x24] sm:$0xf]
  %v3794 = vld [vmem:[%s7 + $0x28] sm:$0xf]
  %v3795 = vld [vmem:[%s7 + $0x2c] sm:$0xf]
  %v3796 = vld [vmem:[%s7 + $0x30] sm:$0xf]
  %v3797 = vld [vmem:[%s7 + $0x34] sm:$0xf]
  %v3798 = vld [vmem:[%s7 + $0x38] sm:$0xf]
  %v3799 = vld [vmem:[%s7 + $0x3c] sm:$0xf]
  %v3800 = vld [vmem:[%s7 + $0x40] sm:$0xf]
  %v3801 = vld [vmem:[%s7 + $0x44] sm:$0xf]
  %v3802 = vld [vmem:[%s7 + $0x48] sm:$0xf]
  %v3803 = vld [vmem:[%s7 + $0x4c] sm:$0xf]
  %v3804 = vld [vmem:[%s7 + $0x50] sm:$0xf]
  %v3805 = vld [vmem:[%s7 + $0x54] sm:$0xf]
  %v3806 = vld [vmem:[%s7 + $0x58] sm:$0xf]
  %v3807 = vld [vmem:[%s7 + $0x5c] sm:$0xf]
  %v3808 = vld [vmem:[%s7 + $0x60] sm:$0xf]
  %v3809 = vld [vmem:[%s7 + $0x64] sm:$0xf]
  %v3810 = vld [vmem:[%s7 + $0x68] sm:$0xf]
  %v3811 = vld [vmem:[%s7 + $0x6c] sm:$0xf]
  %v3812 = vld [vmem:[%s7 + $0x70] sm:$0xf]
  %v3813 = vld [vmem:[%s7 + $0x74] sm:$0xf]
  %v3814 = vld [vmem:[%s7 + $0x78] sm:$0xf]
  %v3815 = vld [vmem:[%s7 + $0x7c] sm:$0xf]
  %v3816 = vld [vmem:[%s8] sm:$0x1]
  %v3818 = vperm.slane %v3816, 0
  %v3852 = vunpack.c.l.b16 %v3784
  %v3853 = vunpack.c.l.b16 %v3785
  %v3854 = vunpack.c.l.b16 %v3786
  %v3855 = vunpack.c.l.b16 %v3787
  %v3856 = vunpack.c.l.b16 %v3788
  %v3857 = vunpack.c.l.b16 %v3789
  %v3858 = vunpack.c.l.b16 %v3790
  %v3859 = vunpack.c.l.b16 %v3791
  %v3860 = vunpack.c.l.b16 %v3792
  %v3861 = vunpack.c.l.b16 %v3793
  %v3862 = vunpack.c.l.b16 %v3794
  %v3863 = vunpack.c.l.b16 %v3795
  %v3864 = vunpack.c.l.b16 %v3796
  %v3865 = vunpack.c.l.b16 %v3797
  %v3866 = vunpack.c.l.b16 %v3798
  %v3867 = vunpack.c.l.b16 %v3799
  %v3868 = vunpack.c.l.b16 %v3800
  %v3869 = vunpack.c.l.b16 %v3801
  %v3870 = vunpack.c.l.b16 %v3802
  %v3871 = vunpack.c.l.b16 %v3803
  %v3872 = vunpack.c.l.b16 %v3804
  %v3873 = vunpack.c.l.b16 %v3805
  %v3874 = vunpack.c.l.b16 %v3806
  %v3875 = vunpack.c.l.b16 %v3807
  %v3876 = vunpack.c.l.b16 %v3808
  %v3877 = vunpack.c.l.b16 %v3809
  %v3878 = vunpack.c.l.b16 %v3810
  %v3879 = vunpack.c.l.b16 %v3811
  %v3880 = vunpack.c.l.b16 %v3812
  %v3881 = vunpack.c.l.b16 %v3813
  %v3882 = vunpack.c.l.b16 %v3814
  %v3883 = vunpack.c.l.b16 %v3815
  %v3884 = vpack.c.b16 %v3853, %v3852
  %v3885 = vpack.c.b16 %v3855, %v3854
  %v3886 = vpack.c.b16 %v3857, %v3856
  %v3887 = vpack.c.b16 %v3859, %v3858
  %v3888 = vpack.c.b16 %v3861, %v3860
  %v3889 = vpack.c.b16 %v3863, %v3862
  %v3890 = vpack.c.b16 %v3865, %v3864
  %v3891 = vpack.c.b16 %v3867, %v3866
  %v3892 = vpack.c.b16 %v3869, %v3868
  %v3893 = vpack.c.b16 %v3871, %v3870
  %v3894 = vpack.c.b16 %v3873, %v3872
  %v3895 = vpack.c.b16 %v3875, %v3874
  %v3896 = vpack.c.b16 %v3877, %v3876
  %v3897 = vpack.c.b16 %v3879, %v3878
  %v3898 = vpack.c.b16 %v3881, %v3880
  %v3899 = vpack.c.b16 %v3883, %v3882
  %3916 = vmatpush.bf16.msra.mxu0 %v3891
  %3917 = vmatpush.bf16.msra.mxu0 %v3890
  %3918 = vmatpush.bf16.msra.mxu0 %v3889
  %3919 = vmatpush.bf16.msra.mxu0 %v3888
  %3920 = vmatpush.bf16.msra.mxu0 %v3887
  %3921 = vmatpush.bf16.msra.mxu0 %v3886
  %3922 = vmatpush.bf16.msra.mxu0 %v3885
  %3923 = vmatpush.bf16.msra.mxu0 %v3884
  %3924 = vmatmul.bf16.gmra.mxu0 %v3782
  %v3925 = vpop.f32.mrf.mxu0
  %v3926 = vadd.f32 %v3818, %v3925
  %v3927 = vpop.f32.mrf.mxu0
  %v3928 = vadd.f32 %v3818, %v3927
  %3929 = vdwg.mxu0
  %3930 = vmatpush.bf16.msra.mxu0 %v3899
  %3931 = vmatpush.bf16.msra.mxu0 %v3898
  %3932 = vmatpush.bf16.msra.mxu0 %v3897
  %3933 = vmatpush.bf16.msra.mxu0 %v3896
  %3934 = vmatpush.bf16.msra.mxu0 %v3895
  %3935 = vmatpush.bf16.msra.mxu0 %v3894
  %3936 = vmatpush.bf16.msra.mxu0 %v3893
  %3937 = vmatpush.bf16.msra.mxu0 %v3892
  %3938 = vmatmul.bf16.gmra.mxu0 %v3783
  %v3939 = vpop.f32.mrf.mxu0
  %v3940 = vadd.f32 %v3926, %v3939
  %v3941 = vpop.f32.mrf.mxu0
  %v3942 = vadd.f32 %v3928, %v3941
  %3943 = vdwg.mxu0
  %v3944 = vmul.f32 %v3940, %v3940
  %v3945 = vmul.f32 %v3942, %v3942
  %3946 = vadd.xlane.f32.xlu0 %v3944
  %v3947 = vpop.xlane.xlu0 %3946
  %3948 = vadd.xlane.f32.xlu0 %v3945
  %v3949 = vpop.xlane.xlu0 %3948
  %v3950 = vmax.f32 %v3947, 1e-24
  %v3951 = vmax.f32 %v3949, 1e-24
  %v3952 = vrsqrt.pop %v3950
  %v3953 = vmul.f32 %v3952, %v3950
  %v3954 = vmul.f32 %v3953, %v3952
  %v3955 = vmul.f32 0.5, %v3954
  %v3956 = vsub.f32 1.5, %v3955
  %v3957 = vmul.f32 %v3952, %v3956
  %vm3958 = vweird.f32 %v3950
  %vm3959 = vweird.f32 %v3952
  %vm3960 = vmor %vm3958, %vm3959
  %v3961 = vsel %vm3960, %v3952, %v3957
  %v3962 = vrsqrt.pop %v3951
  %v3963 = vmul.f32 %v3962, %v3951
  %v3964 = vmul.f32 %v3963, %v3962
  %v3965 = vmul.f32 0.5, %v3964
  %v3966 = vsub.f32 1.5, %v3965
  %v3967 = vmul.f32 %v3962, %v3966
  %vm3968 = vweird.f32 %v3951
  %vm3969 = vweird.f32 %v3962
  %vm3970 = vmor %vm3968, %vm3969
  %v3971 = vsel %vm3970, %v3962, %v3967
  %v3972 = vmul.f32 %v3940, %v3961
  %v3973 = vmul.f32 %v3942, %v3971
  %3974 = vst [vmem:[%s9] sm:$0xff] %v3972
  %3975 = vst [vmem:[%s9 + $0x8] sm:$0xff] %v3973
  // Predicated region
  $region38: #{network_forward.3} parent=0 // pred_check
    _
  $region39: #{network_forward.3} parent=0 // pred_check_branch
    %3977 = sbr.rel (0) target = $region41
  $region40: #{network_forward.3} parent=0 // pred_region
    _
  $region41: #{network_forward.3} parent=0 // pred_fallthru
    _
  // Predicated region
  $region42: #{network_forward.3} parent=0 // pred_check
    _
  $region43: #{network_forward.3} parent=0 // pred_check_branch
    %3979 = sbr.rel (0) target = $region45
  $region44: #{network_forward.3} parent=0 // pred_region
    _
  $region45: #{network_forward.3} parent=0 // pred_fallthru
    _

</llo_original>
